<compile_context>
chip_gen: v7x
topology: tpu7x:2x2x1
jax: 0.10.0
libtpu: 0.0.40
codegen_flags: <defaults>
</compile_context>

<pallas_src>
import functools

import jax
import jax.numpy as jnp
from jax.experimental import pallas as pl
from jax.experimental.pallas import tpu as pltpu

IN_DIM = 28 * 28   # 784
HID = 512
LATENT = 32


def _vae_kernel(x_ref, noise_ref,
                w1a_ref, b1a_ref, w1b_ref, b1b_ref,
                wmv_ref, bmv_ref,
                w3a_ref, b3a_ref, w3b_ref, b3b_ref,
                w4_ref, b4_ref,
                out_ref, mv_ref):
    f32 = jnp.float32
    bf16 = jnp.bfloat16

    # x arrives f32; cast to bf16 in-kernel (VPU op hidden under MXU work), saving the
    # wrapper-side HBM cast pass.
    x = x_ref[...].astype(bf16)                              # (TB, 784)

    # ---------------- encoder: h = relu(fc1(x)) ----------------
    # fc1 = Linear(784,512) -> ReLU -> Linear(512,512); outer ReLU from encoder()
    h = jnp.dot(x, w1a_ref[...], preferred_element_type=f32) + b1a_ref[...]
    h = jnp.maximum(h, 0.0)
    h = jnp.dot(h.astype(bf16), w1b_ref[...], preferred_element_type=f32) + b1b_ref[...]
    h = jnp.maximum(h, 0.0)                                  # (TB, 512) f32

    # Fused mu / log_var projection: (TB, 512) @ (512, 64).  Kept in f32 (tiny matmul)
    # for tighter mu/log_var accuracy; stored as one lane-denser 64-wide output.
    mv = jnp.dot(h, wmv_ref[...], preferred_element_type=f32) + bmv_ref[...]
    mu = mv[:, :LATENT]
    log_var = mv[:, LATENT:]

    # -------- reparameterization (f32): z = exp(log_var / 2) * e + mu --------
    z = jnp.exp(log_var * 0.5) * noise_ref[...] + mu

    # ---------------- decoder: h = relu(fc3(z)) ----------------
    # fc3 = Linear(32,512) -> ReLU -> Linear(512,512); outer ReLU from decoder()
    h2 = jnp.dot(z.astype(bf16), w3a_ref[...], preferred_element_type=f32) + b3a_ref[...]
    h2 = jnp.maximum(h2, 0.0)
    h2 = jnp.dot(h2.astype(bf16), w3b_ref[...], preferred_element_type=f32) + b3b_ref[...]
    h2 = jnp.maximum(h2, 0.0)

    logits = jnp.dot(h2.astype(bf16), w4_ref[...], preferred_element_type=f32) + b4_ref[...]
    # sigmoid(x) = 1 / (1 + exp(-x)); exp + approx reciprocal both ride the EUP slot.
    recon = pl.reciprocal(1.0 + jnp.exp(-logits), approx=True)

    out_ref[...] = recon.astype(out_ref.dtype)
    mv_ref[...] = mv


def _choose_tb(batch):
    """Batch tile: >=2 grid steps when possible (feeds both v7x TensorCores), capped at
    256 (512 for very large batches) to fill the 256-wide MXU and amortize per-step
    pipeline overhead; always a multiple of 8 sublanes."""
    cap = 512 if batch >= 2048 else 256
    half = -(-batch // 2)           # ceil(B / 2)
    tb = -(-half // 8) * 8          # round up to sublane multiple
    return max(8, min(cap, tb))


@functools.partial(jax.jit, static_argnames=("out_dtype",))
def vae_forward(x, noise, params, *, out_dtype=jnp.bfloat16):
    """x: (B, 784) f32, noise: (B, 32) f32 standard normal, params: dict (bf16 W, f32 b).

    Returns (reconstruction[out_dtype], mu[f32], log_var[f32])."""
    B = x.shape[0]
    TB = _choose_tb(B)
    pB = -(-B // TB) * TB

    xb = x.astype(jnp.float32)      # fed as f32; bf16 cast happens inside the kernel
    nb = noise.astype(jnp.float32)
    if pB != B:
        xb = jnp.pad(xb, ((0, pB - B), (0, 0)))
        nb = jnp.pad(nb, ((0, pB - B), (0, 0)))

    def batch_spec(n):
        return pl.BlockSpec((TB, n), lambda i: (i, 0))

    def weight_spec(arr):
        # Constant block index: weights are fetched once and stay VMEM-resident
        # across all batch-grid steps (footprint ~5 MB incl. default buffering —
        # far under the VMEM limit, so no need to shrink buffering).
        return pl.BlockSpec(arr.shape, lambda i: (0, 0))

    args = (
        xb, nb,
        params["w1a"], params["b1a"], params["w1b"], params["b1b"],
        params["wmv"], params["bmv"],
        params["w3a"], params["b3a"], params["w3b"], params["b3b"],
        params["w4"], params["b4"],
    )
    in_specs = [batch_spec(IN_DIM), batch_spec(LATENT)]
    in_specs += [weight_spec(a) for a in args[2:]]

    out_shapes = (
        jax.ShapeDtypeStruct((pB, IN_DIM), out_dtype),        # reconstruction (bf16 default)
        jax.ShapeDtypeStruct((pB, 2 * LATENT), jnp.float32),  # fused [mu | log_var]
    )
    out_specs = (batch_spec(IN_DIM), batch_spec(2 * LATENT))

    out, mv = pl.pallas_call(
        _vae_kernel,
        grid=(pB // TB,),
        in_specs=in_specs,
        out_specs=out_specs,
        out_shape=out_shapes,
        compiler_params=pltpu.CompilerParams(
            dimension_semantics=("parallel",),   # shards batch steps across v7x's 2 TCs
            vmem_limit_bytes=32 << 20,           # footprint ~13 MB at TB=512; fits v7x 64 MiB
        ),
    )(*args)

    out = out[:B]
    mu = mv[:B, :LATENT]
    log_var = mv[:B, LATENT:]
    return out, mu, log_var


def init_params(key):
    """Deterministic synthetic parameters.

    Big-matmul weights stored as (in, out) in bfloat16 (MXU-native, half HBM traffic);
    biases (1, out) in f32.  fc2_m / fc2_v are stored fused as wmv (512, 64) / bmv (1, 64)
    in f32 (tiny, keeps mu/log_var precision tight)."""
    def lin(k, fan_in, fan_out):
        kw, kb = jax.random.split(k)
        bound = 1.0 / jnp.sqrt(fan_in)
        w = jax.random.uniform(kw, (fan_in, fan_out), jnp.float32, -bound, bound)
        b = jax.random.uniform(kb, (1, fan_out), jnp.float32, -bound, bound)
        return w, b

    ks = jax.random.split(key, 7)
    w1a, b1a = lin(ks[0], IN_DIM, HID)     # fc1[0]
    w1b, b1b = lin(ks[1], HID, HID)        # fc1[2]
    wm, bm = lin(ks[2], HID, LATENT)       # fc2_m
    wv, bv = lin(ks[3], HID, LATENT)       # fc2_v
    w3a, b3a = lin(ks[4], LATENT, HID)     # fc3[0]
    w3b, b3b = lin(ks[5], HID, HID)        # fc3[2]
    w4, b4 = lin(ks[6], HID, IN_DIM)       # fc4

    bf16 = jnp.bfloat16
    return {
        "w1a": w1a.astype(bf16), "b1a": b1a,
        "w1b": w1b.astype(bf16), "b1b": b1b,
        "wmv": jnp.concatenate([wm, wv], axis=1),     # f32
        "bmv": jnp.concatenate([bm, bv], axis=1),     # f32
        "w3a": w3a.astype(bf16), "b3a": b3a,
        "w3b": w3b.astype(bf16), "b3b": b3b,
        "w4": w4.astype(bf16), "b4": b4,
    }


def vae_reference(x, noise, p):
    """Pure-JAX f32 reference (bf16-stored weights upcast) for sanity checking."""
    f32 = jnp.float32
    w1a, w1b = p["w1a"].astype(f32), p["w1b"].astype(f32)
    wmv = p["wmv"].astype(f32)
    w3a, w3b = p["w3a"].astype(f32), p["w3b"].astype(f32)
    w4 = p["w4"].astype(f32)

    h = jnp.maximum(x @ w1a + p["b1a"], 0.0)
    h = jnp.maximum(h @ w1b + p["b1b"], 0.0)
    mv = h @ wmv + p["bmv"]
    mu, log_var = mv[:, :LATENT], mv[:, LATENT:]
    z = jnp.exp(log_var * 0.5) * noise + mu
    h2 = jnp.maximum(z @ w3a + p["b3a"], 0.0)
    h2 = jnp.maximum(h2 @ w3b + p["b3b"], 0.0)
    out = jax.nn.sigmoid(h2 @ w4 + p["b4"])
    return out, mu, log_var


if __name__ == "__main__":
    key = jax.random.PRNGKey(0)
    k_param, k_x, k_noise = jax.random.split(key, 3)

    B = 8  # small batch (multiple of 8 sublanes)
    params = init_params(k_param)
    x = jax.random.uniform(k_x, (B, IN_DIM), jnp.float32)          # MNIST-like pixel input
    noise = jax.random.normal(k_noise, (B, LATENT), jnp.float32)   # e ~ N(0, 1)

    out, mu, log_var = vae_forward(x, noise, params)
    jax.block_until_ready((out, mu, log_var))

    ref_out, ref_mu, ref_lv = vae_reference(x, noise, params)
    # bf16 weights/activations/output in the kernel -> relaxed tolerances vs. f32 reference.
    assert jnp.allclose(out.astype(jnp.float32), ref_out, atol=2e-2, rtol=2e-2)
    assert jnp.allclose(mu, ref_mu, atol=2e-2, rtol=2e-2)
    assert jnp.allclose(log_var, ref_lv, atol=2e-2, rtol=2e-2)
    assert out.shape == (B, IN_DIM) and mu.shape == (B, LATENT) and log_var.shape == (B, LATENT)

    print("KERNEL_OK")
</pallas_src>

<mosaic_0001>
module attributes {stable_mosaic.version = 11 : i64} {
  func.func @_vae_kernel(%arg0: i32, %arg1: memref<8x784xf32, #tpu.memory_space<vmem>>, %arg2: memref<8x32xf32, #tpu.memory_space<vmem>>, %arg3: memref<784x512xbf16, #tpu.memory_space<vmem>>, %arg4: memref<1x512xf32, #tpu.memory_space<vmem>>, %arg5: memref<512x512xbf16, #tpu.memory_space<vmem>>, %arg6: memref<1x512xf32, #tpu.memory_space<vmem>>, %arg7: memref<512x64xf32, #tpu.memory_space<vmem>>, %arg8: memref<1x64xf32, #tpu.memory_space<vmem>>, %arg9: memref<32x512xbf16, #tpu.memory_space<vmem>>, %arg10: memref<1x512xf32, #tpu.memory_space<vmem>>, %arg11: memref<512x512xbf16, #tpu.memory_space<vmem>>, %arg12: memref<1x512xf32, #tpu.memory_space<vmem>>, %arg13: memref<512x784xbf16, #tpu.memory_space<vmem>>, %arg14: memref<1x784xf32, #tpu.memory_space<vmem>>, %arg15: memref<8x784xbf16, #tpu.memory_space<vmem>>, %arg16: memref<8x64xf32, #tpu.memory_space<vmem>>) attributes {dimension_semantics = [#tpu.dimension_semantics<parallel>], iteration_bounds = array<i64: 1>, scalar_prefetch = 0 : i64, scratch_operands = 0 : i64, tpu.core_type = #tpu.core_type<tc>, window_params = [{transform_indices = @transform_0, window_bounds = array<i64: 8, 784>}, {transform_indices = @transform_1, window_bounds = array<i64: 8, 32>}, {pipeline_mode = #tpu.pipeline_mode<synchronous>, transform_indices = @transform_2, window_bounds = array<i64: 784, 512>}, {pipeline_mode = #tpu.pipeline_mode<synchronous>, transform_indices = @transform_3, window_bounds = array<i64: 1, 512>}, {pipeline_mode = #tpu.pipeline_mode<synchronous>, transform_indices = @transform_4, window_bounds = array<i64: 512, 512>}, {pipeline_mode = #tpu.pipeline_mode<synchronous>, transform_indices = @transform_5, window_bounds = array<i64: 1, 512>}, {pipeline_mode = #tpu.pipeline_mode<synchronous>, transform_indices = @transform_6, window_bounds = array<i64: 512, 64>}, {pipeline_mode = #tpu.pipeline_mode<synchronous>, transform_indices = @transform_7, window_bounds = array<i64: 1, 64>}, {pipeline_mode = #tpu.pipeline_mode<synchronous>, transform_indices = @transform_8, window_bounds = array<i64: 32, 512>}, {pipeline_mode = #tpu.pipeline_mode<synchronous>, transform_indices = @transform_9, window_bounds = array<i64: 1, 512>}, {pipeline_mode = #tpu.pipeline_mode<synchronous>, transform_indices = @transform_10, window_bounds = array<i64: 512, 512>}, {pipeline_mode = #tpu.pipeline_mode<synchronous>, transform_indices = @transform_11, window_bounds = array<i64: 1, 512>}, {pipeline_mode = #tpu.pipeline_mode<synchronous>, transform_indices = @transform_12, window_bounds = array<i64: 512, 784>}, {pipeline_mode = #tpu.pipeline_mode<synchronous>, transform_indices = @transform_13, window_bounds = array<i64: 1, 784>}, {transform_indices = @transform_14, window_bounds = array<i64: 8, 784>}, {transform_indices = @transform_15, window_bounds = array<i64: 8, 64>}]} {
    %c0 = arith.constant 0 : index
    %c0_0 = arith.constant 0 : index
    %0 = vector.load %arg1[%c0, %c0_0] : memref<8x784xf32, #tpu.memory_space<vmem>>, vector<8x784xf32>
    %1 = arith.truncf %0 : vector<8x784xf32> to vector<8x784xbf16>
    %c0_1 = arith.constant 0 : index
    %c0_2 = arith.constant 0 : index
    %2 = vector.load %arg3[%c0_1, %c0_2] : memref<784x512xbf16, #tpu.memory_space<vmem>>, vector<784x512xbf16>
    %cst = arith.constant dense<0.000000e+00> : vector<8x512xf32>
    %3 = tpu.matmul %1, %2, %cst {dimension_numbers = #tpu.dot_dimension_numbers<[1], [0], [0], [1], [0, 0, 1, 1], [], []>} : vector<8x784xbf16>, vector<784x512xbf16>, vector<8x512xf32> -> vector<8x512xf32>
    %c0_3 = arith.constant 0 : index
    %c0_4 = arith.constant 0 : index
    %4 = vector.load %arg4[%c0_3, %c0_4] : memref<1x512xf32, #tpu.memory_space<vmem>>, vector<1x512xf32>
    %5 = vector.broadcast %4 : vector<1x512xf32> to vector<8x512xf32>
    %6 = arith.addf %3, %5 : vector<8x512xf32>
    %cst_5 = arith.constant 0.000000e+00 : f32
    %7 = vector.broadcast %cst_5 : f32 to vector<8x512xf32>
    %8 = arith.maximumf %6, %7 : vector<8x512xf32>
    %9 = arith.truncf %8 : vector<8x512xf32> to vector<8x512xbf16>
    %c0_6 = arith.constant 0 : index
    %c0_7 = arith.constant 0 : index
    %10 = vector.load %arg5[%c0_6, %c0_7] : memref<512x512xbf16, #tpu.memory_space<vmem>>, vector<512x512xbf16>
    %cst_8 = arith.constant dense<0.000000e+00> : vector<8x512xf32>
    %11 = tpu.matmul %9, %10, %cst_8 {dimension_numbers = #tpu.dot_dimension_numbers<[1], [0], [0], [1], [0, 0, 1, 1], [], []>} : vector<8x512xbf16>, vector<512x512xbf16>, vector<8x512xf32> -> vector<8x512xf32>
    %c0_9 = arith.constant 0 : index
    %c0_10 = arith.constant 0 : index
    %12 = vector.load %arg6[%c0_9, %c0_10] : memref<1x512xf32, #tpu.memory_space<vmem>>, vector<1x512xf32>
    %13 = vector.broadcast %12 : vector<1x512xf32> to vector<8x512xf32>
    %14 = arith.addf %11, %13 : vector<8x512xf32>
    %cst_11 = arith.constant 0.000000e+00 : f32
    %15 = vector.broadcast %cst_11 : f32 to vector<8x512xf32>
    %16 = arith.maximumf %14, %15 : vector<8x512xf32>
    %c0_12 = arith.constant 0 : index
    %c0_13 = arith.constant 0 : index
    %17 = vector.load %arg7[%c0_12, %c0_13] : memref<512x64xf32, #tpu.memory_space<vmem>>, vector<512x64xf32>
    %cst_14 = arith.constant dense<0.000000e+00> : vector<8x64xf32>
    %18 = tpu.matmul %16, %17, %cst_14 {dimension_numbers = #tpu.dot_dimension_numbers<[1], [0], [0], [1], [0, 0, 1, 1], [], []>} : vector<8x512xf32>, vector<512x64xf32>, vector<8x64xf32> -> vector<8x64xf32>
    %c0_15 = arith.constant 0 : index
    %c0_16 = arith.constant 0 : index
    %19 = vector.load %arg8[%c0_15, %c0_16] : memref<1x64xf32, #tpu.memory_space<vmem>>, vector<1x64xf32>
    %20 = vector.broadcast %19 : vector<1x64xf32> to vector<8x64xf32>
    %21 = arith.addf %18, %20 : vector<8x64xf32>
    %22 = vector.extract_strided_slice %21 {offsets = [0, 0], sizes = [8, 32], strides = [1, 1]} : vector<8x64xf32> to vector<8x32xf32>
    %23 = vector.extract_strided_slice %21 {offsets = [0, 32], sizes = [8, 32], strides = [1, 1]} : vector<8x64xf32> to vector<8x32xf32>
    %cst_17 = arith.constant 5.000000e-01 : f32
    %24 = vector.broadcast %cst_17 : f32 to vector<8x32xf32>
    %25 = arith.mulf %23, %24 : vector<8x32xf32>
    %26 = math.exp %25 : vector<8x32xf32>
    %c0_18 = arith.constant 0 : index
    %c0_19 = arith.constant 0 : index
    %27 = vector.load %arg2[%c0_18, %c0_19] : memref<8x32xf32, #tpu.memory_space<vmem>>, vector<8x32xf32>
    %28 = arith.mulf %26, %27 : vector<8x32xf32>
    %29 = arith.addf %28, %22 : vector<8x32xf32>
    %30 = arith.truncf %29 : vector<8x32xf32> to vector<8x32xbf16>
    %c0_20 = arith.constant 0 : index
    %c0_21 = arith.constant 0 : index
    %31 = vector.load %arg9[%c0_20, %c0_21] : memref<32x512xbf16, #tpu.memory_space<vmem>>, vector<32x512xbf16>
    %cst_22 = arith.constant dense<0.000000e+00> : vector<8x512xf32>
    %32 = tpu.matmul %30, %31, %cst_22 {dimension_numbers = #tpu.dot_dimension_numbers<[1], [0], [0], [1], [0, 0, 1, 1], [], []>} : vector<8x32xbf16>, vector<32x512xbf16>, vector<8x512xf32> -> vector<8x512xf32>
    %c0_23 = arith.constant 0 : index
    %c0_24 = arith.constant 0 : index
    %33 = vector.load %arg10[%c0_23, %c0_24] : memref<1x512xf32, #tpu.memory_space<vmem>>, vector<1x512xf32>
    %34 = vector.broadcast %33 : vector<1x512xf32> to vector<8x512xf32>
    %35 = arith.addf %32, %34 : vector<8x512xf32>
    %cst_25 = arith.constant 0.000000e+00 : f32
    %36 = vector.broadcast %cst_25 : f32 to vector<8x512xf32>
    %37 = arith.maximumf %35, %36 : vector<8x512xf32>
    %38 = arith.truncf %37 : vector<8x512xf32> to vector<8x512xbf16>
    %c0_26 = arith.constant 0 : index
    %c0_27 = arith.constant 0 : index
    %39 = vector.load %arg11[%c0_26, %c0_27] : memref<512x512xbf16, #tpu.memory_space<vmem>>, vector<512x512xbf16>
    %cst_28 = arith.constant dense<0.000000e+00> : vector<8x512xf32>
    %40 = tpu.matmul %38, %39, %cst_28 {dimension_numbers = #tpu.dot_dimension_numbers<[1], [0], [0], [1], [0, 0, 1, 1], [], []>} : vector<8x512xbf16>, vector<512x512xbf16>, vector<8x512xf32> -> vector<8x512xf32>
    %c0_29 = arith.constant 0 : index
    %c0_30 = arith.constant 0 : index
    %41 = vector.load %arg12[%c0_29, %c0_30] : memref<1x512xf32, #tpu.memory_space<vmem>>, vector<1x512xf32>
    %42 = vector.broadcast %41 : vector<1x512xf32> to vector<8x512xf32>
    %43 = arith.addf %40, %42 : vector<8x512xf32>
    %cst_31 = arith.constant 0.000000e+00 : f32
    %44 = vector.broadcast %cst_31 : f32 to vector<8x512xf32>
    %45 = arith.maximumf %43, %44 : vector<8x512xf32>
    %46 = arith.truncf %45 : vector<8x512xf32> to vector<8x512xbf16>
    %c0_32 = arith.constant 0 : index
    %c0_33 = arith.constant 0 : index
    %47 = vector.load %arg13[%c0_32, %c0_33] : memref<512x784xbf16, #tpu.memory_space<vmem>>, vector<512x784xbf16>
    %cst_34 = arith.constant dense<0.000000e+00> : vector<8x784xf32>
    %48 = tpu.matmul %46, %47, %cst_34 {dimension_numbers = #tpu.dot_dimension_numbers<[1], [0], [0], [1], [0, 0, 1, 1], [], []>} : vector<8x512xbf16>, vector<512x784xbf16>, vector<8x784xf32> -> vector<8x784xf32>
    %c0_35 = arith.constant 0 : index
    %c0_36 = arith.constant 0 : index
    %49 = vector.load %arg14[%c0_35, %c0_36] : memref<1x784xf32, #tpu.memory_space<vmem>>, vector<1x784xf32>
    %50 = vector.broadcast %49 : vector<1x784xf32> to vector<8x784xf32>
    %51 = arith.addf %48, %50 : vector<8x784xf32>
    %cst_37 = arith.constant 0.000000e+00 : f32
    %52 = vector.broadcast %cst_37 : f32 to vector<8x784xf32>
    %53 = arith.subf %52, %51 : vector<8x784xf32>
    %54 = math.exp %53 : vector<8x784xf32>
    %cst_38 = arith.constant 1.000000e+00 : f32
    %55 = vector.broadcast %cst_38 : f32 to vector<8x784xf32>
    %56 = arith.addf %55, %54 : vector<8x784xf32>
    %57 = tpu.reciprocal %56 {approx = true} : vector<8x784xf32> -> vector<8x784xf32>
    %58 = arith.truncf %57 : vector<8x784xf32> to vector<8x784xbf16>
    %c0_39 = arith.constant 0 : index
    %c0_40 = arith.constant 0 : index
    %59 = vector.load %arg15[%c0_39, %c0_40] : memref<8x784xbf16, #tpu.memory_space<vmem>>, vector<8x784xbf16>
    tpu.vector_store %arg15[%c0_39, %c0_40], %58 {strides = array<i32>} : memref<8x784xbf16, #tpu.memory_space<vmem>>, vector<8x784xbf16>,
    %c0_41 = arith.constant 0 : index
    %c0_42 = arith.constant 0 : index
    %60 = vector.load %arg16[%c0_41, %c0_42] : memref<8x64xf32, #tpu.memory_space<vmem>>, vector<8x64xf32>
    tpu.vector_store %arg16[%c0_41, %c0_42], %21 {strides = array<i32>} : memref<8x64xf32, #tpu.memory_space<vmem>>, vector<8x64xf32>,
    return
  }
  func.func @transform_0(%arg0: i32) -> (i32, i32) {
    %c0_i32 = arith.constant 0 : i32
    %c0_i32_0 = arith.constant 0 : i32
    return %arg0, %c0_i32 : i32, i32
  }
  func.func @transform_1(%arg0: i32) -> (i32, i32) {
    %c0_i32 = arith.constant 0 : i32
    %c0_i32_0 = arith.constant 0 : i32
    return %arg0, %c0_i32 : i32, i32
  }
  func.func @transform_2(%arg0: i32) -> (i32, i32) {
    %c0_i32 = arith.constant 0 : i32
    %c0_i32_0 = arith.constant 0 : i32
    %c0_i32_1 = arith.constant 0 : i32
    return %c0_i32, %c0_i32_0 : i32, i32
  }
  func.func @transform_3(%arg0: i32) -> (i32, i32) {
    %c0_i32 = arith.constant 0 : i32
    %c0_i32_0 = arith.constant 0 : i32
    %c0_i32_1 = arith.constant 0 : i32
    return %c0_i32, %c0_i32_0 : i32, i32
  }
  func.func @transform_4(%arg0: i32) -> (i32, i32) {
    %c0_i32 = arith.constant 0 : i32
    %c0_i32_0 = arith.constant 0 : i32
    %c0_i32_1 = arith.constant 0 : i32
    return %c0_i32, %c0_i32_0 : i32, i32
  }
  func.func @transform_5(%arg0: i32) -> (i32, i32) {
    %c0_i32 = arith.constant 0 : i32
    %c0_i32_0 = arith.constant 0 : i32
    %c0_i32_1 = arith.constant 0 : i32
    return %c0_i32, %c0_i32_0 : i32, i32
  }
  func.func @transform_6(%arg0: i32) -> (i32, i32) {
    %c0_i32 = arith.constant 0 : i32
    %c0_i32_0 = arith.constant 0 : i32
    %c0_i32_1 = arith.constant 0 : i32
    return %c0_i32, %c0_i32_0 : i32, i32
  }
  func.func @transform_7(%arg0: i32) -> (i32, i32) {
    %c0_i32 = arith.constant 0 : i32
    %c0_i32_0 = arith.constant 0 : i32
    %c0_i32_1 = arith.constant 0 : i32
    return %c0_i32, %c0_i32_0 : i32, i32
  }
  func.func @transform_8(%arg0: i32) -> (i32, i32) {
    %c0_i32 = arith.constant 0 : i32
    %c0_i32_0 = arith.constant 0 : i32
    %c0_i32_1 = arith.constant 0 : i32
    return %c0_i32, %c0_i32_0 : i32, i32
  }
  func.func @transform_9(%arg0: i32) -> (i32, i32) {
    %c0_i32 = arith.constant 0 : i32
    %c0_i32_0 = arith.constant 0 : i32
    %c0_i32_1 = arith.constant 0 : i32
    return %c0_i32, %c0_i32_0 : i32, i32
  }
  func.func @transform_10(%arg0: i32) -> (i32, i32) {
    %c0_i32 = arith.constant 0 : i32
    %c0_i32_0 = arith.constant 0 : i32
    %c0_i32_1 = arith.constant 0 : i32
    return %c0_i32, %c0_i32_0 : i32, i32
  }
  func.func @transform_11(%arg0: i32) -> (i32, i32) {
    %c0_i32 = arith.constant 0 : i32
    %c0_i32_0 = arith.constant 0 : i32
    %c0_i32_1 = arith.constant 0 : i32
    return %c0_i32, %c0_i32_0 : i32, i32
  }
  func.func @transform_12(%arg0: i32) -> (i32, i32) {
    %c0_i32 = arith.constant 0 : i32
    %c0_i32_0 = arith.constant 0 : i32
    %c0_i32_1 = arith.constant 0 : i32
    return %c0_i32, %c0_i32_0 : i32, i32
  }
  func.func @transform_13(%arg0: i32) -> (i32, i32) {
    %c0_i32 = arith.constant 0 : i32
    %c0_i32_0 = arith.constant 0 : i32
    %c0_i32_1 = arith.constant 0 : i32
    return %c0_i32, %c0_i32_0 : i32, i32
  }
  func.func @transform_14(%arg0: i32) -> (i32, i32) {
    %c0_i32 = arith.constant 0 : i32
    %c0_i32_0 = arith.constant 0 : i32
    return %arg0, %c0_i32 : i32, i32
  }
  func.func @transform_15(%arg0: i32) -> (i32, i32) {
    %c0_i32 = arith.constant 0 : i32
    %c0_i32_0 = arith.constant 0 : i32
    return %arg0, %c0_i32 : i32, i32
  }
}

</mosaic_0001>

<llo_original>
// kernel: vae_forward.1
$region0: #{vae_forward.1}
  #allocation0 [shape = 'u32[]', space=smem, size = 0x4, offset = 0x4, fixed_abs, tag = 'smem constant byte address 0x4 - core index']
  #allocation1 [shape = 'u32[144,128]{1,0:T(1,128)}', space=vmem, size = 0x12000, scoped, tag = 'internal scratch']
  %s0 = inlined_call_operand.vmem [shape: f32[8,784], index: 0, kind: input, shape index: {}]
  %s1 = inlined_call_operand.vmem [shape: f32[8,32], index: 1, kind: input, shape index: {}]
  %s2 = inlined_call_operand.vmem [shape: bf16[784,512], index: 2, kind: input, shape index: {}]
  %s3 = inlined_call_operand.vmem [shape: f32[1,512], index: 3, kind: input, shape index: {}]
  %s4 = inlined_call_operand.vmem [shape: bf16[512,512], index: 4, kind: input, shape index: {}]
  %s5 = inlined_call_operand.vmem [shape: f32[1,512], index: 5, kind: input, shape index: {}]
  %s6 = inlined_call_operand.vmem [shape: f32[512,64], index: 6, kind: input, shape index: {}]
  %s7 = inlined_call_operand.vmem [shape: f32[1,64], index: 7, kind: input, shape index: {}]
  %s8 = inlined_call_operand.vmem [shape: bf16[32,512], index: 8, kind: input, shape index: {}]
  %s9 = inlined_call_operand.vmem [shape: f32[1,512], index: 9, kind: input, shape index: {}]
  %s10 = inlined_call_operand.vmem [shape: bf16[512,512], index: 10, kind: input, shape index: {}]
  %s11 = inlined_call_operand.vmem [shape: f32[1,512], index: 11, kind: input, shape index: {}]
  %s12 = inlined_call_operand.vmem [shape: bf16[512,784], index: 12, kind: input, shape index: {}]
  %s13 = inlined_call_operand.vmem [shape: f32[1,784], index: 13, kind: input, shape index: {}]
  %s14 = inlined_call_operand.hbm [shape: bf16[8,784], index: 14, kind: output, shape index: {0}]
  %s15 = inlined_call_operand.vmem [shape: f32[8,64], index: 15, kind: output, shape index: {1}]
  %16 = xla_tuple %s14, %s15
  %s17 = sld [smem:[#allocation0]]
  $region74: #{vae_forward.1} parent=0
    _
  %s19 = ssub.s32 1, %s17
  %s20 = scalar_select 0, %s19, %s17
  $region1: #{vae_forward.1} parent=0
    #allocation2 [shape = 'u8[14336]{0}', space=vmem, size = 0x3800, scoped, tag = 'output window, operand 0, single buffered']
    #allocation3 [shape = 's32[1]{0}', space=sflag, size = 0x4, scoped, tag = 'scoped memory for vae_forward.1']
    %21 = vsyncpa [#allocation3], 0
    // Predicated region
    $region2: #{vae_forward.1} parent=1 // pred_check
      _
    $region3: #{vae_forward.1} parent=1 // pred_check_branch
      %23 = sbr.rel (0) target = $region5
    $region4: #{vae_forward.1} parent=1 // pred_region
      _
    $region5: #{vae_forward.1} parent=1 // pred_fallthru
      _
    // Predicated region
    $region6: #{vae_forward.1} parent=1 // pred_check
      _
    $region7: #{vae_forward.1} parent=1 // pred_check_branch
      %25 = sbr.rel (0) target = $region9
    $region8: #{vae_forward.1} parent=1 // pred_region
      _
    $region9: #{vae_forward.1} parent=1 // pred_fallthru
      _
    // Predicated region
    $region10: #{vae_forward.1} parent=1 // pred_check
      _
    $region11: #{vae_forward.1} parent=1 // pred_check_branch
      %27 = sbr.rel (0) target = $region13
    $region12: #{vae_forward.1} parent=1 // pred_region
      _
    $region13: #{vae_forward.1} parent=1 // pred_fallthru
      _
    // Predicated region
    $region14: #{vae_forward.1} parent=1 // pred_check
      _
    $region15: #{vae_forward.1} parent=1 // pred_check_branch
      %29 = sbr.rel (0) target = $region17
    $region16: #{vae_forward.1} parent=1 // pred_region
      _
    $region17: #{vae_forward.1} parent=1 // pred_fallthru
      _
    // Predicated region
    $region18: #{vae_forward.1} parent=1 // pred_check
      _
    $region19: #{vae_forward.1} parent=1 // pred_check_branch
      %31 = sbr.rel (0) target = $region21
    $region20: #{vae_forward.1} parent=1 // pred_region
      _
    $region21: #{vae_forward.1} parent=1 // pred_fallthru
      _
    // Predicated region
    $region22: #{vae_forward.1} parent=1 // pred_check
      _
    $region23: #{vae_forward.1} parent=1 // pred_check_branch
      %33 = sbr.rel (0) target = $region25
    $region24: #{vae_forward.1} parent=1 // pred_region
      _
    $region25: #{vae_forward.1} parent=1 // pred_fallthru
      _
    // Predicated region
    $region26: #{vae_forward.1} parent=1 // pred_check
      _
    $region27: #{vae_forward.1} parent=1 // pred_check_branch
      %35 = sbr.rel (0) target = $region29
    $region28: #{vae_forward.1} parent=1 // pred_region
      _
    $region29: #{vae_forward.1} parent=1 // pred_fallthru
      _
    // Predicated region
    $region30: #{vae_forward.1} parent=1 // pred_check
      _
    $region31: #{vae_forward.1} parent=1 // pred_check_branch
      %37 = sbr.rel (0) target = $region33
    $region32: #{vae_forward.1} parent=1 // pred_region
      _
    $region33: #{vae_forward.1} parent=1 // pred_fallthru
      _
    // Predicated region
    $region34: #{vae_forward.1} parent=1 // pred_check
      _
    $region35: #{vae_forward.1} parent=1 // pred_check_branch
      %39 = sbr.rel (0) target = $region37
    $region36: #{vae_forward.1} parent=1 // pred_region
      _
    $region37: #{vae_forward.1} parent=1 // pred_fallthru
      _
    // Predicated region
    $region38: #{vae_forward.1} parent=1 // pred_check
      _
    $region39: #{vae_forward.1} parent=1 // pred_check_branch
      %41 = sbr.rel (0) target = $region41
    $region40: #{vae_forward.1} parent=1 // pred_region
      _
    $region41: #{vae_forward.1} parent=1 // pred_fallthru
      _
    // Predicated region
    $region42: #{vae_forward.1} parent=1 // pred_check
      _
    $region43: #{vae_forward.1} parent=1 // pred_check_branch
      %43 = sbr.rel (0) target = $region45
    $region44: #{vae_forward.1} parent=1 // pred_region
      _
    $region45: #{vae_forward.1} parent=1 // pred_fallthru
      _
    // Predicated region
    $region46: #{vae_forward.1} parent=1 // pred_check
      _
    $region47: #{vae_forward.1} parent=1 // pred_check_branch
      %45 = sbr.rel (0) target = $region49
    $region48: #{vae_forward.1} parent=1 // pred_region
      _
    $region49: #{vae_forward.1} parent=1 // pred_fallthru
      _
    // Predicated region
    $region50: #{vae_forward.1} parent=1 // pred_check
      _
    $region51: #{vae_forward.1} parent=1 // pred_check_branch
      %47 = sbr.rel (0) target = $region53
    $region52: #{vae_forward.1} parent=1 // pred_region
      _
    $region53: #{vae_forward.1} parent=1 // pred_fallthru
      _
    // Predicated region
    $region54: #{vae_forward.1} parent=1 // pred_check
      _
    $region55: #{vae_forward.1} parent=1 // pred_check_branch
      %49 = sbr.rel (0) target = $region57
    $region56: #{vae_forward.1} parent=1 // pred_region
      _
    $region57: #{vae_forward.1} parent=1 // pred_fallthru
      _
    %v51 = vld [vmem:[%s0] sm:$0xff]
    %v52 = vld [vmem:[%s0 + $0x8] sm:$0xff]
    %v53 = vld [vmem:[%s0 + $0x10] sm:$0xff]
    %v54 = vld [vmem:[%s0 + $0x18] sm:$0xff]
    %v55 = vld [vmem:[%s0 + $0x20] sm:$0xff]
    %v56 = vld [vmem:[%s0 + $0x28] sm:$0xff]
    %v57 = vld [vmem:[%s0 + $0x30] sm:$0xff]
    %v58 = vpack.c.bf16 %v51, %v51
    %v59 = vpack.c.bf16 %v52, %v52
    %v60 = vpack.c.bf16 %v53, %v53
    %v61 = vpack.c.bf16 %v54, %v54
    %v62 = vpack.c.bf16 %v55, %v55
    %v63 = vpack.c.bf16 %v56, %v56
    %v64 = vpack.c.bf16 %v57, %v57
    %v65 = vld [vmem:[%s2] sm:$0xff]
    %v66 = vld [vmem:[%s2 + $0x8] sm:$0xff]
    %v67 = vld [vmem:[%s2 + $0x10] sm:$0xff]
    %v68 = vld [vmem:[%s2 + $0x18] sm:$0xff]
    %v69 = vld [vmem:[%s2 + $0x20] sm:$0xff]
    %v70 = vld [vmem:[%s2 + $0x28] sm:$0xff]
    %v71 = vld [vmem:[%s2 + $0x30] sm:$0xff]
    %v72 = vld [vmem:[%s2 + $0x38] sm:$0xff]
    %v73 = vld [vmem:[%s2 + $0x40] sm:$0xff]
    %v74 = vld [vmem:[%s2 + $0x48] sm:$0xff]
    %v75 = vld [vmem:[%s2 + $0x50] sm:$0xff]
    %v76 = vld [vmem:[%s2 + $0x58] sm:$0xff]
    %v77 = vld [vmem:[%s2 + $0x60] sm:$0xff]
    %v78 = vld [vmem:[%s2 + $0x68] sm:$0xff]
    %v79 = vld [vmem:[%s2 + $0x70] sm:$0xff]
    %v80 = vld [vmem:[%s2 + $0x78] sm:$0xff]
    %v81 = vld [vmem:[%s2 + $0x80] sm:$0xff]
    %v82 = vld [vmem:[%s2 + $0x88] sm:$0xff]
    %v83 = vld [vmem:[%s2 + $0x90] sm:$0xff]
    %v84 = vld [vmem:[%s2 + $0x98] sm:$0xff]
    %v85 = vld [vmem:[%s2 + $0xa0] sm:$0xff]
    %v86 = vld [vmem:[%s2 + $0xa8] sm:$0xff]
    %v87 = vld [vmem:[%s2 + $0xb0] sm:$0xff]
    %v88 = vld [vmem:[%s2 + $0xb8] sm:$0xff]
    %v89 = vld [vmem:[%s2 + $0xc0] sm:$0xff]
    %v90 = vld [vmem:[%s2 + $0xc8] sm:$0xff]
    %v91 = vld [vmem:[%s2 + $0xd0] sm:$0xff]
    %v92 = vld [vmem:[%s2 + $0xd8] sm:$0xff]
    %v93 = vld [vmem:[%s2 + $0xe0] sm:$0xff]
    %v94 = vld [vmem:[%s2 + $0xe8] sm:$0xff]
    %v95 = vld [vmem:[%s2 + $0xf0] sm:$0xff]
    %v96 = vld [vmem:[%s2 + $0xf8] sm:$0xff]
    %v97 = vld [vmem:[%s2 + $0x100] sm:$0xff]
    %v98 = vld [vmem:[%s2 + $0x108] sm:$0xff]
    %v99 = vld [vmem:[%s2 + $0x110] sm:$0xff]
    %v100 = vld [vmem:[%s2 + $0x118] sm:$0xff]
    %v101 = vld [vmem:[%s2 + $0x120] sm:$0xff]
    %v102 = vld [vmem:[%s2 + $0x128] sm:$0xff]
    %v103 = vld [vmem:[%s2 + $0x130] sm:$0xff]
    %v104 = vld [vmem:[%s2 + $0x138] sm:$0xff]
    %v105 = vld [vmem:[%s2 + $0x140] sm:$0xff]
    %v106 = vld [vmem:[%s2 + $0x148] sm:$0xff]
    %v107 = vld [vmem:[%s2 + $0x150] sm:$0xff]
    %v108 = vld [vmem:[%s2 + $0x158] sm:$0xff]
    %v109 = vld [vmem:[%s2 + $0x160] sm:$0xff]
    %v110 = vld [vmem:[%s2 + $0x168] sm:$0xff]
    %v111 = vld [vmem:[%s2 + $0x170] sm:$0xff]
    %v112 = vld [vmem:[%s2 + $0x178] sm:$0xff]
    %v113 = vld [vmem:[%s2 + $0x180] sm:$0xff]
    %v114 = vld [vmem:[%s2 + $0x188] sm:$0xff]
    %v115 = vld [vmem:[%s2 + $0x190] sm:$0xff]
    %v116 = vld [vmem:[%s2 + $0x198] sm:$0xff]
    %v117 = vld [vmem:[%s2 + $0x1a0] sm:$0xff]
    %v118 = vld [vmem:[%s2 + $0x1a8] sm:$0xff]
    %v119 = vld [vmem:[%s2 + $0x1b0] sm:$0xff]
    %v120 = vld [vmem:[%s2 + $0x1b8] sm:$0xff]
    %v121 = vld [vmem:[%s2 + $0x1c0] sm:$0xff]
    %v122 = vld [vmem:[%s2 + $0x1c8] sm:$0xff]
    %v123 = vld [vmem:[%s2 + $0x1d0] sm:$0xff]
    %v124 = vld [vmem:[%s2 + $0x1d8] sm:$0xff]
    %v125 = vld [vmem:[%s2 + $0x1e0] sm:$0xff]
    %v126 = vld [vmem:[%s2 + $0x1e8] sm:$0xff]
    %v127 = vld [vmem:[%s2 + $0x1f0] sm:$0xff]
    %v128 = vld [vmem:[%s2 + $0x1f8] sm:$0xff]
    %v129 = vld [vmem:[%s2 + $0x200] sm:$0xff]
    %v130 = vld [vmem:[%s2 + $0x208] sm:$0xff]
    %v131 = vld [vmem:[%s2 + $0x210] sm:$0xff]
    %v132 = vld [vmem:[%s2 + $0x218] sm:$0xff]
    %v133 = vld [vmem:[%s2 + $0x220] sm:$0xff]
    %v134 = vld [vmem:[%s2 + $0x228] sm:$0xff]
    %v135 = vld [vmem:[%s2 + $0x230] sm:$0xff]
    %v136 = vld [vmem:[%s2 + $0x238] sm:$0xff]
    %v137 = vld [vmem:[%s2 + $0x240] sm:$0xff]
    %v138 = vld [vmem:[%s2 + $0x248] sm:$0xff]
    %v139 = vld [vmem:[%s2 + $0x250] sm:$0xff]
    %v140 = vld [vmem:[%s2 + $0x258] sm:$0xff]
    %v141 = vld [vmem:[%s2 + $0x260] sm:$0xff]
    %v142 = vld [vmem:[%s2 + $0x268] sm:$0xff]
    %v143 = vld [vmem:[%s2 + $0x270] sm:$0xff]
    %v144 = vld [vmem:[%s2 + $0x278] sm:$0xff]
    %v145 = vld [vmem:[%s2 + $0x280] sm:$0xff]
    %v146 = vld [vmem:[%s2 + $0x288] sm:$0xff]
    %v147 = vld [vmem:[%s2 + $0x290] sm:$0xff]
    %v148 = vld [vmem:[%s2 + $0x298] sm:$0xff]
    %v149 = vld [vmem:[%s2 + $0x2a0] sm:$0xff]
    %v150 = vld [vmem:[%s2 + $0x2a8] sm:$0xff]
    %v151 = vld [vmem:[%s2 + $0x2b0] sm:$0xff]
    %v152 = vld [vmem:[%s2 + $0x2b8] sm:$0xff]
    %v153 = vld [vmem:[%s2 + $0x2c0] sm:$0xff]
    %v154 = vld [vmem:[%s2 + $0x2c8] sm:$0xff]
    %v155 = vld [vmem:[%s2 + $0x2d0] sm:$0xff]
    %v156 = vld [vmem:[%s2 + $0x2d8] sm:$0xff]
    %v157 = vld [vmem:[%s2 + $0x2e0] sm:$0xff]
    %v158 = vld [vmem:[%s2 + $0x2e8] sm:$0xff]
    %v159 = vld [vmem:[%s2 + $0x2f0] sm:$0xff]
    %v160 = vld [vmem:[%s2 + $0x2f8] sm:$0xff]
    %v161 = vld [vmem:[%s2 + $0x300] sm:$0xff]
    %v162 = vld [vmem:[%s2 + $0x308] sm:$0xff]
    %v163 = vld [vmem:[%s2 + $0x310] sm:$0xff]
    %v164 = vld [vmem:[%s2 + $0x318] sm:$0xff]
    %v165 = vld [vmem:[%s2 + $0x320] sm:$0xff]
    %v166 = vld [vmem:[%s2 + $0x328] sm:$0xff]
    %v167 = vld [vmem:[%s2 + $0x330] sm:$0xff]
    %v168 = vld [vmem:[%s2 + $0x338] sm:$0xff]
    %v169 = vld [vmem:[%s2 + $0x340] sm:$0xff]
    %v170 = vld [vmem:[%s2 + $0x348] sm:$0xff]
    %v171 = vld [vmem:[%s2 + $0x350] sm:$0xff]
    %v172 = vld [vmem:[%s2 + $0x358] sm:$0xff]
    %v173 = vld [vmem:[%s2 + $0x360] sm:$0xff]
    %v174 = vld [vmem:[%s2 + $0x368] sm:$0xff]
    %v175 = vld [vmem:[%s2 + $0x370] sm:$0xff]
    %v176 = vld [vmem:[%s2 + $0x378] sm:$0xff]
    %v177 = vld [vmem:[%s2 + $0x380] sm:$0xff]
    %v178 = vld [vmem:[%s2 + $0x388] sm:$0xff]
    %v179 = vld [vmem:[%s2 + $0x390] sm:$0xff]
    %v180 = vld [vmem:[%s2 + $0x398] sm:$0xff]
    %v181 = vld [vmem:[%s2 + $0x3a0] sm:$0xff]
    %v182 = vld [vmem:[%s2 + $0x3a8] sm:$0xff]
    %v183 = vld [vmem:[%s2 + $0x3b0] sm:$0xff]
    %v184 = vld [vmem:[%s2 + $0x3b8] sm:$0xff]
    %v185 = vld [vmem:[%s2 + $0x3c0] sm:$0xff]
    %v186 = vld [vmem:[%s2 + $0x3c8] sm:$0xff]
    %v187 = vld [vmem:[%s2 + $0x3d0] sm:$0xff]
    %v188 = vld [vmem:[%s2 + $0x3d8] sm:$0xff]
    %v189 = vld [vmem:[%s2 + $0x3e0] sm:$0xff]
    %v190 = vld [vmem:[%s2 + $0x3e8] sm:$0xff]
    %v191 = vld [vmem:[%s2 + $0x3f0] sm:$0xff]
    %v192 = vld [vmem:[%s2 + $0x3f8] sm:$0xff]
    %v193 = vld [vmem:[%s2 + $0x400] sm:$0xff]
    %v194 = vld [vmem:[%s2 + $0x408] sm:$0xff]
    %v195 = vld [vmem:[%s2 + $0x410] sm:$0xff]
    %v196 = vld [vmem:[%s2 + $0x418] sm:$0xff]
    %v197 = vld [vmem:[%s2 + $0x420] sm:$0xff]
    %v198 = vld [vmem:[%s2 + $0x428] sm:$0xff]
    %v199 = vld [vmem:[%s2 + $0x430] sm:$0xff]
    %v200 = vld [vmem:[%s2 + $0x438] sm:$0xff]
    %v201 = vld [vmem:[%s2 + $0x440] sm:$0xff]
    %v202 = vld [vmem:[%s2 + $0x448] sm:$0xff]
    %v203 = vld [vmem:[%s2 + $0x450] sm:$0xff]
    %v204 = vld [vmem:[%s2 + $0x458] sm:$0xff]
    %v205 = vld [vmem:[%s2 + $0x460] sm:$0xff]
    %v206 = vld [vmem:[%s2 + $0x468] sm:$0xff]
    %v207 = vld [vmem:[%s2 + $0x470] sm:$0xff]
    %v208 = vld [vmem:[%s2 + $0x478] sm:$0xff]
    %v209 = vld [vmem:[%s2 + $0x480] sm:$0xff]
    %v210 = vld [vmem:[%s2 + $0x488] sm:$0xff]
    %v211 = vld [vmem:[%s2 + $0x490] sm:$0xff]
    %v212 = vld [vmem:[%s2 + $0x498] sm:$0xff]
    %v213 = vld [vmem:[%s2 + $0x4a0] sm:$0xff]
    %v214 = vld [vmem:[%s2 + $0x4a8] sm:$0xff]
    %v215 = vld [vmem:[%s2 + $0x4b0] sm:$0xff]
    %v216 = vld [vmem:[%s2 + $0x4b8] sm:$0xff]
    %v217 = vld [vmem:[%s2 + $0x4c0] sm:$0xff]
    %v218 = vld [vmem:[%s2 + $0x4c8] sm:$0xff]
    %v219 = vld [vmem:[%s2 + $0x4d0] sm:$0xff]
    %v220 = vld [vmem:[%s2 + $0x4d8] sm:$0xff]
    %v221 = vld [vmem:[%s2 + $0x4e0] sm:$0xff]
    %v222 = vld [vmem:[%s2 + $0x4e8] sm:$0xff]
    %v223 = vld [vmem:[%s2 + $0x4f0] sm:$0xff]
    %v224 = vld [vmem:[%s2 + $0x4f8] sm:$0xff]
    %v225 = vld [vmem:[%s2 + $0x500] sm:$0xff]
    %v226 = vld [vmem:[%s2 + $0x508] sm:$0xff]
    %v227 = vld [vmem:[%s2 + $0x510] sm:$0xff]
    %v228 = vld [vmem:[%s2 + $0x518] sm:$0xff]
    %v229 = vld [vmem:[%s2 + $0x520] sm:$0xff]
    %v230 = vld [vmem:[%s2 + $0x528] sm:$0xff]
    %v231 = vld [vmem:[%s2 + $0x530] sm:$0xff]
    %v232 = vld [vmem:[%s2 + $0x538] sm:$0xff]
    %v233 = vld [vmem:[%s2 + $0x540] sm:$0xff]
    %v234 = vld [vmem:[%s2 + $0x548] sm:$0xff]
    %v235 = vld [vmem:[%s2 + $0x550] sm:$0xff]
    %v236 = vld [vmem:[%s2 + $0x558] sm:$0xff]
    %v237 = vld [vmem:[%s2 + $0x560] sm:$0xff]
    %v238 = vld [vmem:[%s2 + $0x568] sm:$0xff]
    %v239 = vld [vmem:[%s2 + $0x570] sm:$0xff]
    %v240 = vld [vmem:[%s2 + $0x578] sm:$0xff]
    %v241 = vld [vmem:[%s2 + $0x580] sm:$0xff]
    %v242 = vld [vmem:[%s2 + $0x588] sm:$0xff]
    %v243 = vld [vmem:[%s2 + $0x590] sm:$0xff]
    %v244 = vld [vmem:[%s2 + $0x598] sm:$0xff]
    %v245 = vld [vmem:[%s2 + $0x5a0] sm:$0xff]
    %v246 = vld [vmem:[%s2 + $0x5a8] sm:$0xff]
    %v247 = vld [vmem:[%s2 + $0x5b0] sm:$0xff]
    %v248 = vld [vmem:[%s2 + $0x5b8] sm:$0xff]
    %v249 = vld [vmem:[%s2 + $0x5c0] sm:$0xff]
    %v250 = vld [vmem:[%s2 + $0x5c8] sm:$0xff]
    %v251 = vld [vmem:[%s2 + $0x5d0] sm:$0xff]
    %v252 = vld [vmem:[%s2 + $0x5d8] sm:$0xff]
    %v253 = vld [vmem:[%s2 + $0x5e0] sm:$0xff]
    %v254 = vld [vmem:[%s2 + $0x5e8] sm:$0xff]
    %v255 = vld [vmem:[%s2 + $0x5f0] sm:$0xff]
    %v256 = vld [vmem:[%s2 + $0x5f8] sm:$0xff]
    %v257 = vld [vmem:[%s2 + $0x600] sm:$0xff]
    %v258 = vld [vmem:[%s2 + $0x608] sm:$0xff]
    %v259 = vld [vmem:[%s2 + $0x610] sm:$0xff]
    %v260 = vld [vmem:[%s2 + $0x618] sm:$0xff]
    %v261 = vld [vmem:[%s3] sm:$0xf]
    %v263 = vlaneseq
    %v264 = vshrl.u32 %v263, 7
    %v265 = vsub.s32 0, %v264
    %v266 = vrot.slane %v261, %v265
    %v267 = vlaneseq
    %v268 = vshrl.u32 %v267, 7
    %v269 = vsub.s32 1, %v268
    %v270 = vrot.slane %v261, %v269
    %v271 = vlaneseq
    %v272 = vshrl.u32 %v271, 7
    %v273 = vsub.s32 2, %v272
    %v274 = vrot.slane %v261, %v273
    %v275 = vlaneseq
    %v276 = vshrl.u32 %v275, 7
    %v277 = vsub.s32 3, %v276
    %v278 = vrot.slane %v261, %v277
    %v479 = vunpack.c.l.b16 %v65
    %v480 = vunpack.c.h.b16 %v65
    %v481 = vunpack.c.l.b16 %v66
    %v482 = vunpack.c.h.b16 %v66
    %v483 = vunpack.c.l.b16 %v67
    %v484 = vunpack.c.h.b16 %v67
    %v485 = vunpack.c.l.b16 %v68
    %v486 = vunpack.c.h.b16 %v68
    %v487 = vunpack.c.l.b16 %v69
    %v488 = vunpack.c.h.b16 %v69
    %v489 = vunpack.c.l.b16 %v70
    %v490 = vunpack.c.h.b16 %v70
    %v491 = vunpack.c.l.b16 %v71
    %v492 = vunpack.c.h.b16 %v71
    %v493 = vunpack.c.l.b16 %v72
    %v494 = vunpack.c.h.b16 %v72
    %v495 = vunpack.c.l.b16 %v73
    %v496 = vunpack.c.h.b16 %v73
    %v497 = vunpack.c.l.b16 %v74
    %v498 = vunpack.c.h.b16 %v74
    %v499 = vunpack.c.l.b16 %v75
    %v500 = vunpack.c.h.b16 %v75
    %v501 = vunpack.c.l.b16 %v76
    %v502 = vunpack.c.h.b16 %v76
    %v503 = vunpack.c.l.b16 %v77
    %v504 = vunpack.c.h.b16 %v77
    %v505 = vunpack.c.l.b16 %v78
    %v506 = vunpack.c.h.b16 %v78
    %v507 = vunpack.c.l.b16 %v79
    %v508 = vunpack.c.h.b16 %v79
    %v509 = vunpack.c.l.b16 %v80
    %v510 = vunpack.c.h.b16 %v80
    %v511 = vunpack.c.l.b16 %v81
    %v512 = vunpack.c.h.b16 %v81
    %v513 = vunpack.c.l.b16 %v82
    %v514 = vunpack.c.h.b16 %v82
    %v515 = vunpack.c.l.b16 %v83
    %v516 = vunpack.c.h.b16 %v83
    %v517 = vunpack.c.l.b16 %v84
    %v518 = vunpack.c.h.b16 %v84
    %v519 = vunpack.c.l.b16 %v85
    %v520 = vunpack.c.h.b16 %v85
    %v521 = vunpack.c.l.b16 %v86
    %v522 = vunpack.c.h.b16 %v86
    %v523 = vunpack.c.l.b16 %v87
    %v524 = vunpack.c.h.b16 %v87
    %v525 = vunpack.c.l.b16 %v88
    %v526 = vunpack.c.h.b16 %v88
    %v527 = vunpack.c.l.b16 %v89
    %v528 = vunpack.c.h.b16 %v89
    %v529 = vunpack.c.l.b16 %v90
    %v530 = vunpack.c.h.b16 %v90
    %v531 = vunpack.c.l.b16 %v91
    %v532 = vunpack.c.h.b16 %v91
    %v533 = vunpack.c.l.b16 %v92
    %v534 = vunpack.c.h.b16 %v92
    %v535 = vunpack.c.l.b16 %v93
    %v536 = vunpack.c.h.b16 %v93
    %v537 = vunpack.c.l.b16 %v94
    %v538 = vunpack.c.h.b16 %v94
    %v539 = vunpack.c.l.b16 %v95
    %v540 = vunpack.c.h.b16 %v95
    %v541 = vunpack.c.l.b16 %v96
    %v542 = vunpack.c.h.b16 %v96
    %v543 = vunpack.c.l.b16 %v97
    %v544 = vunpack.c.h.b16 %v97
    %v545 = vunpack.c.l.b16 %v98
    %v546 = vunpack.c.h.b16 %v98
    %v547 = vunpack.c.l.b16 %v99
    %v548 = vunpack.c.h.b16 %v99
    %v549 = vunpack.c.l.b16 %v100
    %v550 = vunpack.c.h.b16 %v100
    %v551 = vunpack.c.l.b16 %v101
    %v552 = vunpack.c.h.b16 %v101
    %v553 = vunpack.c.l.b16 %v102
    %v554 = vunpack.c.h.b16 %v102
    %v555 = vunpack.c.l.b16 %v103
    %v556 = vunpack.c.h.b16 %v103
    %v557 = vunpack.c.l.b16 %v104
    %v558 = vunpack.c.h.b16 %v104
    %v559 = vunpack.c.l.b16 %v105
    %v560 = vunpack.c.h.b16 %v105
    %v561 = vunpack.c.l.b16 %v106
    %v562 = vunpack.c.h.b16 %v106
    %v563 = vunpack.c.l.b16 %v107
    %v564 = vunpack.c.h.b16 %v107
    %v565 = vunpack.c.l.b16 %v108
    %v566 = vunpack.c.h.b16 %v108
    %v567 = vunpack.c.l.b16 %v109
    %v568 = vunpack.c.h.b16 %v109
    %v569 = vunpack.c.l.b16 %v110
    %v570 = vunpack.c.h.b16 %v110
    %v571 = vunpack.c.l.b16 %v111
    %v572 = vunpack.c.h.b16 %v111
    %v573 = vunpack.c.l.b16 %v112
    %v574 = vunpack.c.h.b16 %v112
    %v575 = vunpack.c.l.b16 %v113
    %v576 = vunpack.c.h.b16 %v113
    %v577 = vunpack.c.l.b16 %v114
    %v578 = vunpack.c.h.b16 %v114
    %v579 = vunpack.c.l.b16 %v115
    %v580 = vunpack.c.h.b16 %v115
    %v581 = vunpack.c.l.b16 %v116
    %v582 = vunpack.c.h.b16 %v116
    %v583 = vunpack.c.l.b16 %v117
    %v584 = vunpack.c.h.b16 %v117
    %v585 = vunpack.c.l.b16 %v118
    %v586 = vunpack.c.h.b16 %v118
    %v587 = vunpack.c.l.b16 %v119
    %v588 = vunpack.c.h.b16 %v119
    %v589 = vunpack.c.l.b16 %v120
    %v590 = vunpack.c.h.b16 %v120
    %v591 = vunpack.c.l.b16 %v121
    %v592 = vunpack.c.h.b16 %v121
    %v593 = vunpack.c.l.b16 %v122
    %v594 = vunpack.c.h.b16 %v122
    %v595 = vunpack.c.l.b16 %v123
    %v596 = vunpack.c.h.b16 %v123
    %v597 = vunpack.c.l.b16 %v124
    %v598 = vunpack.c.h.b16 %v124
    %v599 = vunpack.c.l.b16 %v125
    %v600 = vunpack.c.h.b16 %v125
    %v601 = vunpack.c.l.b16 %v126
    %v602 = vunpack.c.h.b16 %v126
    %v603 = vunpack.c.l.b16 %v127
    %v604 = vunpack.c.h.b16 %v127
    %v605 = vunpack.c.l.b16 %v128
    %v606 = vunpack.c.h.b16 %v128
    %v607 = vunpack.c.l.b16 %v129
    %v608 = vunpack.c.h.b16 %v129
    %v609 = vunpack.c.l.b16 %v130
    %v610 = vunpack.c.h.b16 %v130
    %v611 = vunpack.c.l.b16 %v131
    %v612 = vunpack.c.h.b16 %v131
    %v613 = vunpack.c.l.b16 %v132
    %v614 = vunpack.c.h.b16 %v132
    %v615 = vunpack.c.l.b16 %v133
    %v616 = vunpack.c.h.b16 %v133
    %v617 = vunpack.c.l.b16 %v134
    %v618 = vunpack.c.h.b16 %v134
    %v619 = vunpack.c.l.b16 %v135
    %v620 = vunpack.c.h.b16 %v135
    %v621 = vunpack.c.l.b16 %v136
    %v622 = vunpack.c.h.b16 %v136
    %v623 = vunpack.c.l.b16 %v137
    %v624 = vunpack.c.h.b16 %v137
    %v625 = vunpack.c.l.b16 %v138
    %v626 = vunpack.c.h.b16 %v138
    %v627 = vunpack.c.l.b16 %v139
    %v628 = vunpack.c.h.b16 %v139
    %v629 = vunpack.c.l.b16 %v140
    %v630 = vunpack.c.h.b16 %v140
    %v631 = vunpack.c.l.b16 %v141
    %v632 = vunpack.c.h.b16 %v141
    %v633 = vunpack.c.l.b16 %v142
    %v634 = vunpack.c.h.b16 %v142
    %v635 = vunpack.c.l.b16 %v143
    %v636 = vunpack.c.h.b16 %v143
    %v637 = vunpack.c.l.b16 %v144
    %v638 = vunpack.c.h.b16 %v144
    %v639 = vunpack.c.l.b16 %v145
    %v640 = vunpack.c.h.b16 %v145
    %v641 = vunpack.c.l.b16 %v146
    %v642 = vunpack.c.h.b16 %v146
    %v643 = vunpack.c.l.b16 %v147
    %v644 = vunpack.c.h.b16 %v147
    %v645 = vunpack.c.l.b16 %v148
    %v646 = vunpack.c.h.b16 %v148
    %v647 = vunpack.c.l.b16 %v149
    %v648 = vunpack.c.h.b16 %v149
    %v649 = vunpack.c.l.b16 %v150
    %v650 = vunpack.c.h.b16 %v150
    %v651 = vunpack.c.l.b16 %v151
    %v652 = vunpack.c.h.b16 %v151
    %v653 = vunpack.c.l.b16 %v152
    %v654 = vunpack.c.h.b16 %v152
    %v655 = vunpack.c.l.b16 %v153
    %v656 = vunpack.c.h.b16 %v153
    %v657 = vunpack.c.l.b16 %v154
    %v658 = vunpack.c.h.b16 %v154
    %v659 = vunpack.c.l.b16 %v155
    %v660 = vunpack.c.h.b16 %v155
    %v661 = vunpack.c.l.b16 %v156
    %v662 = vunpack.c.h.b16 %v156
    %v663 = vunpack.c.l.b16 %v157
    %v664 = vunpack.c.h.b16 %v157
    %v665 = vunpack.c.l.b16 %v158
    %v666 = vunpack.c.h.b16 %v158
    %v667 = vunpack.c.l.b16 %v159
    %v668 = vunpack.c.h.b16 %v159
    %v669 = vunpack.c.l.b16 %v160
    %v670 = vunpack.c.h.b16 %v160
    %v671 = vunpack.c.l.b16 %v161
    %v672 = vunpack.c.h.b16 %v161
    %v673 = vunpack.c.l.b16 %v162
    %v674 = vunpack.c.h.b16 %v162
    %v675 = vunpack.c.l.b16 %v163
    %v676 = vunpack.c.h.b16 %v163
    %v677 = vunpack.c.l.b16 %v164
    %v678 = vunpack.c.h.b16 %v164
    %v679 = vunpack.c.l.b16 %v165
    %v680 = vunpack.c.h.b16 %v165
    %v681 = vunpack.c.l.b16 %v166
    %v682 = vunpack.c.h.b16 %v166
    %v683 = vunpack.c.l.b16 %v167
    %v684 = vunpack.c.h.b16 %v167
    %v685 = vunpack.c.l.b16 %v168
    %v686 = vunpack.c.h.b16 %v168
    %v687 = vunpack.c.l.b16 %v169
    %v688 = vunpack.c.h.b16 %v169
    %v689 = vunpack.c.l.b16 %v170
    %v690 = vunpack.c.h.b16 %v170
    %v691 = vunpack.c.l.b16 %v171
    %v692 = vunpack.c.h.b16 %v171
    %v693 = vunpack.c.l.b16 %v172
    %v694 = vunpack.c.h.b16 %v172
    %v695 = vunpack.c.l.b16 %v173
    %v696 = vunpack.c.h.b16 %v173
    %v697 = vunpack.c.l.b16 %v174
    %v698 = vunpack.c.h.b16 %v174
    %v699 = vunpack.c.l.b16 %v175
    %v700 = vunpack.c.h.b16 %v175
    %v701 = vunpack.c.l.b16 %v176
    %v702 = vunpack.c.h.b16 %v176
    %v703 = vunpack.c.l.b16 %v177
    %v704 = vunpack.c.h.b16 %v177
    %v705 = vunpack.c.l.b16 %v178
    %v706 = vunpack.c.h.b16 %v178
    %v707 = vunpack.c.l.b16 %v179
    %v708 = vunpack.c.h.b16 %v179
    %v709 = vunpack.c.l.b16 %v180
    %v710 = vunpack.c.h.b16 %v180
    %v711 = vunpack.c.l.b16 %v181
    %v712 = vunpack.c.h.b16 %v181
    %v713 = vunpack.c.l.b16 %v182
    %v714 = vunpack.c.h.b16 %v182
    %v715 = vunpack.c.l.b16 %v183
    %v716 = vunpack.c.h.b16 %v183
    %v717 = vunpack.c.l.b16 %v184
    %v718 = vunpack.c.h.b16 %v184
    %v719 = vunpack.c.l.b16 %v185
    %v720 = vunpack.c.h.b16 %v185
    %v721 = vunpack.c.l.b16 %v186
    %v722 = vunpack.c.h.b16 %v186
    %v723 = vunpack.c.l.b16 %v187
    %v724 = vunpack.c.h.b16 %v187
    %v725 = vunpack.c.l.b16 %v188
    %v726 = vunpack.c.h.b16 %v188
    %v727 = vunpack.c.l.b16 %v189
    %v728 = vunpack.c.h.b16 %v189
    %v729 = vunpack.c.l.b16 %v190
    %v730 = vunpack.c.h.b16 %v190
    %v731 = vunpack.c.l.b16 %v191
    %v732 = vunpack.c.h.b16 %v191
    %v733 = vunpack.c.l.b16 %v192
    %v734 = vunpack.c.h.b16 %v192
    %v735 = vunpack.c.l.b16 %v193
    %v736 = vunpack.c.h.b16 %v193
    %v737 = vunpack.c.l.b16 %v194
    %v738 = vunpack.c.h.b16 %v194
    %v739 = vunpack.c.l.b16 %v195
    %v740 = vunpack.c.h.b16 %v195
    %v741 = vunpack.c.l.b16 %v196
    %v742 = vunpack.c.h.b16 %v196
    %v743 = vunpack.c.l.b16 %v197
    %v744 = vunpack.c.h.b16 %v197
    %v745 = vunpack.c.l.b16 %v198
    %v746 = vunpack.c.h.b16 %v198
    %v747 = vunpack.c.l.b16 %v199
    %v748 = vunpack.c.h.b16 %v199
    %v749 = vunpack.c.l.b16 %v200
    %v750 = vunpack.c.h.b16 %v200
    %v751 = vunpack.c.l.b16 %v201
    %v752 = vunpack.c.h.b16 %v201
    %v753 = vunpack.c.l.b16 %v202
    %v754 = vunpack.c.h.b16 %v202
    %v755 = vunpack.c.l.b16 %v203
    %v756 = vunpack.c.h.b16 %v203
    %v757 = vunpack.c.l.b16 %v204
    %v758 = vunpack.c.h.b16 %v204
    %v759 = vunpack.c.l.b16 %v205
    %v760 = vunpack.c.h.b16 %v205
    %v761 = vunpack.c.l.b16 %v206
    %v762 = vunpack.c.h.b16 %v206
    %v763 = vunpack.c.l.b16 %v207
    %v764 = vunpack.c.h.b16 %v207
    %v765 = vunpack.c.l.b16 %v208
    %v766 = vunpack.c.h.b16 %v208
    %v767 = vunpack.c.l.b16 %v209
    %v768 = vunpack.c.h.b16 %v209
    %v769 = vunpack.c.l.b16 %v210
    %v770 = vunpack.c.h.b16 %v210
    %v771 = vunpack.c.l.b16 %v211
    %v772 = vunpack.c.h.b16 %v211
    %v773 = vunpack.c.l.b16 %v212
    %v774 = vunpack.c.h.b16 %v212
    %v775 = vunpack.c.l.b16 %v213
    %v776 = vunpack.c.h.b16 %v213
    %v777 = vunpack.c.l.b16 %v214
    %v778 = vunpack.c.h.b16 %v214
    %v779 = vunpack.c.l.b16 %v215
    %v780 = vunpack.c.h.b16 %v215
    %v781 = vunpack.c.l.b16 %v216
    %v782 = vunpack.c.h.b16 %v216
    %v783 = vunpack.c.l.b16 %v217
    %v784 = vunpack.c.h.b16 %v217
    %v785 = vunpack.c.l.b16 %v218
    %v786 = vunpack.c.h.b16 %v218
    %v787 = vunpack.c.l.b16 %v219
    %v788 = vunpack.c.h.b16 %v219
    %v789 = vunpack.c.l.b16 %v220
    %v790 = vunpack.c.h.b16 %v220
    %v791 = vunpack.c.l.b16 %v221
    %v792 = vunpack.c.h.b16 %v221
    %v793 = vunpack.c.l.b16 %v222
    %v794 = vunpack.c.h.b16 %v222
    %v795 = vunpack.c.l.b16 %v223
    %v796 = vunpack.c.h.b16 %v223
    %v797 = vunpack.c.l.b16 %v224
    %v798 = vunpack.c.h.b16 %v224
    %v799 = vunpack.c.l.b16 %v225
    %v800 = vunpack.c.h.b16 %v225
    %v801 = vunpack.c.l.b16 %v226
    %v802 = vunpack.c.h.b16 %v226
    %v803 = vunpack.c.l.b16 %v227
    %v804 = vunpack.c.h.b16 %v227
    %v805 = vunpack.c.l.b16 %v228
    %v806 = vunpack.c.h.b16 %v228
    %v807 = vunpack.c.l.b16 %v229
    %v808 = vunpack.c.h.b16 %v229
    %v809 = vunpack.c.l.b16 %v230
    %v810 = vunpack.c.h.b16 %v230
    %v811 = vunpack.c.l.b16 %v231
    %v812 = vunpack.c.h.b16 %v231
    %v813 = vunpack.c.l.b16 %v232
    %v814 = vunpack.c.h.b16 %v232
    %v815 = vunpack.c.l.b16 %v233
    %v816 = vunpack.c.h.b16 %v233
    %v817 = vunpack.c.l.b16 %v234
    %v818 = vunpack.c.h.b16 %v234
    %v819 = vunpack.c.l.b16 %v235
    %v820 = vunpack.c.h.b16 %v235
    %v821 = vunpack.c.l.b16 %v236
    %v822 = vunpack.c.h.b16 %v236
    %v823 = vunpack.c.l.b16 %v237
    %v824 = vunpack.c.h.b16 %v237
    %v825 = vunpack.c.l.b16 %v238
    %v826 = vunpack.c.h.b16 %v238
    %v827 = vunpack.c.l.b16 %v239
    %v828 = vunpack.c.h.b16 %v239
    %v829 = vunpack.c.l.b16 %v240
    %v830 = vunpack.c.h.b16 %v240
    %v831 = vunpack.c.l.b16 %v241
    %v832 = vunpack.c.h.b16 %v241
    %v833 = vunpack.c.l.b16 %v242
    %v834 = vunpack.c.h.b16 %v242
    %v835 = vunpack.c.l.b16 %v243
    %v836 = vunpack.c.h.b16 %v243
    %v837 = vunpack.c.l.b16 %v244
    %v838 = vunpack.c.h.b16 %v244
    %v839 = vunpack.c.l.b16 %v245
    %v840 = vunpack.c.h.b16 %v245
    %v841 = vunpack.c.l.b16 %v246
    %v842 = vunpack.c.h.b16 %v246
    %v843 = vunpack.c.l.b16 %v247
    %v844 = vunpack.c.h.b16 %v247
    %v845 = vunpack.c.l.b16 %v248
    %v846 = vunpack.c.h.b16 %v248
    %v847 = vunpack.c.l.b16 %v249
    %v848 = vunpack.c.h.b16 %v249
    %v849 = vunpack.c.l.b16 %v250
    %v850 = vunpack.c.h.b16 %v250
    %v851 = vunpack.c.l.b16 %v251
    %v852 = vunpack.c.h.b16 %v251
    %v853 = vunpack.c.l.b16 %v252
    %v854 = vunpack.c.h.b16 %v252
    %v855 = vunpack.c.l.b16 %v253
    %v856 = vunpack.c.h.b16 %v253
    %v857 = vunpack.c.l.b16 %v254
    %v858 = vunpack.c.h.b16 %v254
    %v859 = vunpack.c.l.b16 %v255
    %v860 = vunpack.c.h.b16 %v255
    %v861 = vunpack.c.l.b16 %v256
    %v862 = vunpack.c.h.b16 %v256
    %v863 = vunpack.c.l.b16 %v257
    %v864 = vunpack.c.h.b16 %v257
    %v865 = vunpack.c.l.b16 %v258
    %v866 = vunpack.c.h.b16 %v258
    %v867 = vunpack.c.l.b16 %v259
    %v868 = vunpack.c.h.b16 %v259
    %v869 = vunpack.c.l.b16 %v260
    %v870 = vunpack.c.h.b16 %v260
    %v871 = vpack.c.b16 %v483, %v479
    %v872 = vpack.c.b16 %v484, %v480
    %v873 = vpack.c.b16 %v485, %v481
    %v874 = vpack.c.b16 %v486, %v482
    %v875 = vpack.c.b16 %v491, %v487
    %v876 = vpack.c.b16 %v492, %v488
    %v877 = vpack.c.b16 %v493, %v489
    %v878 = vpack.c.b16 %v494, %v490
    %v879 = vpack.c.b16 %v499, %v495
    %v880 = vpack.c.b16 %v500, %v496
    %v881 = vpack.c.b16 %v501, %v497
    %v882 = vpack.c.b16 %v502, %v498
    %v883 = vpack.c.b16 %v507, %v503
    %v884 = vpack.c.b16 %v508, %v504
    %v885 = vpack.c.b16 %v509, %v505
    %v886 = vpack.c.b16 %v510, %v506
    %v887 = vpack.c.b16 %v515, %v511
    %v888 = vpack.c.b16 %v516, %v512
    %v889 = vpack.c.b16 %v517, %v513
    %v890 = vpack.c.b16 %v518, %v514
    %v891 = vpack.c.b16 %v523, %v519
    %v892 = vpack.c.b16 %v524, %v520
    %v893 = vpack.c.b16 %v525, %v521
    %v894 = vpack.c.b16 %v526, %v522
    %v895 = vpack.c.b16 %v531, %v527
    %v896 = vpack.c.b16 %v532, %v528
    %v897 = vpack.c.b16 %v533, %v529
    %v898 = vpack.c.b16 %v534, %v530
    %v899 = vpack.c.b16 %v539, %v535
    %v900 = vpack.c.b16 %v540, %v536
    %v901 = vpack.c.b16 %v541, %v537
    %v902 = vpack.c.b16 %v542, %v538
    %v903 = vpack.c.b16 %v547, %v543
    %v904 = vpack.c.b16 %v548, %v544
    %v905 = vpack.c.b16 %v549, %v545
    %v906 = vpack.c.b16 %v550, %v546
    %v907 = vpack.c.b16 %v555, %v551
    %v908 = vpack.c.b16 %v556, %v552
    %v909 = vpack.c.b16 %v557, %v553
    %v910 = vpack.c.b16 %v558, %v554
    %v911 = vpack.c.b16 %v563, %v559
    %v912 = vpack.c.b16 %v564, %v560
    %v913 = vpack.c.b16 %v565, %v561
    %v914 = vpack.c.b16 %v566, %v562
    %v915 = vpack.c.b16 %v571, %v567
    %v916 = vpack.c.b16 %v572, %v568
    %v917 = vpack.c.b16 %v573, %v569
    %v918 = vpack.c.b16 %v574, %v570
    %v919 = vpack.c.b16 %v579, %v575
    %v920 = vpack.c.b16 %v580, %v576
    %v921 = vpack.c.b16 %v581, %v577
    %v922 = vpack.c.b16 %v582, %v578
    %v923 = vpack.c.b16 %v587, %v583
    %v924 = vpack.c.b16 %v588, %v584
    %v925 = vpack.c.b16 %v589, %v585
    %v926 = vpack.c.b16 %v590, %v586
    %v927 = vpack.c.b16 %v595, %v591
    %v928 = vpack.c.b16 %v596, %v592
    %v929 = vpack.c.b16 %v597, %v593
    %v930 = vpack.c.b16 %v598, %v594
    %v931 = vpack.c.b16 %v603, %v599
    %v932 = vpack.c.b16 %v604, %v600
    %v933 = vpack.c.b16 %v605, %v601
    %v934 = vpack.c.b16 %v606, %v602
    %v935 = vpack.c.b16 %v611, %v607
    %v936 = vpack.c.b16 %v612, %v608
    %v937 = vpack.c.b16 %v613, %v609
    %v938 = vpack.c.b16 %v614, %v610
    %v939 = vpack.c.b16 %v619, %v615
    %v940 = vpack.c.b16 %v620, %v616
    %v941 = vpack.c.b16 %v621, %v617
    %v942 = vpack.c.b16 %v622, %v618
    %v943 = vpack.c.b16 %v627, %v623
    %v944 = vpack.c.b16 %v628, %v624
    %v945 = vpack.c.b16 %v629, %v625
    %v946 = vpack.c.b16 %v630, %v626
    %v947 = vpack.c.b16 %v635, %v631
    %v948 = vpack.c.b16 %v636, %v632
    %v949 = vpack.c.b16 %v637, %v633
    %v950 = vpack.c.b16 %v638, %v634
    %v951 = vpack.c.b16 %v643, %v639
    %v952 = vpack.c.b16 %v644, %v640
    %v953 = vpack.c.b16 %v645, %v641
    %v954 = vpack.c.b16 %v646, %v642
    %v955 = vpack.c.b16 %v651, %v647
    %v956 = vpack.c.b16 %v652, %v648
    %v957 = vpack.c.b16 %v653, %v649
    %v958 = vpack.c.b16 %v654, %v650
    %v959 = vpack.c.b16 %v659, %v655
    %v960 = vpack.c.b16 %v660, %v656
    %v961 = vpack.c.b16 %v661, %v657
    %v962 = vpack.c.b16 %v662, %v658
    %v963 = vpack.c.b16 %v667, %v663
    %v964 = vpack.c.b16 %v668, %v664
    %v965 = vpack.c.b16 %v669, %v665
    %v966 = vpack.c.b16 %v670, %v666
    %v967 = vpack.c.b16 %v675, %v671
    %v968 = vpack.c.b16 %v676, %v672
    %v969 = vpack.c.b16 %v677, %v673
    %v970 = vpack.c.b16 %v678, %v674
    %v971 = vpack.c.b16 %v683, %v679
    %v972 = vpack.c.b16 %v684, %v680
    %v973 = vpack.c.b16 %v685, %v681
    %v974 = vpack.c.b16 %v686, %v682
    %v975 = vpack.c.b16 %v691, %v687
    %v976 = vpack.c.b16 %v692, %v688
    %v977 = vpack.c.b16 %v693, %v689
    %v978 = vpack.c.b16 %v694, %v690
    %v979 = vpack.c.b16 %v699, %v695
    %v980 = vpack.c.b16 %v700, %v696
    %v981 = vpack.c.b16 %v701, %v697
    %v982 = vpack.c.b16 %v702, %v698
    %v983 = vpack.c.b16 %v707, %v703
    %v984 = vpack.c.b16 %v708, %v704
    %v985 = vpack.c.b16 %v709, %v705
    %v986 = vpack.c.b16 %v710, %v706
    %v987 = vpack.c.b16 %v715, %v711
    %v988 = vpack.c.b16 %v716, %v712
    %v989 = vpack.c.b16 %v717, %v713
    %v990 = vpack.c.b16 %v718, %v714
    %v991 = vpack.c.b16 %v723, %v719
    %v992 = vpack.c.b16 %v724, %v720
    %v993 = vpack.c.b16 %v725, %v721
    %v994 = vpack.c.b16 %v726, %v722
    %v995 = vpack.c.b16 %v731, %v727
    %v996 = vpack.c.b16 %v732, %v728
    %v997 = vpack.c.b16 %v733, %v729
    %v998 = vpack.c.b16 %v734, %v730
    %v999 = vpack.c.b16 %v739, %v735
    %v1000 = vpack.c.b16 %v740, %v736
    %v1001 = vpack.c.b16 %v741, %v737
    %v1002 = vpack.c.b16 %v742, %v738
    %v1003 = vpack.c.b16 %v747, %v743
    %v1004 = vpack.c.b16 %v748, %v744
    %v1005 = vpack.c.b16 %v749, %v745
    %v1006 = vpack.c.b16 %v750, %v746
    %v1007 = vpack.c.b16 %v755, %v751
    %v1008 = vpack.c.b16 %v756, %v752
    %v1009 = vpack.c.b16 %v757, %v753
    %v1010 = vpack.c.b16 %v758, %v754
    %v1011 = vpack.c.b16 %v763, %v759
    %v1012 = vpack.c.b16 %v764, %v760
    %v1013 = vpack.c.b16 %v765, %v761
    %v1014 = vpack.c.b16 %v766, %v762
    %v1015 = vpack.c.b16 %v771, %v767
    %v1016 = vpack.c.b16 %v772, %v768
    %v1017 = vpack.c.b16 %v773, %v769
    %v1018 = vpack.c.b16 %v774, %v770
    %v1019 = vpack.c.b16 %v779, %v775
    %v1020 = vpack.c.b16 %v780, %v776
    %v1021 = vpack.c.b16 %v781, %v777
    %v1022 = vpack.c.b16 %v782, %v778
    %v1023 = vpack.c.b16 %v787, %v783
    %v1024 = vpack.c.b16 %v788, %v784
    %v1025 = vpack.c.b16 %v789, %v785
    %v1026 = vpack.c.b16 %v790, %v786
    %v1027 = vpack.c.b16 %v795, %v791
    %v1028 = vpack.c.b16 %v796, %v792
    %v1029 = vpack.c.b16 %v797, %v793
    %v1030 = vpack.c.b16 %v798, %v794
    %v1031 = vpack.c.b16 %v803, %v799
    %v1032 = vpack.c.b16 %v804, %v800
    %v1033 = vpack.c.b16 %v805, %v801
    %v1034 = vpack.c.b16 %v806, %v802
    %v1035 = vpack.c.b16 %v811, %v807
    %v1036 = vpack.c.b16 %v812, %v808
    %v1037 = vpack.c.b16 %v813, %v809
    %v1038 = vpack.c.b16 %v814, %v810
    %v1039 = vpack.c.b16 %v819, %v815
    %v1040 = vpack.c.b16 %v820, %v816
    %v1041 = vpack.c.b16 %v821, %v817
    %v1042 = vpack.c.b16 %v822, %v818
    %v1043 = vpack.c.b16 %v827, %v823
    %v1044 = vpack.c.b16 %v828, %v824
    %v1045 = vpack.c.b16 %v829, %v825
    %v1046 = vpack.c.b16 %v830, %v826
    %v1047 = vpack.c.b16 %v835, %v831
    %v1048 = vpack.c.b16 %v836, %v832
    %v1049 = vpack.c.b16 %v837, %v833
    %v1050 = vpack.c.b16 %v838, %v834
    %v1051 = vpack.c.b16 %v843, %v839
    %v1052 = vpack.c.b16 %v844, %v840
    %v1053 = vpack.c.b16 %v845, %v841
    %v1054 = vpack.c.b16 %v846, %v842
    %v1055 = vpack.c.b16 %v851, %v847
    %v1056 = vpack.c.b16 %v852, %v848
    %v1057 = vpack.c.b16 %v853, %v849
    %v1058 = vpack.c.b16 %v854, %v850
    %v1059 = vpack.c.b16 %v859, %v855
    %v1060 = vpack.c.b16 %v860, %v856
    %v1061 = vpack.c.b16 %v861, %v857
    %v1062 = vpack.c.b16 %v862, %v858
    %v1063 = vpack.c.b16 %v867, %v863
    %v1064 = vpack.c.b16 %v868, %v864
    %v1065 = vpack.c.b16 %v869, %v865
    %v1066 = vpack.c.b16 %v870, %v866
    %vm1263 = vcmask 130048
    %v1265 = vsel %vm1263, %v64, 0
    %1267 = vmatprep.subr.bf16.mxu0 %v872
    %1268 = vmatpush1.bf16.msra.mxu0 %v871
    %1269 = vmatprep.subr.bf16.mxu0 %v876
    %1270 = vmatpush1.bf16.msra.mxu0 %v875
    %1271 = vmatprep.subr.bf16.mxu0 %v880
    %1272 = vmatpush1.bf16.msra.mxu0 %v879
    %1273 = vmatprep.subr.bf16.mxu0 %v884
    %1274 = vmatpush1.bf16.msra.mxu0 %v883
    %1275 = vmatprep.subr.bf16.mxu0 %v888
    %1276 = vmatpush1.bf16.msra.mxu0 %v887
    %1277 = vmatprep.subr.bf16.mxu0 %v892
    %1278 = vmatpush1.bf16.msra.mxu0 %v891
    %1279 = vmatprep.subr.bf16.mxu0 %v896
    %1280 = vmatpush1.bf16.msra.mxu0 %v895
    %1281 = vmatprep.subr.bf16.mxu0 %v900
    %1282 = vmatpush1.bf16.msra.mxu0 %v899
    %1283 = vmatprep.subr.bf16.mxu0 %v904
    %1284 = vmatpush1.bf16.msra.mxu0 %v903
    %1285 = vmatprep.subr.bf16.mxu0 %v908
    %1286 = vmatpush1.bf16.msra.mxu0 %v907
    %1287 = vmatprep.subr.bf16.mxu0 %v912
    %1288 = vmatpush1.bf16.msra.mxu0 %v911
    %1289 = vmatprep.subr.bf16.mxu0 %v916
    %1290 = vmatpush1.bf16.msra.mxu0 %v915
    %1291 = vmatprep.subr.bf16.mxu0 %v920
    %1292 = vmatpush1.bf16.msra.mxu0 %v919
    %1293 = vmatprep.subr.bf16.mxu0 %v924
    %1294 = vmatpush1.bf16.msra.mxu0 %v923
    %1295 = vmatprep.subr.bf16.mxu0 %v928
    %1296 = vmatpush1.bf16.msra.mxu0 %v927
    %1297 = vmatprep.subr.bf16.mxu0 %v932
    %1298 = vmatpush1.bf16.msra.mxu0 %v931
    %1299 = vmatprep.mubr.bf16.mxu0 %v59
    %1300 = vmatmul.mubr.bf16.gmra.mrb[0].mxu0 %v58
    %v1301 = vpop.f32.mrb[0].mxu0
    %v1302 = vadd.f32 %v266, %v1301
    %v1303 = vpop.f32.mrb[0].mxu0
    %v1304 = vadd.f32 %v270, %v1303
    %v1305 = vpop.f32.mrb[0].mxu0
    %v1306 = vpop.f32.mrb[0].mxu0
    %1307 = vdwg.mxu0
    %1308 = vmatprep.subr.bf16.mxu0 %v936
    %1309 = vmatpush1.bf16.msra.mxu0 %v935
    %1310 = vmatprep.subr.bf16.mxu0 %v940
    %1311 = vmatpush1.bf16.msra.mxu0 %v939
    %1312 = vmatprep.subr.bf16.mxu0 %v944
    %1313 = vmatpush1.bf16.msra.mxu0 %v943
    %1314 = vmatprep.subr.bf16.mxu0 %v948
    %1315 = vmatpush1.bf16.msra.mxu0 %v947
    %1316 = vmatprep.subr.bf16.mxu0 %v952
    %1317 = vmatpush1.bf16.msra.mxu0 %v951
    %1318 = vmatprep.subr.bf16.mxu0 %v956
    %1319 = vmatpush1.bf16.msra.mxu0 %v955
    %1320 = vmatprep.subr.bf16.mxu0 %v960
    %1321 = vmatpush1.bf16.msra.mxu0 %v959
    %1322 = vmatprep.subr.bf16.mxu0 %v964
    %1323 = vmatpush1.bf16.msra.mxu0 %v963
    %1324 = vmatprep.subr.bf16.mxu0 %v968
    %1325 = vmatpush1.bf16.msra.mxu0 %v967
    %1326 = vmatprep.subr.bf16.mxu0 %v972
    %1327 = vmatpush1.bf16.msra.mxu0 %v971
    %1328 = vmatprep.subr.bf16.mxu0 %v976
    %1329 = vmatpush1.bf16.msra.mxu0 %v975
    %1330 = vmatprep.subr.bf16.mxu0 %v980
    %1331 = vmatpush1.bf16.msra.mxu0 %v979
    %1332 = vmatprep.subr.bf16.mxu0 %v984
    %1333 = vmatpush1.bf16.msra.mxu0 %v983
    %1334 = vmatprep.subr.bf16.mxu0 %v988
    %1335 = vmatpush1.bf16.msra.mxu0 %v987
    %1336 = vmatprep.subr.bf16.mxu0 %v992
    %1337 = vmatpush1.bf16.msra.mxu0 %v991
    %1338 = vmatprep.subr.bf16.mxu0 %v996
    %1339 = vmatpush1.bf16.msra.mxu0 %v995
    %1340 = vmatprep.mubr.bf16.mxu0 %v61
    %1341 = vmatmul.mubr.bf16.gmra.mrb[0].mxu0 %v60
    %v1342 = vpop.f32.mrb[0].mxu0
    %v1343 = vadd.f32 %v1302, %v1342
    %v1344 = vpop.f32.mrb[0].mxu0
    %v1345 = vadd.f32 %v1304, %v1344
    %v1346 = vpop.f32.mrb[0].mxu0
    %v1347 = vpop.f32.mrb[0].mxu0
    %1348 = vdwg.mxu0
    %1349 = vmatprep.subr.bf16.mxu0 %v1000
    %1350 = vmatpush1.bf16.msra.mxu0 %v999
    %1351 = vmatprep.subr.bf16.mxu0 %v1004
    %1352 = vmatpush1.bf16.msra.mxu0 %v1003
    %1353 = vmatprep.subr.bf16.mxu0 %v1008
    %1354 = vmatpush1.bf16.msra.mxu0 %v1007
    %1355 = vmatprep.subr.bf16.mxu0 %v1012
    %1356 = vmatpush1.bf16.msra.mxu0 %v1011
    %1357 = vmatprep.subr.bf16.mxu0 %v1016
    %1358 = vmatpush1.bf16.msra.mxu0 %v1015
    %1359 = vmatprep.subr.bf16.mxu0 %v1020
    %1360 = vmatpush1.bf16.msra.mxu0 %v1019
    %1361 = vmatprep.subr.bf16.mxu0 %v1024
    %1362 = vmatpush1.bf16.msra.mxu0 %v1023
    %1363 = vmatprep.subr.bf16.mxu0 %v1028
    %1364 = vmatpush1.bf16.msra.mxu0 %v1027
    %1365 = vmatprep.subr.bf16.mxu0 %v1032
    %1366 = vmatpush1.bf16.msra.mxu0 %v1031
    %1367 = vmatprep.subr.bf16.mxu0 %v1036
    %1368 = vmatpush1.bf16.msra.mxu0 %v1035
    %1369 = vmatprep.subr.bf16.mxu0 %v1040
    %1370 = vmatpush1.bf16.msra.mxu0 %v1039
    %1371 = vmatprep.subr.bf16.mxu0 %v1044
    %1372 = vmatpush1.bf16.msra.mxu0 %v1043
    %1373 = vmatprep.subr.bf16.mxu0 %v1048
    %1374 = vmatpush1.bf16.msra.mxu0 %v1047
    %1375 = vmatprep.subr.bf16.mxu0 %v1052
    %1376 = vmatpush1.bf16.msra.mxu0 %v1051
    %1377 = vmatprep.subr.bf16.mxu0 %v1056
    %1378 = vmatpush1.bf16.msra.mxu0 %v1055
    %1379 = vmatprep.subr.bf16.mxu0 %v1060
    %1380 = vmatpush1.bf16.msra.mxu0 %v1059
    %1381 = vmatprep.mubr.bf16.mxu0 %v63
    %1382 = vmatmul.mubr.bf16.gmra.mrb[0].mxu0 %v62
    %v1383 = vpop.f32.mrb[0].mxu0
    %v1384 = vadd.f32 %v1343, %v1383
    %v1385 = vpop.f32.mrb[0].mxu0
    %v1386 = vadd.f32 %v1345, %v1385
    %v1387 = vpop.f32.mrb[0].mxu0
    %v1388 = vpop.f32.mrb[0].mxu0
    %1389 = vdwg.mxu0
    %1390 = vmatprep.subr.bf16.mxu0 %v1064
    %1391 = vmatpush1.bf16.msra.mxu0 %v1063
    %1392 = vmatprep.subr.bf16.mxu0 0
    %1393 = vmatpush1.bf16.msra.mxu0 0
    %1394 = vmatprep.subr.bf16.mxu0 0
    %1395 = vmatpush1.bf16.msra.mxu0 0
    %1396 = vmatprep.subr.bf16.mxu0 0
    %1397 = vmatpush1.bf16.msra.mxu0 0
    %1398 = vmatprep.subr.bf16.mxu0 0
    %1399 = vmatpush1.bf16.msra.mxu0 0
    %1400 = vmatprep.subr.bf16.mxu0 0
    %1401 = vmatpush1.bf16.msra.mxu0 0
    %1402 = vmatprep.subr.bf16.mxu0 0
    %1403 = vmatpush1.bf16.msra.mxu0 0
    %1404 = vmatprep.subr.bf16.mxu0 0
    %1405 = vmatpush1.bf16.msra.mxu0 0
    %1406 = vmatprep.subr.bf16.mxu0 0
    %1407 = vmatpush1.bf16.msra.mxu0 0
    %1408 = vmatprep.subr.bf16.mxu0 0
    %1409 = vmatpush1.bf16.msra.mxu0 0
    %1410 = vmatprep.subr.bf16.mxu0 0
    %1411 = vmatpush1.bf16.msra.mxu0 0
    %1412 = vmatprep.subr.bf16.mxu0 0
    %1413 = vmatpush1.bf16.msra.mxu0 0
    %1414 = vmatprep.subr.bf16.mxu0 0
    %1415 = vmatpush1.bf16.msra.mxu0 0
    %1416 = vmatprep.subr.bf16.mxu0 0
    %1417 = vmatpush1.bf16.msra.mxu0 0
    %1418 = vmatprep.subr.bf16.mxu0 0
    %1419 = vmatpush1.bf16.msra.mxu0 0
    %1420 = vmatprep.subr.bf16.mxu0 0
    %1421 = vmatpush1.bf16.msra.mxu0 0
    %1422 = vmatprep.mubr.bf16.mxu0 0
    %1423 = vmatmul.mubr.bf16.gmra.mrb[0].mxu0 %v1265
    %v1424 = vpop.f32.mrb[0].mxu0
    %v1425 = vadd.f32 %v1384, %v1424
    %v1426 = vpop.f32.mrb[0].mxu0
    %v1427 = vadd.f32 %v1386, %v1426
    %v1428 = vpop.f32.mrb[0].mxu0
    %v1429 = vpop.f32.mrb[0].mxu0
    %1430 = vdwg.mxu0
    %1431 = vmatprep.subr.bf16.mxu0 %v874
    %1432 = vmatpush1.bf16.msra.mxu0 %v873
    %1433 = vmatprep.subr.bf16.mxu0 %v878
    %1434 = vmatpush1.bf16.msra.mxu0 %v877
    %1435 = vmatprep.subr.bf16.mxu0 %v882
    %1436 = vmatpush1.bf16.msra.mxu0 %v881
    %1437 = vmatprep.subr.bf16.mxu0 %v886
    %1438 = vmatpush1.bf16.msra.mxu0 %v885
    %1439 = vmatprep.subr.bf16.mxu0 %v890
    %1440 = vmatpush1.bf16.msra.mxu0 %v889
    %1441 = vmatprep.subr.bf16.mxu0 %v894
    %1442 = vmatpush1.bf16.msra.mxu0 %v893
    %1443 = vmatprep.subr.bf16.mxu0 %v898
    %1444 = vmatpush1.bf16.msra.mxu0 %v897
    %1445 = vmatprep.subr.bf16.mxu0 %v902
    %1446 = vmatpush1.bf16.msra.mxu0 %v901
    %1447 = vmatprep.subr.bf16.mxu0 %v906
    %1448 = vmatpush1.bf16.msra.mxu0 %v905
    %1449 = vmatprep.subr.bf16.mxu0 %v910
    %1450 = vmatpush1.bf16.msra.mxu0 %v909
    %1451 = vmatprep.subr.bf16.mxu0 %v914
    %1452 = vmatpush1.bf16.msra.mxu0 %v913
    %1453 = vmatprep.subr.bf16.mxu0 %v918
    %1454 = vmatpush1.bf16.msra.mxu0 %v917
    %1455 = vmatprep.subr.bf16.mxu0 %v922
    %1456 = vmatpush1.bf16.msra.mxu0 %v921
    %1457 = vmatprep.subr.bf16.mxu0 %v926
    %1458 = vmatpush1.bf16.msra.mxu0 %v925
    %1459 = vmatprep.subr.bf16.mxu0 %v930
    %1460 = vmatpush1.bf16.msra.mxu0 %v929
    %1461 = vmatprep.subr.bf16.mxu0 %v934
    %1462 = vmatpush1.bf16.msra.mxu0 %v933
    %1463 = vmatprep.mubr.bf16.mxu0 %v59
    %1464 = vmatmul.mubr.bf16.gmra.mrb[0].mxu0 %v58
    %v1465 = vpop.f32.mrb[0].mxu0
    %v1466 = vadd.f32 %v274, %v1465
    %v1467 = vpop.f32.mrb[0].mxu0
    %v1468 = vadd.f32 %v278, %v1467
    %v1469 = vpop.f32.mrb[0].mxu0
    %v1470 = vpop.f32.mrb[0].mxu0
    %1471 = vdwg.mxu0
    %1472 = vmatprep.subr.bf16.mxu0 %v938
    %1473 = vmatpush1.bf16.msra.mxu0 %v937
    %1474 = vmatprep.subr.bf16.mxu0 %v942
    %1475 = vmatpush1.bf16.msra.mxu0 %v941
    %1476 = vmatprep.subr.bf16.mxu0 %v946
    %1477 = vmatpush1.bf16.msra.mxu0 %v945
    %1478 = vmatprep.subr.bf16.mxu0 %v950
    %1479 = vmatpush1.bf16.msra.mxu0 %v949
    %1480 = vmatprep.subr.bf16.mxu0 %v954
    %1481 = vmatpush1.bf16.msra.mxu0 %v953
    %1482 = vmatprep.subr.bf16.mxu0 %v958
    %1483 = vmatpush1.bf16.msra.mxu0 %v957
    %1484 = vmatprep.subr.bf16.mxu0 %v962
    %1485 = vmatpush1.bf16.msra.mxu0 %v961
    %1486 = vmatprep.subr.bf16.mxu0 %v966
    %1487 = vmatpush1.bf16.msra.mxu0 %v965
    %1488 = vmatprep.subr.bf16.mxu0 %v970
    %1489 = vmatpush1.bf16.msra.mxu0 %v969
    %1490 = vmatprep.subr.bf16.mxu0 %v974
    %1491 = vmatpush1.bf16.msra.mxu0 %v973
    %1492 = vmatprep.subr.bf16.mxu0 %v978
    %1493 = vmatpush1.bf16.msra.mxu0 %v977
    %1494 = vmatprep.subr.bf16.mxu0 %v982
    %1495 = vmatpush1.bf16.msra.mxu0 %v981
    %1496 = vmatprep.subr.bf16.mxu0 %v986
    %1497 = vmatpush1.bf16.msra.mxu0 %v985
    %1498 = vmatprep.subr.bf16.mxu0 %v990
    %1499 = vmatpush1.bf16.msra.mxu0 %v989
    %1500 = vmatprep.subr.bf16.mxu0 %v994
    %1501 = vmatpush1.bf16.msra.mxu0 %v993
    %1502 = vmatprep.subr.bf16.mxu0 %v998
    %1503 = vmatpush1.bf16.msra.mxu0 %v997
    %1504 = vmatprep.mubr.bf16.mxu0 %v61
    %1505 = vmatmul.mubr.bf16.gmra.mrb[0].mxu0 %v60
    %v1506 = vpop.f32.mrb[0].mxu0
    %v1507 = vadd.f32 %v1466, %v1506
    %v1508 = vpop.f32.mrb[0].mxu0
    %v1509 = vadd.f32 %v1468, %v1508
    %v1510 = vpop.f32.mrb[0].mxu0
    %v1511 = vpop.f32.mrb[0].mxu0
    %1512 = vdwg.mxu0
    %1513 = vmatprep.subr.bf16.mxu0 %v1002
    %1514 = vmatpush1.bf16.msra.mxu0 %v1001
    %1515 = vmatprep.subr.bf16.mxu0 %v1006
    %1516 = vmatpush1.bf16.msra.mxu0 %v1005
    %1517 = vmatprep.subr.bf16.mxu0 %v1010
    %1518 = vmatpush1.bf16.msra.mxu0 %v1009
    %1519 = vmatprep.subr.bf16.mxu0 %v1014
    %1520 = vmatpush1.bf16.msra.mxu0 %v1013
    %1521 = vmatprep.subr.bf16.mxu0 %v1018
    %1522 = vmatpush1.bf16.msra.mxu0 %v1017
    %1523 = vmatprep.subr.bf16.mxu0 %v1022
    %1524 = vmatpush1.bf16.msra.mxu0 %v1021
    %1525 = vmatprep.subr.bf16.mxu0 %v1026
    %1526 = vmatpush1.bf16.msra.mxu0 %v1025
    %1527 = vmatprep.subr.bf16.mxu0 %v1030
    %1528 = vmatpush1.bf16.msra.mxu0 %v1029
    %1529 = vmatprep.subr.bf16.mxu0 %v1034
    %1530 = vmatpush1.bf16.msra.mxu0 %v1033
    %1531 = vmatprep.subr.bf16.mxu0 %v1038
    %1532 = vmatpush1.bf16.msra.mxu0 %v1037
    %1533 = vmatprep.subr.bf16.mxu0 %v1042
    %1534 = vmatpush1.bf16.msra.mxu0 %v1041
    %1535 = vmatprep.subr.bf16.mxu0 %v1046
    %1536 = vmatpush1.bf16.msra.mxu0 %v1045
    %1537 = vmatprep.subr.bf16.mxu0 %v1050
    %1538 = vmatpush1.bf16.msra.mxu0 %v1049
    %1539 = vmatprep.subr.bf16.mxu0 %v1054
    %1540 = vmatpush1.bf16.msra.mxu0 %v1053
    %1541 = vmatprep.subr.bf16.mxu0 %v1058
    %1542 = vmatpush1.bf16.msra.mxu0 %v1057
    %1543 = vmatprep.subr.bf16.mxu0 %v1062
    %1544 = vmatpush1.bf16.msra.mxu0 %v1061
    %1545 = vmatprep.mubr.bf16.mxu0 %v63
    %1546 = vmatmul.mubr.bf16.gmra.mrb[0].mxu0 %v62
    %v1547 = vpop.f32.mrb[0].mxu0
    %v1548 = vadd.f32 %v1507, %v1547
    %v1549 = vpop.f32.mrb[0].mxu0
    %v1550 = vadd.f32 %v1509, %v1549
    %v1551 = vpop.f32.mrb[0].mxu0
    %v1552 = vpop.f32.mrb[0].mxu0
    %1553 = vdwg.mxu0
    %1554 = vmatprep.subr.bf16.mxu0 %v1066
    %1555 = vmatpush1.bf16.msra.mxu0 %v1065
    %1556 = vmatprep.subr.bf16.mxu0 0
    %1557 = vmatpush1.bf16.msra.mxu0 0
    %1558 = vmatprep.subr.bf16.mxu0 0
    %1559 = vmatpush1.bf16.msra.mxu0 0
    %1560 = vmatprep.subr.bf16.mxu0 0
    %1561 = vmatpush1.bf16.msra.mxu0 0
    %1562 = vmatprep.subr.bf16.mxu0 0
    %1563 = vmatpush1.bf16.msra.mxu0 0
    %1564 = vmatprep.subr.bf16.mxu0 0
    %1565 = vmatpush1.bf16.msra.mxu0 0
    %1566 = vmatprep.subr.bf16.mxu0 0
    %1567 = vmatpush1.bf16.msra.mxu0 0
    %1568 = vmatprep.subr.bf16.mxu0 0
    %1569 = vmatpush1.bf16.msra.mxu0 0
    %1570 = vmatprep.subr.bf16.mxu0 0
    %1571 = vmatpush1.bf16.msra.mxu0 0
    %1572 = vmatprep.subr.bf16.mxu0 0
    %1573 = vmatpush1.bf16.msra.mxu0 0
    %1574 = vmatprep.subr.bf16.mxu0 0
    %1575 = vmatpush1.bf16.msra.mxu0 0
    %1576 = vmatprep.subr.bf16.mxu0 0
    %1577 = vmatpush1.bf16.msra.mxu0 0
    %1578 = vmatprep.subr.bf16.mxu0 0
    %1579 = vmatpush1.bf16.msra.mxu0 0
    %1580 = vmatprep.subr.bf16.mxu0 0
    %1581 = vmatpush1.bf16.msra.mxu0 0
    %1582 = vmatprep.subr.bf16.mxu0 0
    %1583 = vmatpush1.bf16.msra.mxu0 0
    %1584 = vmatprep.subr.bf16.mxu0 0
    %1585 = vmatpush1.bf16.msra.mxu0 0
    %1586 = vmatprep.mubr.bf16.mxu0 0
    %1587 = vmatmul.mubr.bf16.gmra.mrb[0].mxu0 %v1265
    %v1588 = vpop.f32.mrb[0].mxu0
    %v1589 = vadd.f32 %v1548, %v1588
    %v1590 = vpop.f32.mrb[0].mxu0
    %v1591 = vadd.f32 %v1550, %v1590
    %v1592 = vpop.f32.mrb[0].mxu0
    %v1593 = vpop.f32.mrb[0].mxu0
    %1594 = vdwg.mxu0
    %v1595 = vmax.f32 %v1425, 0.0
    %v1596 = vmax.f32 %v1427, 0.0
    %v1597 = vmax.f32 %v1589, 0.0
    %v1598 = vmax.f32 %v1591, 0.0
    %v1599 = vpack.c.bf16 %v1595, %v1595
    %v1600 = vpack.c.bf16 %v1596, %v1596
    %v1601 = vpack.c.bf16 %v1597, %v1597
    %v1602 = vpack.c.bf16 %v1598, %v1598
    %v1603 = vld [vmem:[%s4] sm:$0xff]
    %v1604 = vld [vmem:[%s4 + $0x8] sm:$0xff]
    %v1605 = vld [vmem:[%s4 + $0x10] sm:$0xff]
    %v1606 = vld [vmem:[%s4 + $0x18] sm:$0xff]
    %v1607 = vld [vmem:[%s4 + $0x20] sm:$0xff]
    %v1608 = vld [vmem:[%s4 + $0x28] sm:$0xff]
    %v1609 = vld [vmem:[%s4 + $0x30] sm:$0xff]
    %v1610 = vld [vmem:[%s4 + $0x38] sm:$0xff]
    %v1611 = vld [vmem:[%s4 + $0x40] sm:$0xff]
    %v1612 = vld [vmem:[%s4 + $0x48] sm:$0xff]
    %v1613 = vld [vmem:[%s4 + $0x50] sm:$0xff]
    %v1614 = vld [vmem:[%s4 + $0x58] sm:$0xff]
    %v1615 = vld [vmem:[%s4 + $0x60] sm:$0xff]
    %v1616 = vld [vmem:[%s4 + $0x68] sm:$0xff]
    %v1617 = vld [vmem:[%s4 + $0x70] sm:$0xff]
    %v1618 = vld [vmem:[%s4 + $0x78] sm:$0xff]
    %v1619 = vld [vmem:[%s4 + $0x80] sm:$0xff]
    %v1620 = vld [vmem:[%s4 + $0x88] sm:$0xff]
    %v1621 = vld [vmem:[%s4 + $0x90] sm:$0xff]
    %v1622 = vld [vmem:[%s4 + $0x98] sm:$0xff]
    %v1623 = vld [vmem:[%s4 + $0xa0] sm:$0xff]
    %v1624 = vld [vmem:[%s4 + $0xa8] sm:$0xff]
    %v1625 = vld [vmem:[%s4 + $0xb0] sm:$0xff]
    %v1626 = vld [vmem:[%s4 + $0xb8] sm:$0xff]
    %v1627 = vld [vmem:[%s4 + $0xc0] sm:$0xff]
    %v1628 = vld [vmem:[%s4 + $0xc8] sm:$0xff]
    %v1629 = vld [vmem:[%s4 + $0xd0] sm:$0xff]
    %v1630 = vld [vmem:[%s4 + $0xd8] sm:$0xff]
    %v1631 = vld [vmem:[%s4 + $0xe0] sm:$0xff]
    %v1632 = vld [vmem:[%s4 + $0xe8] sm:$0xff]
    %v1633 = vld [vmem:[%s4 + $0xf0] sm:$0xff]
    %v1634 = vld [vmem:[%s4 + $0xf8] sm:$0xff]
    %v1635 = vld [vmem:[%s4 + $0x100] sm:$0xff]
    %v1636 = vld [vmem:[%s4 + $0x108] sm:$0xff]
    %v1637 = vld [vmem:[%s4 + $0x110] sm:$0xff]
    %v1638 = vld [vmem:[%s4 + $0x118] sm:$0xff]
    %v1639 = vld [vmem:[%s4 + $0x120] sm:$0xff]
    %v1640 = vld [vmem:[%s4 + $0x128] sm:$0xff]
    %v1641 = vld [vmem:[%s4 + $0x130] sm:$0xff]
    %v1642 = vld [vmem:[%s4 + $0x138] sm:$0xff]
    %v1643 = vld [vmem:[%s4 + $0x140] sm:$0xff]
    %v1644 = vld [vmem:[%s4 + $0x148] sm:$0xff]
    %v1645 = vld [vmem:[%s4 + $0x150] sm:$0xff]
    %v1646 = vld [vmem:[%s4 + $0x158] sm:$0xff]
    %v1647 = vld [vmem:[%s4 + $0x160] sm:$0xff]
    %v1648 = vld [vmem:[%s4 + $0x168] sm:$0xff]
    %v1649 = vld [vmem:[%s4 + $0x170] sm:$0xff]
    %v1650 = vld [vmem:[%s4 + $0x178] sm:$0xff]
    %v1651 = vld [vmem:[%s4 + $0x180] sm:$0xff]
    %v1652 = vld [vmem:[%s4 + $0x188] sm:$0xff]
    %v1653 = vld [vmem:[%s4 + $0x190] sm:$0xff]
    %v1654 = vld [vmem:[%s4 + $0x198] sm:$0xff]
    %v1655 = vld [vmem:[%s4 + $0x1a0] sm:$0xff]
    %v1656 = vld [vmem:[%s4 + $0x1a8] sm:$0xff]
    %v1657 = vld [vmem:[%s4 + $0x1b0] sm:$0xff]
    %v1658 = vld [vmem:[%s4 + $0x1b8] sm:$0xff]
    %v1659 = vld [vmem:[%s4 + $0x1c0] sm:$0xff]
    %v1660 = vld [vmem:[%s4 + $0x1c8] sm:$0xff]
    %v1661 = vld [vmem:[%s4 + $0x1d0] sm:$0xff]
    %v1662 = vld [vmem:[%s4 + $0x1d8] sm:$0xff]
    %v1663 = vld [vmem:[%s4 + $0x1e0] sm:$0xff]
    %v1664 = vld [vmem:[%s4 + $0x1e8] sm:$0xff]
    %v1665 = vld [vmem:[%s4 + $0x1f0] sm:$0xff]
    %v1666 = vld [vmem:[%s4 + $0x1f8] sm:$0xff]
    %v1667 = vld [vmem:[%s4 + $0x200] sm:$0xff]
    %v1668 = vld [vmem:[%s4 + $0x208] sm:$0xff]
    %v1669 = vld [vmem:[%s4 + $0x210] sm:$0xff]
    %v1670 = vld [vmem:[%s4 + $0x218] sm:$0xff]
    %v1671 = vld [vmem:[%s4 + $0x220] sm:$0xff]
    %v1672 = vld [vmem:[%s4 + $0x228] sm:$0xff]
    %v1673 = vld [vmem:[%s4 + $0x230] sm:$0xff]
    %v1674 = vld [vmem:[%s4 + $0x238] sm:$0xff]
    %v1675 = vld [vmem:[%s4 + $0x240] sm:$0xff]
    %v1676 = vld [vmem:[%s4 + $0x248] sm:$0xff]
    %v1677 = vld [vmem:[%s4 + $0x250] sm:$0xff]
    %v1678 = vld [vmem:[%s4 + $0x258] sm:$0xff]
    %v1679 = vld [vmem:[%s4 + $0x260] sm:$0xff]
    %v1680 = vld [vmem:[%s4 + $0x268] sm:$0xff]
    %v1681 = vld [vmem:[%s4 + $0x270] sm:$0xff]
    %v1682 = vld [vmem:[%s4 + $0x278] sm:$0xff]
    %v1683 = vld [vmem:[%s4 + $0x280] sm:$0xff]
    %v1684 = vld [vmem:[%s4 + $0x288] sm:$0xff]
    %v1685 = vld [vmem:[%s4 + $0x290] sm:$0xff]
    %v1686 = vld [vmem:[%s4 + $0x298] sm:$0xff]
    %v1687 = vld [vmem:[%s4 + $0x2a0] sm:$0xff]
    %v1688 = vld [vmem:[%s4 + $0x2a8] sm:$0xff]
    %v1689 = vld [vmem:[%s4 + $0x2b0] sm:$0xff]
    %v1690 = vld [vmem:[%s4 + $0x2b8] sm:$0xff]
    %v1691 = vld [vmem:[%s4 + $0x2c0] sm:$0xff]
    %v1692 = vld [vmem:[%s4 + $0x2c8] sm:$0xff]
    %v1693 = vld [vmem:[%s4 + $0x2d0] sm:$0xff]
    %v1694 = vld [vmem:[%s4 + $0x2d8] sm:$0xff]
    %v1695 = vld [vmem:[%s4 + $0x2e0] sm:$0xff]
    %v1696 = vld [vmem:[%s4 + $0x2e8] sm:$0xff]
    %v1697 = vld [vmem:[%s4 + $0x2f0] sm:$0xff]
    %v1698 = vld [vmem:[%s4 + $0x2f8] sm:$0xff]
    %v1699 = vld [vmem:[%s4 + $0x300] sm:$0xff]
    %v1700 = vld [vmem:[%s4 + $0x308] sm:$0xff]
    %v1701 = vld [vmem:[%s4 + $0x310] sm:$0xff]
    %v1702 = vld [vmem:[%s4 + $0x318] sm:$0xff]
    %v1703 = vld [vmem:[%s4 + $0x320] sm:$0xff]
    %v1704 = vld [vmem:[%s4 + $0x328] sm:$0xff]
    %v1705 = vld [vmem:[%s4 + $0x330] sm:$0xff]
    %v1706 = vld [vmem:[%s4 + $0x338] sm:$0xff]
    %v1707 = vld [vmem:[%s4 + $0x340] sm:$0xff]
    %v1708 = vld [vmem:[%s4 + $0x348] sm:$0xff]
    %v1709 = vld [vmem:[%s4 + $0x350] sm:$0xff]
    %v1710 = vld [vmem:[%s4 + $0x358] sm:$0xff]
    %v1711 = vld [vmem:[%s4 + $0x360] sm:$0xff]
    %v1712 = vld [vmem:[%s4 + $0x368] sm:$0xff]
    %v1713 = vld [vmem:[%s4 + $0x370] sm:$0xff]
    %v1714 = vld [vmem:[%s4 + $0x378] sm:$0xff]
    %v1715 = vld [vmem:[%s4 + $0x380] sm:$0xff]
    %v1716 = vld [vmem:[%s4 + $0x388] sm:$0xff]
    %v1717 = vld [vmem:[%s4 + $0x390] sm:$0xff]
    %v1718 = vld [vmem:[%s4 + $0x398] sm:$0xff]
    %v1719 = vld [vmem:[%s4 + $0x3a0] sm:$0xff]
    %v1720 = vld [vmem:[%s4 + $0x3a8] sm:$0xff]
    %v1721 = vld [vmem:[%s4 + $0x3b0] sm:$0xff]
    %v1722 = vld [vmem:[%s4 + $0x3b8] sm:$0xff]
    %v1723 = vld [vmem:[%s4 + $0x3c0] sm:$0xff]
    %v1724 = vld [vmem:[%s4 + $0x3c8] sm:$0xff]
    %v1725 = vld [vmem:[%s4 + $0x3d0] sm:$0xff]
    %v1726 = vld [vmem:[%s4 + $0x3d8] sm:$0xff]
    %v1727 = vld [vmem:[%s4 + $0x3e0] sm:$0xff]
    %v1728 = vld [vmem:[%s4 + $0x3e8] sm:$0xff]
    %v1729 = vld [vmem:[%s4 + $0x3f0] sm:$0xff]
    %v1730 = vld [vmem:[%s4 + $0x3f8] sm:$0xff]
    %v1731 = vld [vmem:[%s5] sm:$0xf]
    %v1733 = vlaneseq
    %v1734 = vshrl.u32 %v1733, 7
    %v1735 = vsub.s32 0, %v1734
    %v1736 = vrot.slane %v1731, %v1735
    %v1737 = vlaneseq
    %v1738 = vshrl.u32 %v1737, 7
    %v1739 = vsub.s32 1, %v1738
    %v1740 = vrot.slane %v1731, %v1739
    %v1741 = vlaneseq
    %v1742 = vshrl.u32 %v1741, 7
    %v1743 = vsub.s32 2, %v1742
    %v1744 = vrot.slane %v1731, %v1743
    %v1745 = vlaneseq
    %v1746 = vshrl.u32 %v1745, 7
    %v1747 = vsub.s32 3, %v1746
    %v1748 = vrot.slane %v1731, %v1747
    %v1881 = vunpack.c.l.b16 %v1603
    %v1882 = vunpack.c.h.b16 %v1603
    %v1883 = vunpack.c.l.b16 %v1604
    %v1884 = vunpack.c.h.b16 %v1604
    %v1885 = vunpack.c.l.b16 %v1605
    %v1886 = vunpack.c.h.b16 %v1605
    %v1887 = vunpack.c.l.b16 %v1606
    %v1888 = vunpack.c.h.b16 %v1606
    %v1889 = vunpack.c.l.b16 %v1607
    %v1890 = vunpack.c.h.b16 %v1607
    %v1891 = vunpack.c.l.b16 %v1608
    %v1892 = vunpack.c.h.b16 %v1608
    %v1893 = vunpack.c.l.b16 %v1609
    %v1894 = vunpack.c.h.b16 %v1609
    %v1895 = vunpack.c.l.b16 %v1610
    %v1896 = vunpack.c.h.b16 %v1610
    %v1897 = vunpack.c.l.b16 %v1611
    %v1898 = vunpack.c.h.b16 %v1611
    %v1899 = vunpack.c.l.b16 %v1612
    %v1900 = vunpack.c.h.b16 %v1612
    %v1901 = vunpack.c.l.b16 %v1613
    %v1902 = vunpack.c.h.b16 %v1613
    %v1903 = vunpack.c.l.b16 %v1614
    %v1904 = vunpack.c.h.b16 %v1614
    %v1905 = vunpack.c.l.b16 %v1615
    %v1906 = vunpack.c.h.b16 %v1615
    %v1907 = vunpack.c.l.b16 %v1616
    %v1908 = vunpack.c.h.b16 %v1616
    %v1909 = vunpack.c.l.b16 %v1617
    %v1910 = vunpack.c.h.b16 %v1617
    %v1911 = vunpack.c.l.b16 %v1618
    %v1912 = vunpack.c.h.b16 %v1618
    %v1913 = vunpack.c.l.b16 %v1619
    %v1914 = vunpack.c.h.b16 %v1619
    %v1915 = vunpack.c.l.b16 %v1620
    %v1916 = vunpack.c.h.b16 %v1620
    %v1917 = vunpack.c.l.b16 %v1621
    %v1918 = vunpack.c.h.b16 %v1621
    %v1919 = vunpack.c.l.b16 %v1622
    %v1920 = vunpack.c.h.b16 %v1622
    %v1921 = vunpack.c.l.b16 %v1623
    %v1922 = vunpack.c.h.b16 %v1623
    %v1923 = vunpack.c.l.b16 %v1624
    %v1924 = vunpack.c.h.b16 %v1624
    %v1925 = vunpack.c.l.b16 %v1625
    %v1926 = vunpack.c.h.b16 %v1625
    %v1927 = vunpack.c.l.b16 %v1626
    %v1928 = vunpack.c.h.b16 %v1626
    %v1929 = vunpack.c.l.b16 %v1627
    %v1930 = vunpack.c.h.b16 %v1627
    %v1931 = vunpack.c.l.b16 %v1628
    %v1932 = vunpack.c.h.b16 %v1628
    %v1933 = vunpack.c.l.b16 %v1629
    %v1934 = vunpack.c.h.b16 %v1629
    %v1935 = vunpack.c.l.b16 %v1630
    %v1936 = vunpack.c.h.b16 %v1630
    %v1937 = vunpack.c.l.b16 %v1631
    %v1938 = vunpack.c.h.b16 %v1631
    %v1939 = vunpack.c.l.b16 %v1632
    %v1940 = vunpack.c.h.b16 %v1632
    %v1941 = vunpack.c.l.b16 %v1633
    %v1942 = vunpack.c.h.b16 %v1633
    %v1943 = vunpack.c.l.b16 %v1634
    %v1944 = vunpack.c.h.b16 %v1634
    %v1945 = vunpack.c.l.b16 %v1635
    %v1946 = vunpack.c.h.b16 %v1635
    %v1947 = vunpack.c.l.b16 %v1636
    %v1948 = vunpack.c.h.b16 %v1636
    %v1949 = vunpack.c.l.b16 %v1637
    %v1950 = vunpack.c.h.b16 %v1637
    %v1951 = vunpack.c.l.b16 %v1638
    %v1952 = vunpack.c.h.b16 %v1638
    %v1953 = vunpack.c.l.b16 %v1639
    %v1954 = vunpack.c.h.b16 %v1639
    %v1955 = vunpack.c.l.b16 %v1640
    %v1956 = vunpack.c.h.b16 %v1640
    %v1957 = vunpack.c.l.b16 %v1641
    %v1958 = vunpack.c.h.b16 %v1641
    %v1959 = vunpack.c.l.b16 %v1642
    %v1960 = vunpack.c.h.b16 %v1642
    %v1961 = vunpack.c.l.b16 %v1643
    %v1962 = vunpack.c.h.b16 %v1643
    %v1963 = vunpack.c.l.b16 %v1644
    %v1964 = vunpack.c.h.b16 %v1644
    %v1965 = vunpack.c.l.b16 %v1645
    %v1966 = vunpack.c.h.b16 %v1645
    %v1967 = vunpack.c.l.b16 %v1646
    %v1968 = vunpack.c.h.b16 %v1646
    %v1969 = vunpack.c.l.b16 %v1647
    %v1970 = vunpack.c.h.b16 %v1647
    %v1971 = vunpack.c.l.b16 %v1648
    %v1972 = vunpack.c.h.b16 %v1648
    %v1973 = vunpack.c.l.b16 %v1649
    %v1974 = vunpack.c.h.b16 %v1649
    %v1975 = vunpack.c.l.b16 %v1650
    %v1976 = vunpack.c.h.b16 %v1650
    %v1977 = vunpack.c.l.b16 %v1651
    %v1978 = vunpack.c.h.b16 %v1651
    %v1979 = vunpack.c.l.b16 %v1652
    %v1980 = vunpack.c.h.b16 %v1652
    %v1981 = vunpack.c.l.b16 %v1653
    %v1982 = vunpack.c.h.b16 %v1653
    %v1983 = vunpack.c.l.b16 %v1654
    %v1984 = vunpack.c.h.b16 %v1654
    %v1985 = vunpack.c.l.b16 %v1655
    %v1986 = vunpack.c.h.b16 %v1655
    %v1987 = vunpack.c.l.b16 %v1656
    %v1988 = vunpack.c.h.b16 %v1656
    %v1989 = vunpack.c.l.b16 %v1657
    %v1990 = vunpack.c.h.b16 %v1657
    %v1991 = vunpack.c.l.b16 %v1658
    %v1992 = vunpack.c.h.b16 %v1658
    %v1993 = vunpack.c.l.b16 %v1659
    %v1994 = vunpack.c.h.b16 %v1659
    %v1995 = vunpack.c.l.b16 %v1660
    %v1996 = vunpack.c.h.b16 %v1660
    %v1997 = vunpack.c.l.b16 %v1661
    %v1998 = vunpack.c.h.b16 %v1661
    %v1999 = vunpack.c.l.b16 %v1662
    %v2000 = vunpack.c.h.b16 %v1662
    %v2001 = vunpack.c.l.b16 %v1663
    %v2002 = vunpack.c.h.b16 %v1663
    %v2003 = vunpack.c.l.b16 %v1664
    %v2004 = vunpack.c.h.b16 %v1664
    %v2005 = vunpack.c.l.b16 %v1665
    %v2006 = vunpack.c.h.b16 %v1665
    %v2007 = vunpack.c.l.b16 %v1666
    %v2008 = vunpack.c.h.b16 %v1666
    %v2009 = vunpack.c.l.b16 %v1667
    %v2010 = vunpack.c.h.b16 %v1667
    %v2011 = vunpack.c.l.b16 %v1668
    %v2012 = vunpack.c.h.b16 %v1668
    %v2013 = vunpack.c.l.b16 %v1669
    %v2014 = vunpack.c.h.b16 %v1669
    %v2015 = vunpack.c.l.b16 %v1670
    %v2016 = vunpack.c.h.b16 %v1670
    %v2017 = vunpack.c.l.b16 %v1671
    %v2018 = vunpack.c.h.b16 %v1671
    %v2019 = vunpack.c.l.b16 %v1672
    %v2020 = vunpack.c.h.b16 %v1672
    %v2021 = vunpack.c.l.b16 %v1673
    %v2022 = vunpack.c.h.b16 %v1673
    %v2023 = vunpack.c.l.b16 %v1674
    %v2024 = vunpack.c.h.b16 %v1674
    %v2025 = vunpack.c.l.b16 %v1675
    %v2026 = vunpack.c.h.b16 %v1675
    %v2027 = vunpack.c.l.b16 %v1676
    %v2028 = vunpack.c.h.b16 %v1676
    %v2029 = vunpack.c.l.b16 %v1677
    %v2030 = vunpack.c.h.b16 %v1677
    %v2031 = vunpack.c.l.b16 %v1678
    %v2032 = vunpack.c.h.b16 %v1678
    %v2033 = vunpack.c.l.b16 %v1679
    %v2034 = vunpack.c.h.b16 %v1679
    %v2035 = vunpack.c.l.b16 %v1680
    %v2036 = vunpack.c.h.b16 %v1680
    %v2037 = vunpack.c.l.b16 %v1681
    %v2038 = vunpack.c.h.b16 %v1681
    %v2039 = vunpack.c.l.b16 %v1682
    %v2040 = vunpack.c.h.b16 %v1682
    %v2041 = vunpack.c.l.b16 %v1683
    %v2042 = vunpack.c.h.b16 %v1683
    %v2043 = vunpack.c.l.b16 %v1684
    %v2044 = vunpack.c.h.b16 %v1684
    %v2045 = vunpack.c.l.b16 %v1685
    %v2046 = vunpack.c.h.b16 %v1685
    %v2047 = vunpack.c.l.b16 %v1686
    %v2048 = vunpack.c.h.b16 %v1686
    %v2049 = vunpack.c.l.b16 %v1687
    %v2050 = vunpack.c.h.b16 %v1687
    %v2051 = vunpack.c.l.b16 %v1688
    %v2052 = vunpack.c.h.b16 %v1688
    %v2053 = vunpack.c.l.b16 %v1689
    %v2054 = vunpack.c.h.b16 %v1689
    %v2055 = vunpack.c.l.b16 %v1690
    %v2056 = vunpack.c.h.b16 %v1690
    %v2057 = vunpack.c.l.b16 %v1691
    %v2058 = vunpack.c.h.b16 %v1691
    %v2059 = vunpack.c.l.b16 %v1692
    %v2060 = vunpack.c.h.b16 %v1692
    %v2061 = vunpack.c.l.b16 %v1693
    %v2062 = vunpack.c.h.b16 %v1693
    %v2063 = vunpack.c.l.b16 %v1694
    %v2064 = vunpack.c.h.b16 %v1694
    %v2065 = vunpack.c.l.b16 %v1695
    %v2066 = vunpack.c.h.b16 %v1695
    %v2067 = vunpack.c.l.b16 %v1696
    %v2068 = vunpack.c.h.b16 %v1696
    %v2069 = vunpack.c.l.b16 %v1697
    %v2070 = vunpack.c.h.b16 %v1697
    %v2071 = vunpack.c.l.b16 %v1698
    %v2072 = vunpack.c.h.b16 %v1698
    %v2073 = vunpack.c.l.b16 %v1699
    %v2074 = vunpack.c.h.b16 %v1699
    %v2075 = vunpack.c.l.b16 %v1700
    %v2076 = vunpack.c.h.b16 %v1700
    %v2077 = vunpack.c.l.b16 %v1701
    %v2078 = vunpack.c.h.b16 %v1701
    %v2079 = vunpack.c.l.b16 %v1702
    %v2080 = vunpack.c.h.b16 %v1702
    %v2081 = vunpack.c.l.b16 %v1703
    %v2082 = vunpack.c.h.b16 %v1703
    %v2083 = vunpack.c.l.b16 %v1704
    %v2084 = vunpack.c.h.b16 %v1704
    %v2085 = vunpack.c.l.b16 %v1705
    %v2086 = vunpack.c.h.b16 %v1705
    %v2087 = vunpack.c.l.b16 %v1706
    %v2088 = vunpack.c.h.b16 %v1706
    %v2089 = vunpack.c.l.b16 %v1707
    %v2090 = vunpack.c.h.b16 %v1707
    %v2091 = vunpack.c.l.b16 %v1708
    %v2092 = vunpack.c.h.b16 %v1708
    %v2093 = vunpack.c.l.b16 %v1709
    %v2094 = vunpack.c.h.b16 %v1709
    %v2095 = vunpack.c.l.b16 %v1710
    %v2096 = vunpack.c.h.b16 %v1710
    %v2097 = vunpack.c.l.b16 %v1711
    %v2098 = vunpack.c.h.b16 %v1711
    %v2099 = vunpack.c.l.b16 %v1712
    %v2100 = vunpack.c.h.b16 %v1712
    %v2101 = vunpack.c.l.b16 %v1713
    %v2102 = vunpack.c.h.b16 %v1713
    %v2103 = vunpack.c.l.b16 %v1714
    %v2104 = vunpack.c.h.b16 %v1714
    %v2105 = vunpack.c.l.b16 %v1715
    %v2106 = vunpack.c.h.b16 %v1715
    %v2107 = vunpack.c.l.b16 %v1716
    %v2108 = vunpack.c.h.b16 %v1716
    %v2109 = vunpack.c.l.b16 %v1717
    %v2110 = vunpack.c.h.b16 %v1717
    %v2111 = vunpack.c.l.b16 %v1718
    %v2112 = vunpack.c.h.b16 %v1718
    %v2113 = vunpack.c.l.b16 %v1719
    %v2114 = vunpack.c.h.b16 %v1719
    %v2115 = vunpack.c.l.b16 %v1720
    %v2116 = vunpack.c.h.b16 %v1720
    %v2117 = vunpack.c.l.b16 %v1721
    %v2118 = vunpack.c.h.b16 %v1721
    %v2119 = vunpack.c.l.b16 %v1722
    %v2120 = vunpack.c.h.b16 %v1722
    %v2121 = vunpack.c.l.b16 %v1723
    %v2122 = vunpack.c.h.b16 %v1723
    %v2123 = vunpack.c.l.b16 %v1724
    %v2124 = vunpack.c.h.b16 %v1724
    %v2125 = vunpack.c.l.b16 %v1725
    %v2126 = vunpack.c.h.b16 %v1725
    %v2127 = vunpack.c.l.b16 %v1726
    %v2128 = vunpack.c.h.b16 %v1726
    %v2129 = vunpack.c.l.b16 %v1727
    %v2130 = vunpack.c.h.b16 %v1727
    %v2131 = vunpack.c.l.b16 %v1728
    %v2132 = vunpack.c.h.b16 %v1728
    %v2133 = vunpack.c.l.b16 %v1729
    %v2134 = vunpack.c.h.b16 %v1729
    %v2135 = vunpack.c.l.b16 %v1730
    %v2136 = vunpack.c.h.b16 %v1730
    %v2137 = vpack.c.b16 %v1885, %v1881
    %v2138 = vpack.c.b16 %v1886, %v1882
    %v2139 = vpack.c.b16 %v1887, %v1883
    %v2140 = vpack.c.b16 %v1888, %v1884
    %v2141 = vpack.c.b16 %v1893, %v1889
    %v2142 = vpack.c.b16 %v1894, %v1890
    %v2143 = vpack.c.b16 %v1895, %v1891
    %v2144 = vpack.c.b16 %v1896, %v1892
    %v2145 = vpack.c.b16 %v1901, %v1897
    %v2146 = vpack.c.b16 %v1902, %v1898
    %v2147 = vpack.c.b16 %v1903, %v1899
    %v2148 = vpack.c.b16 %v1904, %v1900
    %v2149 = vpack.c.b16 %v1909, %v1905
    %v2150 = vpack.c.b16 %v1910, %v1906
    %v2151 = vpack.c.b16 %v1911, %v1907
    %v2152 = vpack.c.b16 %v1912, %v1908
    %v2153 = vpack.c.b16 %v1917, %v1913
    %v2154 = vpack.c.b16 %v1918, %v1914
    %v2155 = vpack.c.b16 %v1919, %v1915
    %v2156 = vpack.c.b16 %v1920, %v1916
    %v2157 = vpack.c.b16 %v1925, %v1921
    %v2158 = vpack.c.b16 %v1926, %v1922
    %v2159 = vpack.c.b16 %v1927, %v1923
    %v2160 = vpack.c.b16 %v1928, %v1924
    %v2161 = vpack.c.b16 %v1933, %v1929
    %v2162 = vpack.c.b16 %v1934, %v1930
    %v2163 = vpack.c.b16 %v1935, %v1931
    %v2164 = vpack.c.b16 %v1936, %v1932
    %v2165 = vpack.c.b16 %v1941, %v1937
    %v2166 = vpack.c.b16 %v1942, %v1938
    %v2167 = vpack.c.b16 %v1943, %v1939
    %v2168 = vpack.c.b16 %v1944, %v1940
    %v2169 = vpack.c.b16 %v1949, %v1945
    %v2170 = vpack.c.b16 %v1950, %v1946
    %v2171 = vpack.c.b16 %v1951, %v1947
    %v2172 = vpack.c.b16 %v1952, %v1948
    %v2173 = vpack.c.b16 %v1957, %v1953
    %v2174 = vpack.c.b16 %v1958, %v1954
    %v2175 = vpack.c.b16 %v1959, %v1955
    %v2176 = vpack.c.b16 %v1960, %v1956
    %v2177 = vpack.c.b16 %v1965, %v1961
    %v2178 = vpack.c.b16 %v1966, %v1962
    %v2179 = vpack.c.b16 %v1967, %v1963
    %v2180 = vpack.c.b16 %v1968, %v1964
    %v2181 = vpack.c.b16 %v1973, %v1969
    %v2182 = vpack.c.b16 %v1974, %v1970
    %v2183 = vpack.c.b16 %v1975, %v1971
    %v2184 = vpack.c.b16 %v1976, %v1972
    %v2185 = vpack.c.b16 %v1981, %v1977
    %v2186 = vpack.c.b16 %v1982, %v1978
    %v2187 = vpack.c.b16 %v1983, %v1979
    %v2188 = vpack.c.b16 %v1984, %v1980
    %v2189 = vpack.c.b16 %v1989, %v1985
    %v2190 = vpack.c.b16 %v1990, %v1986
    %v2191 = vpack.c.b16 %v1991, %v1987
    %v2192 = vpack.c.b16 %v1992, %v1988
    %v2193 = vpack.c.b16 %v1997, %v1993
    %v2194 = vpack.c.b16 %v1998, %v1994
    %v2195 = vpack.c.b16 %v1999, %v1995
    %v2196 = vpack.c.b16 %v2000, %v1996
    %v2197 = vpack.c.b16 %v2005, %v2001
    %v2198 = vpack.c.b16 %v2006, %v2002
    %v2199 = vpack.c.b16 %v2007, %v2003
    %v2200 = vpack.c.b16 %v2008, %v2004
    %v2201 = vpack.c.b16 %v2013, %v2009
    %v2202 = vpack.c.b16 %v2014, %v2010
    %v2203 = vpack.c.b16 %v2015, %v2011
    %v2204 = vpack.c.b16 %v2016, %v2012
    %v2205 = vpack.c.b16 %v2021, %v2017
    %v2206 = vpack.c.b16 %v2022, %v2018
    %v2207 = vpack.c.b16 %v2023, %v2019
    %v2208 = vpack.c.b16 %v2024, %v2020
    %v2209 = vpack.c.b16 %v2029, %v2025
    %v2210 = vpack.c.b16 %v2030, %v2026
    %v2211 = vpack.c.b16 %v2031, %v2027
    %v2212 = vpack.c.b16 %v2032, %v2028
    %v2213 = vpack.c.b16 %v2037, %v2033
    %v2214 = vpack.c.b16 %v2038, %v2034
    %v2215 = vpack.c.b16 %v2039, %v2035
    %v2216 = vpack.c.b16 %v2040, %v2036
    %v2217 = vpack.c.b16 %v2045, %v2041
    %v2218 = vpack.c.b16 %v2046, %v2042
    %v2219 = vpack.c.b16 %v2047, %v2043
    %v2220 = vpack.c.b16 %v2048, %v2044
    %v2221 = vpack.c.b16 %v2053, %v2049
    %v2222 = vpack.c.b16 %v2054, %v2050
    %v2223 = vpack.c.b16 %v2055, %v2051
    %v2224 = vpack.c.b16 %v2056, %v2052
    %v2225 = vpack.c.b16 %v2061, %v2057
    %v2226 = vpack.c.b16 %v2062, %v2058
    %v2227 = vpack.c.b16 %v2063, %v2059
    %v2228 = vpack.c.b16 %v2064, %v2060
    %v2229 = vpack.c.b16 %v2069, %v2065
    %v2230 = vpack.c.b16 %v2070, %v2066
    %v2231 = vpack.c.b16 %v2071, %v2067
    %v2232 = vpack.c.b16 %v2072, %v2068
    %v2233 = vpack.c.b16 %v2077, %v2073
    %v2234 = vpack.c.b16 %v2078, %v2074
    %v2235 = vpack.c.b16 %v2079, %v2075
    %v2236 = vpack.c.b16 %v2080, %v2076
    %v2237 = vpack.c.b16 %v2085, %v2081
    %v2238 = vpack.c.b16 %v2086, %v2082
    %v2239 = vpack.c.b16 %v2087, %v2083
    %v2240 = vpack.c.b16 %v2088, %v2084
    %v2241 = vpack.c.b16 %v2093, %v2089
    %v2242 = vpack.c.b16 %v2094, %v2090
    %v2243 = vpack.c.b16 %v2095, %v2091
    %v2244 = vpack.c.b16 %v2096, %v2092
    %v2245 = vpack.c.b16 %v2101, %v2097
    %v2246 = vpack.c.b16 %v2102, %v2098
    %v2247 = vpack.c.b16 %v2103, %v2099
    %v2248 = vpack.c.b16 %v2104, %v2100
    %v2249 = vpack.c.b16 %v2109, %v2105
    %v2250 = vpack.c.b16 %v2110, %v2106
    %v2251 = vpack.c.b16 %v2111, %v2107
    %v2252 = vpack.c.b16 %v2112, %v2108
    %v2253 = vpack.c.b16 %v2117, %v2113
    %v2254 = vpack.c.b16 %v2118, %v2114
    %v2255 = vpack.c.b16 %v2119, %v2115
    %v2256 = vpack.c.b16 %v2120, %v2116
    %v2257 = vpack.c.b16 %v2125, %v2121
    %v2258 = vpack.c.b16 %v2126, %v2122
    %v2259 = vpack.c.b16 %v2127, %v2123
    %v2260 = vpack.c.b16 %v2128, %v2124
    %v2261 = vpack.c.b16 %v2133, %v2129
    %v2262 = vpack.c.b16 %v2134, %v2130
    %v2263 = vpack.c.b16 %v2135, %v2131
    %v2264 = vpack.c.b16 %v2136, %v2132
    %2393 = vmatprep.subr.bf16.mxu0 %v2138
    %2394 = vmatpush1.bf16.msra.mxu0 %v2137
    %2395 = vmatprep.subr.bf16.mxu0 %v2142
    %2396 = vmatpush1.bf16.msra.mxu0 %v2141
    %2397 = vmatprep.subr.bf16.mxu0 %v2146
    %2398 = vmatpush1.bf16.msra.mxu0 %v2145
    %2399 = vmatprep.subr.bf16.mxu0 %v2150
    %2400 = vmatpush1.bf16.msra.mxu0 %v2149
    %2401 = vmatprep.subr.bf16.mxu0 %v2154
    %2402 = vmatpush1.bf16.msra.mxu0 %v2153
    %2403 = vmatprep.subr.bf16.mxu0 %v2158
    %2404 = vmatpush1.bf16.msra.mxu0 %v2157
    %2405 = vmatprep.subr.bf16.mxu0 %v2162
    %2406 = vmatpush1.bf16.msra.mxu0 %v2161
    %2407 = vmatprep.subr.bf16.mxu0 %v2166
    %2408 = vmatpush1.bf16.msra.mxu0 %v2165
    %2409 = vmatprep.subr.bf16.mxu0 %v2170
    %2410 = vmatpush1.bf16.msra.mxu0 %v2169
    %2411 = vmatprep.subr.bf16.mxu0 %v2174
    %2412 = vmatpush1.bf16.msra.mxu0 %v2173
    %2413 = vmatprep.subr.bf16.mxu0 %v2178
    %2414 = vmatpush1.bf16.msra.mxu0 %v2177
    %2415 = vmatprep.subr.bf16.mxu0 %v2182
    %2416 = vmatpush1.bf16.msra.mxu0 %v2181
    %2417 = vmatprep.subr.bf16.mxu0 %v2186
    %2418 = vmatpush1.bf16.msra.mxu0 %v2185
    %2419 = vmatprep.subr.bf16.mxu0 %v2190
    %2420 = vmatpush1.bf16.msra.mxu0 %v2189
    %2421 = vmatprep.subr.bf16.mxu0 %v2194
    %2422 = vmatpush1.bf16.msra.mxu0 %v2193
    %2423 = vmatprep.subr.bf16.mxu0 %v2198
    %2424 = vmatpush1.bf16.msra.mxu0 %v2197
    %2425 = vmatprep.mubr.bf16.mxu0 %v1600
    %2426 = vmatmul.mubr.bf16.gmra.mrb[0].mxu0 %v1599
    %v2427 = vpop.f32.mrb[0].mxu0
    %v2428 = vadd.f32 %v1736, %v2427
    %v2429 = vpop.f32.mrb[0].mxu0
    %v2430 = vadd.f32 %v1740, %v2429
    %v2431 = vpop.f32.mrb[0].mxu0
    %v2432 = vpop.f32.mrb[0].mxu0
    %2433 = vdwg.mxu0
    %2434 = vmatprep.subr.bf16.mxu0 %v2202
    %2435 = vmatpush1.bf16.msra.mxu0 %v2201
    %2436 = vmatprep.subr.bf16.mxu0 %v2206
    %2437 = vmatpush1.bf16.msra.mxu0 %v2205
    %2438 = vmatprep.subr.bf16.mxu0 %v2210
    %2439 = vmatpush1.bf16.msra.mxu0 %v2209
    %2440 = vmatprep.subr.bf16.mxu0 %v2214
    %2441 = vmatpush1.bf16.msra.mxu0 %v2213
    %2442 = vmatprep.subr.bf16.mxu0 %v2218
    %2443 = vmatpush1.bf16.msra.mxu0 %v2217
    %2444 = vmatprep.subr.bf16.mxu0 %v2222
    %2445 = vmatpush1.bf16.msra.mxu0 %v2221
    %2446 = vmatprep.subr.bf16.mxu0 %v2226
    %2447 = vmatpush1.bf16.msra.mxu0 %v2225
    %2448 = vmatprep.subr.bf16.mxu0 %v2230
    %2449 = vmatpush1.bf16.msra.mxu0 %v2229
    %2450 = vmatprep.subr.bf16.mxu0 %v2234
    %2451 = vmatpush1.bf16.msra.mxu0 %v2233
    %2452 = vmatprep.subr.bf16.mxu0 %v2238
    %2453 = vmatpush1.bf16.msra.mxu0 %v2237
    %2454 = vmatprep.subr.bf16.mxu0 %v2242
    %2455 = vmatpush1.bf16.msra.mxu0 %v2241
    %2456 = vmatprep.subr.bf16.mxu0 %v2246
    %2457 = vmatpush1.bf16.msra.mxu0 %v2245
    %2458 = vmatprep.subr.bf16.mxu0 %v2250
    %2459 = vmatpush1.bf16.msra.mxu0 %v2249
    %2460 = vmatprep.subr.bf16.mxu0 %v2254
    %2461 = vmatpush1.bf16.msra.mxu0 %v2253
    %2462 = vmatprep.subr.bf16.mxu0 %v2258
    %2463 = vmatpush1.bf16.msra.mxu0 %v2257
    %2464 = vmatprep.subr.bf16.mxu0 %v2262
    %2465 = vmatpush1.bf16.msra.mxu0 %v2261
    %2466 = vmatprep.mubr.bf16.mxu0 %v1602
    %2467 = vmatmul.mubr.bf16.gmra.mrb[0].mxu0 %v1601
    %v2468 = vpop.f32.mrb[0].mxu0
    %v2469 = vadd.f32 %v2428, %v2468
    %v2470 = vpop.f32.mrb[0].mxu0
    %v2471 = vadd.f32 %v2430, %v2470
    %v2472 = vpop.f32.mrb[0].mxu0
    %v2473 = vpop.f32.mrb[0].mxu0
    %2474 = vdwg.mxu0
    %2475 = vmatprep.subr.bf16.mxu0 %v2140
    %2476 = vmatpush1.bf16.msra.mxu0 %v2139
    %2477 = vmatprep.subr.bf16.mxu0 %v2144
    %2478 = vmatpush1.bf16.msra.mxu0 %v2143
    %2479 = vmatprep.subr.bf16.mxu0 %v2148
    %2480 = vmatpush1.bf16.msra.mxu0 %v2147
    %2481 = vmatprep.subr.bf16.mxu0 %v2152
    %2482 = vmatpush1.bf16.msra.mxu0 %v2151
    %2483 = vmatprep.subr.bf16.mxu0 %v2156
    %2484 = vmatpush1.bf16.msra.mxu0 %v2155
    %2485 = vmatprep.subr.bf16.mxu0 %v2160
    %2486 = vmatpush1.bf16.msra.mxu0 %v2159
    %2487 = vmatprep.subr.bf16.mxu0 %v2164
    %2488 = vmatpush1.bf16.msra.mxu0 %v2163
    %2489 = vmatprep.subr.bf16.mxu0 %v2168
    %2490 = vmatpush1.bf16.msra.mxu0 %v2167
    %2491 = vmatprep.subr.bf16.mxu0 %v2172
    %2492 = vmatpush1.bf16.msra.mxu0 %v2171
    %2493 = vmatprep.subr.bf16.mxu0 %v2176
    %2494 = vmatpush1.bf16.msra.mxu0 %v2175
    %2495 = vmatprep.subr.bf16.mxu0 %v2180
    %2496 = vmatpush1.bf16.msra.mxu0 %v2179
    %2497 = vmatprep.subr.bf16.mxu0 %v2184
    %2498 = vmatpush1.bf16.msra.mxu0 %v2183
    %2499 = vmatprep.subr.bf16.mxu0 %v2188
    %2500 = vmatpush1.bf16.msra.mxu0 %v2187
    %2501 = vmatprep.subr.bf16.mxu0 %v2192
    %2502 = vmatpush1.bf16.msra.mxu0 %v2191
    %2503 = vmatprep.subr.bf16.mxu0 %v2196
    %2504 = vmatpush1.bf16.msra.mxu0 %v2195
    %2505 = vmatprep.subr.bf16.mxu0 %v2200
    %2506 = vmatpush1.bf16.msra.mxu0 %v2199
    %2507 = vmatprep.mubr.bf16.mxu0 %v1600
    %2508 = vmatmul.mubr.bf16.gmra.mrb[0].mxu0 %v1599
    %v2509 = vpop.f32.mrb[0].mxu0
    %v2510 = vadd.f32 %v1744, %v2509
    %v2511 = vpop.f32.mrb[0].mxu0
    %v2512 = vadd.f32 %v1748, %v2511
    %v2513 = vpop.f32.mrb[0].mxu0
    %v2514 = vpop.f32.mrb[0].mxu0
    %2515 = vdwg.mxu0
    %2516 = vmatprep.subr.bf16.mxu0 %v2204
    %2517 = vmatpush1.bf16.msra.mxu0 %v2203
    %2518 = vmatprep.subr.bf16.mxu0 %v2208
    %2519 = vmatpush1.bf16.msra.mxu0 %v2207
    %2520 = vmatprep.subr.bf16.mxu0 %v2212
    %2521 = vmatpush1.bf16.msra.mxu0 %v2211
    %2522 = vmatprep.subr.bf16.mxu0 %v2216
    %2523 = vmatpush1.bf16.msra.mxu0 %v2215
    %2524 = vmatprep.subr.bf16.mxu0 %v2220
    %2525 = vmatpush1.bf16.msra.mxu0 %v2219
    %2526 = vmatprep.subr.bf16.mxu0 %v2224
    %2527 = vmatpush1.bf16.msra.mxu0 %v2223
    %2528 = vmatprep.subr.bf16.mxu0 %v2228
    %2529 = vmatpush1.bf16.msra.mxu0 %v2227
    %2530 = vmatprep.subr.bf16.mxu0 %v2232
    %2531 = vmatpush1.bf16.msra.mxu0 %v2231
    %2532 = vmatprep.subr.bf16.mxu0 %v2236
    %2533 = vmatpush1.bf16.msra.mxu0 %v2235
    %2534 = vmatprep.subr.bf16.mxu0 %v2240
    %2535 = vmatpush1.bf16.msra.mxu0 %v2239
    %2536 = vmatprep.subr.bf16.mxu0 %v2244
    %2537 = vmatpush1.bf16.msra.mxu0 %v2243
    %2538 = vmatprep.subr.bf16.mxu0 %v2248
    %2539 = vmatpush1.bf16.msra.mxu0 %v2247
    %2540 = vmatprep.subr.bf16.mxu0 %v2252
    %2541 = vmatpush1.bf16.msra.mxu0 %v2251
    %2542 = vmatprep.subr.bf16.mxu0 %v2256
    %2543 = vmatpush1.bf16.msra.mxu0 %v2255
    %2544 = vmatprep.subr.bf16.mxu0 %v2260
    %2545 = vmatpush1.bf16.msra.mxu0 %v2259
    %2546 = vmatprep.subr.bf16.mxu0 %v2264
    %2547 = vmatpush1.bf16.msra.mxu0 %v2263
    %2548 = vmatprep.mubr.bf16.mxu0 %v1602
    %2549 = vmatmul.mubr.bf16.gmra.mrb[0].mxu0 %v1601
    %v2550 = vpop.f32.mrb[0].mxu0
    %v2551 = vadd.f32 %v2510, %v2550
    %v2552 = vpop.f32.mrb[0].mxu0
    %v2553 = vadd.f32 %v2512, %v2552
    %v2554 = vpop.f32.mrb[0].mxu0
    %v2555 = vpop.f32.mrb[0].mxu0
    %2556 = vdwg.mxu0
    %v2557 = vmax.f32 %v2469, 0.0
    %v2558 = vmax.f32 %v2471, 0.0
    %v2559 = vmax.f32 %v2551, 0.0
    %v2560 = vmax.f32 %v2553, 0.0
    %v2561 = vld [vmem:[%s6] sm:$0xff]
    %v2562 = vld [vmem:[%s6 + $0x8] sm:$0xff]
    %v2563 = vld [vmem:[%s6 + $0x10] sm:$0xff]
    %v2564 = vld [vmem:[%s6 + $0x18] sm:$0xff]
    %v2565 = vld [vmem:[%s6 + $0x20] sm:$0xff]
    %v2566 = vld [vmem:[%s6 + $0x28] sm:$0xff]
    %v2567 = vld [vmem:[%s6 + $0x30] sm:$0xff]
    %v2568 = vld [vmem:[%s6 + $0x38] sm:$0xff]
    %v2569 = vld [vmem:[%s6 + $0x40] sm:$0xff]
    %v2570 = vld [vmem:[%s6 + $0x48] sm:$0xff]
    %v2571 = vld [vmem:[%s6 + $0x50] sm:$0xff]
    %v2572 = vld [vmem:[%s6 + $0x58] sm:$0xff]
    %v2573 = vld [vmem:[%s6 + $0x60] sm:$0xff]
    %v2574 = vld [vmem:[%s6 + $0x68] sm:$0xff]
    %v2575 = vld [vmem:[%s6 + $0x70] sm:$0xff]
    %v2576 = vld [vmem:[%s6 + $0x78] sm:$0xff]
    %v2577 = vld [vmem:[%s6 + $0x80] sm:$0xff]
    %v2578 = vld [vmem:[%s6 + $0x88] sm:$0xff]
    %v2579 = vld [vmem:[%s6 + $0x90] sm:$0xff]
    %v2580 = vld [vmem:[%s6 + $0x98] sm:$0xff]
    %v2581 = vld [vmem:[%s6 + $0xa0] sm:$0xff]
    %v2582 = vld [vmem:[%s6 + $0xa8] sm:$0xff]
    %v2583 = vld [vmem:[%s6 + $0xb0] sm:$0xff]
    %v2584 = vld [vmem:[%s6 + $0xb8] sm:$0xff]
    %v2585 = vld [vmem:[%s6 + $0xc0] sm:$0xff]
    %v2586 = vld [vmem:[%s6 + $0xc8] sm:$0xff]
    %v2587 = vld [vmem:[%s6 + $0xd0] sm:$0xff]
    %v2588 = vld [vmem:[%s6 + $0xd8] sm:$0xff]
    %v2589 = vld [vmem:[%s6 + $0xe0] sm:$0xff]
    %v2590 = vld [vmem:[%s6 + $0xe8] sm:$0xff]
    %v2591 = vld [vmem:[%s6 + $0xf0] sm:$0xff]
    %v2592 = vld [vmem:[%s6 + $0xf8] sm:$0xff]
    %v2593 = vld [vmem:[%s6 + $0x100] sm:$0xff]
    %v2594 = vld [vmem:[%s6 + $0x108] sm:$0xff]
    %v2595 = vld [vmem:[%s6 + $0x110] sm:$0xff]
    %v2596 = vld [vmem:[%s6 + $0x118] sm:$0xff]
    %v2597 = vld [vmem:[%s6 + $0x120] sm:$0xff]
    %v2598 = vld [vmem:[%s6 + $0x128] sm:$0xff]
    %v2599 = vld [vmem:[%s6 + $0x130] sm:$0xff]
    %v2600 = vld [vmem:[%s6 + $0x138] sm:$0xff]
    %v2601 = vld [vmem:[%s6 + $0x140] sm:$0xff]
    %v2602 = vld [vmem:[%s6 + $0x148] sm:$0xff]
    %v2603 = vld [vmem:[%s6 + $0x150] sm:$0xff]
    %v2604 = vld [vmem:[%s6 + $0x158] sm:$0xff]
    %v2605 = vld [vmem:[%s6 + $0x160] sm:$0xff]
    %v2606 = vld [vmem:[%s6 + $0x168] sm:$0xff]
    %v2607 = vld [vmem:[%s6 + $0x170] sm:$0xff]
    %v2608 = vld [vmem:[%s6 + $0x178] sm:$0xff]
    %v2609 = vld [vmem:[%s6 + $0x180] sm:$0xff]
    %v2610 = vld [vmem:[%s6 + $0x188] sm:$0xff]
    %v2611 = vld [vmem:[%s6 + $0x190] sm:$0xff]
    %v2612 = vld [vmem:[%s6 + $0x198] sm:$0xff]
    %v2613 = vld [vmem:[%s6 + $0x1a0] sm:$0xff]
    %v2614 = vld [vmem:[%s6 + $0x1a8] sm:$0xff]
    %v2615 = vld [vmem:[%s6 + $0x1b0] sm:$0xff]
    %v2616 = vld [vmem:[%s6 + $0x1b8] sm:$0xff]
    %v2617 = vld [vmem:[%s6 + $0x1c0] sm:$0xff]
    %v2618 = vld [vmem:[%s6 + $0x1c8] sm:$0xff]
    %v2619 = vld [vmem:[%s6 + $0x1d0] sm:$0xff]
    %v2620 = vld [vmem:[%s6 + $0x1d8] sm:$0xff]
    %v2621 = vld [vmem:[%s6 + $0x1e0] sm:$0xff]
    %v2622 = vld [vmem:[%s6 + $0x1e8] sm:$0xff]
    %v2623 = vld [vmem:[%s6 + $0x1f0] sm:$0xff]
    %v2624 = vld [vmem:[%s6 + $0x1f8] sm:$0xff]
    %v2625 = vld [vmem:[%s7] sm:$0x1]
    %v2627 = vlaneseq
    %v2628 = vshrl.u32 %v2627, 7
    %v2629 = vsub.s32 0, %v2628
    %v2630 = vrot.slane %v2625, %v2629
    %2632 = vmatprep.subr.mxu0 0.0
    %2633 = vmatpush1.msra.mxu0 %v2561
    %2634 = vmatprep.subr.mxu0 0.0
    %2635 = vmatpush1.msra.mxu0 %v2562
    %2636 = vmatprep.subr.mxu0 0.0
    %2637 = vmatpush1.msra.mxu0 %v2563
    %2638 = vmatprep.subr.mxu0 0.0
    %2639 = vmatpush1.msra.mxu0 %v2564
    %2640 = vmatprep.subr.mxu0 0.0
    %2641 = vmatpush1.msra.mxu0 %v2565
    %2642 = vmatprep.subr.mxu0 0.0
    %2643 = vmatpush1.msra.mxu0 %v2566
    %2644 = vmatprep.subr.mxu0 0.0
    %2645 = vmatpush1.msra.mxu0 %v2567
    %2646 = vmatprep.subr.mxu0 0.0
    %2647 = vmatpush1.msra.mxu0 %v2568
    %2648 = vmatprep.subr.mxu0 0.0
    %2649 = vmatpush1.msra.mxu0 %v2569
    %2650 = vmatprep.subr.mxu0 0.0
    %2651 = vmatpush1.msra.mxu0 %v2570
    %2652 = vmatprep.subr.mxu0 0.0
    %2653 = vmatpush1.msra.mxu0 %v2571
    %2654 = vmatprep.subr.mxu0 0.0
    %2655 = vmatpush1.msra.mxu0 %v2572
    %2656 = vmatprep.subr.mxu0 0.0
    %2657 = vmatpush1.msra.mxu0 %v2573
    %2658 = vmatprep.subr.mxu0 0.0
    %2659 = vmatpush1.msra.mxu0 %v2574
    %2660 = vmatprep.subr.mxu0 0.0
    %2661 = vmatpush1.msra.mxu0 %v2575
    %2662 = vmatprep.subr.mxu0 0.0
    %2663 = vmatpush1.msra.mxu0 %v2576
    %2664 = vmatprep.subr.mxu0 0.0
    %2665 = vmatpush1.msra.mxu0 %v2577
    %2666 = vmatprep.subr.mxu0 0.0
    %2667 = vmatpush1.msra.mxu0 %v2578
    %2668 = vmatprep.subr.mxu0 0.0
    %2669 = vmatpush1.msra.mxu0 %v2579
    %2670 = vmatprep.subr.mxu0 0.0
    %2671 = vmatpush1.msra.mxu0 %v2580
    %2672 = vmatprep.subr.mxu0 0.0
    %2673 = vmatpush1.msra.mxu0 %v2581
    %2674 = vmatprep.subr.mxu0 0.0
    %2675 = vmatpush1.msra.mxu0 %v2582
    %2676 = vmatprep.subr.mxu0 0.0
    %2677 = vmatpush1.msra.mxu0 %v2583
    %2678 = vmatprep.subr.mxu0 0.0
    %2679 = vmatpush1.msra.mxu0 %v2584
    %2680 = vmatprep.subr.mxu0 0.0
    %2681 = vmatpush1.msra.mxu0 %v2585
    %2682 = vmatprep.subr.mxu0 0.0
    %2683 = vmatpush1.msra.mxu0 %v2586
    %2684 = vmatprep.subr.mxu0 0.0
    %2685 = vmatpush1.msra.mxu0 %v2587
    %2686 = vmatprep.subr.mxu0 0.0
    %2687 = vmatpush1.msra.mxu0 %v2588
    %2688 = vmatprep.subr.mxu0 0.0
    %2689 = vmatpush1.msra.mxu0 %v2589
    %2690 = vmatprep.subr.mxu0 0.0
    %2691 = vmatpush1.msra.mxu0 %v2590
    %2692 = vmatprep.subr.mxu0 0.0
    %2693 = vmatpush1.msra.mxu0 %v2591
    %2694 = vmatprep.subr.mxu0 0.0
    %2695 = vmatpush1.msra.mxu0 %v2592
    %2696 = vmatprep.mubr.f32.mxu0 %v2558
    %2697 = vmatmul.mubr.f32.gmra.mrb[0].mxu0 %v2557
    %v2698 = vpop.f32.mrb[0].mxu0
    %v2699 = vadd.f32 %v2630, %v2698
    %v2700 = vpop.f32.mrb[0].mxu0
    %2701 = vdwg.mxu0
    %2702 = vmatprep.subr.mxu0 0.0
    %2703 = vmatpush1.msra.mxu0 %v2593
    %2704 = vmatprep.subr.mxu0 0.0
    %2705 = vmatpush1.msra.mxu0 %v2594
    %2706 = vmatprep.subr.mxu0 0.0
    %2707 = vmatpush1.msra.mxu0 %v2595
    %2708 = vmatprep.subr.mxu0 0.0
    %2709 = vmatpush1.msra.mxu0 %v2596
    %2710 = vmatprep.subr.mxu0 0.0
    %2711 = vmatpush1.msra.mxu0 %v2597
    %2712 = vmatprep.subr.mxu0 0.0
    %2713 = vmatpush1.msra.mxu0 %v2598
    %2714 = vmatprep.subr.mxu0 0.0
    %2715 = vmatpush1.msra.mxu0 %v2599
    %2716 = vmatprep.subr.mxu0 0.0
    %2717 = vmatpush1.msra.mxu0 %v2600
    %2718 = vmatprep.subr.mxu0 0.0
    %2719 = vmatpush1.msra.mxu0 %v2601
    %2720 = vmatprep.subr.mxu0 0.0
    %2721 = vmatpush1.msra.mxu0 %v2602
    %2722 = vmatprep.subr.mxu0 0.0
    %2723 = vmatpush1.msra.mxu0 %v2603
    %2724 = vmatprep.subr.mxu0 0.0
    %2725 = vmatpush1.msra.mxu0 %v2604
    %2726 = vmatprep.subr.mxu0 0.0
    %2727 = vmatpush1.msra.mxu0 %v2605
    %2728 = vmatprep.subr.mxu0 0.0
    %2729 = vmatpush1.msra.mxu0 %v2606
    %2730 = vmatprep.subr.mxu0 0.0
    %2731 = vmatpush1.msra.mxu0 %v2607
    %2732 = vmatprep.subr.mxu0 0.0
    %2733 = vmatpush1.msra.mxu0 %v2608
    %2734 = vmatprep.subr.mxu0 0.0
    %2735 = vmatpush1.msra.mxu0 %v2609
    %2736 = vmatprep.subr.mxu0 0.0
    %2737 = vmatpush1.msra.mxu0 %v2610
    %2738 = vmatprep.subr.mxu0 0.0
    %2739 = vmatpush1.msra.mxu0 %v2611
    %2740 = vmatprep.subr.mxu0 0.0
    %2741 = vmatpush1.msra.mxu0 %v2612
    %2742 = vmatprep.subr.mxu0 0.0
    %2743 = vmatpush1.msra.mxu0 %v2613
    %2744 = vmatprep.subr.mxu0 0.0
    %2745 = vmatpush1.msra.mxu0 %v2614
    %2746 = vmatprep.subr.mxu0 0.0
    %2747 = vmatpush1.msra.mxu0 %v2615
    %2748 = vmatprep.subr.mxu0 0.0
    %2749 = vmatpush1.msra.mxu0 %v2616
    %2750 = vmatprep.subr.mxu0 0.0
    %2751 = vmatpush1.msra.mxu0 %v2617
    %2752 = vmatprep.subr.mxu0 0.0
    %2753 = vmatpush1.msra.mxu0 %v2618
    %2754 = vmatprep.subr.mxu0 0.0
    %2755 = vmatpush1.msra.mxu0 %v2619
    %2756 = vmatprep.subr.mxu0 0.0
    %2757 = vmatpush1.msra.mxu0 %v2620
    %2758 = vmatprep.subr.mxu0 0.0
    %2759 = vmatpush1.msra.mxu0 %v2621
    %2760 = vmatprep.subr.mxu0 0.0
    %2761 = vmatpush1.msra.mxu0 %v2622
    %2762 = vmatprep.subr.mxu0 0.0
    %2763 = vmatpush1.msra.mxu0 %v2623
    %2764 = vmatprep.subr.mxu0 0.0
    %2765 = vmatpush1.msra.mxu0 %v2624
    %2766 = vmatprep.mubr.f32.mxu0 %v2560
    %2767 = vmatmul.mubr.f32.gmra.mrb[0].mxu0 %v2559
    %v2768 = vpop.f32.mrb[0].mxu0
    %v2769 = vadd.f32 %v2699, %v2768
    %v2770 = vpop.f32.mrb[0].mxu0
    %2771 = vdwg.mxu0
    %v2772 = vmul.f32 %v2769, 0.5
    %v2773 = vmul.f32 %v2772, 1.442695
    %v2774 = vpow.pop %v2773
    %v2775 = vld [vmem:[%s1] sm:$0xff]
    %2777 = vrot.lane.b32.xlu0 %v2775, 32
    %v2778 = vpop.permute.xlu0 %2777
    %v2780 = vmul.f32 %v2774, %v2778
    %2782 = vrot.lane.b32.xlu0 %v2769, 32
    %v2783 = vpop.permute.xlu0 %2782
    %v2785 = vadd.f32 %v2780, %v2783
    %v2786 = vpack.c.bf16 %v2785, %v2785
    %v2787 = vld [vmem:[%s8] sm:$0xff]
    %v2788 = vld [vmem:[%s8 + $0x8] sm:$0xff]
    %v2789 = vld [vmem:[%s8 + $0x10] sm:$0xff]
    %v2790 = vld [vmem:[%s8 + $0x18] sm:$0xff]
    %v2791 = vld [vmem:[%s8 + $0x20] sm:$0xff]
    %v2792 = vld [vmem:[%s8 + $0x28] sm:$0xff]
    %v2793 = vld [vmem:[%s8 + $0x30] sm:$0xff]
    %v2794 = vld [vmem:[%s8 + $0x38] sm:$0xff]
    %v2795 = vld [vmem:[%s9] sm:$0xf]
    %v2797 = vlaneseq
    %v2798 = vshrl.u32 %v2797, 7
    %v2799 = vsub.s32 0, %v2798
    %v2800 = vrot.slane %v2795, %v2799
    %v2801 = vlaneseq
    %v2802 = vshrl.u32 %v2801, 7
    %v2803 = vsub.s32 1, %v2802
    %v2804 = vrot.slane %v2795, %v2803
    %v2805 = vlaneseq
    %v2806 = vshrl.u32 %v2805, 7
    %v2807 = vsub.s32 2, %v2806
    %v2808 = vrot.slane %v2795, %v2807
    %v2809 = vlaneseq
    %v2810 = vshrl.u32 %v2809, 7
    %v2811 = vsub.s32 3, %v2810
    %v2812 = vrot.slane %v2795, %v2811
    %2818 = vrot.lane.b32.xlu0 %v2786, 96
    %v2819 = vpop.permute.xlu0 %2818
    %v2828 = vunpack.c.l.b16 %v2787
    %v2829 = vunpack.c.h.b16 %v2787
    %v2830 = vunpack.c.l.b16 %v2788
    %v2831 = vunpack.c.h.b16 %v2788
    %v2832 = vunpack.c.l.b16 %v2789
    %v2833 = vunpack.c.h.b16 %v2789
    %v2834 = vunpack.c.l.b16 %v2790
    %v2835 = vunpack.c.h.b16 %v2790
    %v2836 = vunpack.c.l.b16 %v2791
    %v2837 = vunpack.c.h.b16 %v2791
    %v2838 = vunpack.c.l.b16 %v2792
    %v2839 = vunpack.c.h.b16 %v2792
    %v2840 = vunpack.c.l.b16 %v2793
    %v2841 = vunpack.c.h.b16 %v2793
    %v2842 = vunpack.c.l.b16 %v2794
    %v2843 = vunpack.c.h.b16 %v2794
    %v2844 = vpack.c.b16 %v2832, %v2828
    %v2845 = vpack.c.b16 %v2833, %v2829
    %v2846 = vpack.c.b16 %v2834, %v2830
    %v2847 = vpack.c.b16 %v2835, %v2831
    %v2848 = vpack.c.b16 %v2840, %v2836
    %v2849 = vpack.c.b16 %v2841, %v2837
    %v2850 = vpack.c.b16 %v2842, %v2838
    %v2851 = vpack.c.b16 %v2843, %v2839
    %vm2860 = vcmask 261120
    %v2862 = vsel %vm2860, %v2819, 0
    %2864 = vmatprep.subr.bf16.mxu0 %v2845
    %2865 = vmatpush1.bf16.msra.mxu0 %v2844
    %2866 = vmatprep.subr.bf16.mxu0 %v2849
    %2867 = vmatpush1.bf16.msra.mxu0 %v2848
    %2868 = vmatprep.subr.bf16.mxu0 0
    %2869 = vmatpush1.bf16.msra.mxu0 0
    %2870 = vmatprep.subr.bf16.mxu0 0
    %2871 = vmatpush1.bf16.msra.mxu0 0
    %2872 = vmatprep.subr.bf16.mxu0 0
    %2873 = vmatpush1.bf16.msra.mxu0 0
    %2874 = vmatprep.subr.bf16.mxu0 0
    %2875 = vmatpush1.bf16.msra.mxu0 0
    %2876 = vmatprep.subr.bf16.mxu0 0
    %2877 = vmatpush1.bf16.msra.mxu0 0
    %2878 = vmatprep.subr.bf16.mxu0 0
    %2879 = vmatpush1.bf16.msra.mxu0 0
    %2880 = vmatprep.subr.bf16.mxu0 0
    %2881 = vmatpush1.bf16.msra.mxu0 0
    %2882 = vmatprep.subr.bf16.mxu0 0
    %2883 = vmatpush1.bf16.msra.mxu0 0
    %2884 = vmatprep.subr.bf16.mxu0 0
    %2885 = vmatpush1.bf16.msra.mxu0 0
    %2886 = vmatprep.subr.bf16.mxu0 0
    %2887 = vmatpush1.bf16.msra.mxu0 0
    %2888 = vmatprep.subr.bf16.mxu0 0
    %2889 = vmatpush1.bf16.msra.mxu0 0
    %2890 = vmatprep.subr.bf16.mxu0 0
    %2891 = vmatpush1.bf16.msra.mxu0 0
    %2892 = vmatprep.subr.bf16.mxu0 0
    %2893 = vmatpush1.bf16.msra.mxu0 0
    %2894 = vmatprep.subr.bf16.mxu0 0
    %2895 = vmatpush1.bf16.msra.mxu0 0
    %2896 = vmatprep.mubr.bf16.mxu0 0
    %2897 = vmatmul.mubr.bf16.gmra.mrb[0].mxu0 %v2862
    %v2898 = vpop.f32.mrb[0].mxu0
    %v2899 = vadd.f32 %v2800, %v2898
    %v2900 = vpop.f32.mrb[0].mxu0
    %v2901 = vadd.f32 %v2804, %v2900
    %v2902 = vpop.f32.mrb[0].mxu0
    %v2903 = vpop.f32.mrb[0].mxu0
    %2904 = vdwg.mxu0
    %2905 = vmatprep.subr.bf16.mxu0 %v2847
    %2906 = vmatpush1.bf16.msra.mxu0 %v2846
    %2907 = vmatprep.subr.bf16.mxu0 %v2851
    %2908 = vmatpush1.bf16.msra.mxu0 %v2850
    %2909 = vmatprep.subr.bf16.mxu0 0
    %2910 = vmatpush1.bf16.msra.mxu0 0
    %2911 = vmatprep.subr.bf16.mxu0 0
    %2912 = vmatpush1.bf16.msra.mxu0 0
    %2913 = vmatprep.subr.bf16.mxu0 0
    %2914 = vmatpush1.bf16.msra.mxu0 0
    %2915 = vmatprep.subr.bf16.mxu0 0
    %2916 = vmatpush1.bf16.msra.mxu0 0
    %2917 = vmatprep.subr.bf16.mxu0 0
    %2918 = vmatpush1.bf16.msra.mxu0 0
    %2919 = vmatprep.subr.bf16.mxu0 0
    %2920 = vmatpush1.bf16.msra.mxu0 0
    %2921 = vmatprep.subr.bf16.mxu0 0
    %2922 = vmatpush1.bf16.msra.mxu0 0
    %2923 = vmatprep.subr.bf16.mxu0 0
    %2924 = vmatpush1.bf16.msra.mxu0 0
    %2925 = vmatprep.subr.bf16.mxu0 0
    %2926 = vmatpush1.bf16.msra.mxu0 0
    %2927 = vmatprep.subr.bf16.mxu0 0
    %2928 = vmatpush1.bf16.msra.mxu0 0
    %2929 = vmatprep.subr.bf16.mxu0 0
    %2930 = vmatpush1.bf16.msra.mxu0 0
    %2931 = vmatprep.subr.bf16.mxu0 0
    %2932 = vmatpush1.bf16.msra.mxu0 0
    %2933 = vmatprep.subr.bf16.mxu0 0
    %2934 = vmatpush1.bf16.msra.mxu0 0
    %2935 = vmatprep.subr.bf16.mxu0 0
    %2936 = vmatpush1.bf16.msra.mxu0 0
    %2937 = vmatprep.mubr.bf16.mxu0 0
    %2938 = vmatmul.mubr.bf16.gmra.mrb[0].mxu0 %v2862
    %v2939 = vpop.f32.mrb[0].mxu0
    %v2940 = vadd.f32 %v2808, %v2939
    %v2941 = vpop.f32.mrb[0].mxu0
    %v2942 = vadd.f32 %v2812, %v2941
    %v2943 = vpop.f32.mrb[0].mxu0
    %v2944 = vpop.f32.mrb[0].mxu0
    %2945 = vdwg.mxu0
    %v2946 = vmax.f32 %v2899, 0.0
    %v2947 = vmax.f32 %v2901, 0.0
    %v2948 = vmax.f32 %v2940, 0.0
    %v2949 = vmax.f32 %v2942, 0.0
    %v2950 = vpack.c.bf16 %v2946, %v2946
    %v2951 = vpack.c.bf16 %v2947, %v2947
    %v2952 = vpack.c.bf16 %v2948, %v2948
    %v2953 = vpack.c.bf16 %v2949, %v2949
    %v2954 = vld [vmem:[%s10] sm:$0xff]
    %v2955 = vld [vmem:[%s10 + $0x8] sm:$0xff]
    %v2956 = vld [vmem:[%s10 + $0x10] sm:$0xff]
    %v2957 = vld [vmem:[%s10 + $0x18] sm:$0xff]
    %v2958 = vld [vmem:[%s10 + $0x20] sm:$0xff]
    %v2959 = vld [vmem:[%s10 + $0x28] sm:$0xff]
    %v2960 = vld [vmem:[%s10 + $0x30] sm:$0xff]
    %v2961 = vld [vmem:[%s10 + $0x38] sm:$0xff]
    %v2962 = vld [vmem:[%s10 + $0x40] sm:$0xff]
    %v2963 = vld [vmem:[%s10 + $0x48] sm:$0xff]
    %v2964 = vld [vmem:[%s10 + $0x50] sm:$0xff]
    %v2965 = vld [vmem:[%s10 + $0x58] sm:$0xff]
    %v2966 = vld [vmem:[%s10 + $0x60] sm:$0xff]
    %v2967 = vld [vmem:[%s10 + $0x68] sm:$0xff]
    %v2968 = vld [vmem:[%s10 + $0x70] sm:$0xff]
    %v2969 = vld [vmem:[%s10 + $0x78] sm:$0xff]
    %v2970 = vld [vmem:[%s10 + $0x80] sm:$0xff]
    %v2971 = vld [vmem:[%s10 + $0x88] sm:$0xff]
    %v2972 = vld [vmem:[%s10 + $0x90] sm:$0xff]
    %v2973 = vld [vmem:[%s10 + $0x98] sm:$0xff]
    %v2974 = vld [vmem:[%s10 + $0xa0] sm:$0xff]
    %v2975 = vld [vmem:[%s10 + $0xa8] sm:$0xff]
    %v2976 = vld [vmem:[%s10 + $0xb0] sm:$0xff]
    %v2977 = vld [vmem:[%s10 + $0xb8] sm:$0xff]
    %v2978 = vld [vmem:[%s10 + $0xc0] sm:$0xff]
    %v2979 = vld [vmem:[%s10 + $0xc8] sm:$0xff]
    %v2980 = vld [vmem:[%s10 + $0xd0] sm:$0xff]
    %v2981 = vld [vmem:[%s10 + $0xd8] sm:$0xff]
    %v2982 = vld [vmem:[%s10 + $0xe0] sm:$0xff]
    %v2983 = vld [vmem:[%s10 + $0xe8] sm:$0xff]
    %v2984 = vld [vmem:[%s10 + $0xf0] sm:$0xff]
    %v2985 = vld [vmem:[%s10 + $0xf8] sm:$0xff]
    %v2986 = vld [vmem:[%s10 + $0x100] sm:$0xff]
    %v2987 = vld [vmem:[%s10 + $0x108] sm:$0xff]
    %v2988 = vld [vmem:[%s10 + $0x110] sm:$0xff]
    %v2989 = vld [vmem:[%s10 + $0x118] sm:$0xff]
    %v2990 = vld [vmem:[%s10 + $0x120] sm:$0xff]
    %v2991 = vld [vmem:[%s10 + $0x128] sm:$0xff]
    %v2992 = vld [vmem:[%s10 + $0x130] sm:$0xff]
    %v2993 = vld [vmem:[%s10 + $0x138] sm:$0xff]
    %v2994 = vld [vmem:[%s10 + $0x140] sm:$0xff]
    %v2995 = vld [vmem:[%s10 + $0x148] sm:$0xff]
    %v2996 = vld [vmem:[%s10 + $0x150] sm:$0xff]
    %v2997 = vld [vmem:[%s10 + $0x158] sm:$0xff]
    %v2998 = vld [vmem:[%s10 + $0x160] sm:$0xff]
    %v2999 = vld [vmem:[%s10 + $0x168] sm:$0xff]
    %v3000 = vld [vmem:[%s10 + $0x170] sm:$0xff]
    %v3001 = vld [vmem:[%s10 + $0x178] sm:$0xff]
    %v3002 = vld [vmem:[%s10 + $0x180] sm:$0xff]
    %v3003 = vld [vmem:[%s10 + $0x188] sm:$0xff]
    %v3004 = vld [vmem:[%s10 + $0x190] sm:$0xff]
    %v3005 = vld [vmem:[%s10 + $0x198] sm:$0xff]
    %v3006 = vld [vmem:[%s10 + $0x1a0] sm:$0xff]
    %v3007 = vld [vmem:[%s10 + $0x1a8] sm:$0xff]
    %v3008 = vld [vmem:[%s10 + $0x1b0] sm:$0xff]
    %v3009 = vld [vmem:[%s10 + $0x1b8] sm:$0xff]
    %v3010 = vld [vmem:[%s10 + $0x1c0] sm:$0xff]
    %v3011 = vld [vmem:[%s10 + $0x1c8] sm:$0xff]
    %v3012 = vld [vmem:[%s10 + $0x1d0] sm:$0xff]
    %v3013 = vld [vmem:[%s10 + $0x1d8] sm:$0xff]
    %v3014 = vld [vmem:[%s10 + $0x1e0] sm:$0xff]
    %v3015 = vld [vmem:[%s10 + $0x1e8] sm:$0xff]
    %v3016 = vld [vmem:[%s10 + $0x1f0] sm:$0xff]
    %v3017 = vld [vmem:[%s10 + $0x1f8] sm:$0xff]
    %v3018 = vld [vmem:[%s10 + $0x200] sm:$0xff]
    %v3019 = vld [vmem:[%s10 + $0x208] sm:$0xff]
    %v3020 = vld [vmem:[%s10 + $0x210] sm:$0xff]
    %v3021 = vld [vmem:[%s10 + $0x218] sm:$0xff]
    %v3022 = vld [vmem:[%s10 + $0x220] sm:$0xff]
    %v3023 = vld [vmem:[%s10 + $0x228] sm:$0xff]
    %v3024 = vld [vmem:[%s10 + $0x230] sm:$0xff]
    %v3025 = vld [vmem:[%s10 + $0x238] sm:$0xff]
    %v3026 = vld [vmem:[%s10 + $0x240] sm:$0xff]
    %v3027 = vld [vmem:[%s10 + $0x248] sm:$0xff]
    %v3028 = vld [vmem:[%s10 + $0x250] sm:$0xff]
    %v3029 = vld [vmem:[%s10 + $0x258] sm:$0xff]
    %v3030 = vld [vmem:[%s10 + $0x260] sm:$0xff]
    %v3031 = vld [vmem:[%s10 + $0x268] sm:$0xff]
    %v3032 = vld [vmem:[%s10 + $0x270] sm:$0xff]
    %v3033 = vld [vmem:[%s10 + $0x278] sm:$0xff]
    %v3034 = vld [vmem:[%s10 + $0x280] sm:$0xff]
    %v3035 = vld [vmem:[%s10 + $0x288] sm:$0xff]
    %v3036 = vld [vmem:[%s10 + $0x290] sm:$0xff]
    %v3037 = vld [vmem:[%s10 + $0x298] sm:$0xff]
    %v3038 = vld [vmem:[%s10 + $0x2a0] sm:$0xff]
    %v3039 = vld [vmem:[%s10 + $0x2a8] sm:$0xff]
    %v3040 = vld [vmem:[%s10 + $0x2b0] sm:$0xff]
    %v3041 = vld [vmem:[%s10 + $0x2b8] sm:$0xff]
    %v3042 = vld [vmem:[%s10 + $0x2c0] sm:$0xff]
    %v3043 = vld [vmem:[%s10 + $0x2c8] sm:$0xff]
    %v3044 = vld [vmem:[%s10 + $0x2d0] sm:$0xff]
    %v3045 = vld [vmem:[%s10 + $0x2d8] sm:$0xff]
    %v3046 = vld [vmem:[%s10 + $0x2e0] sm:$0xff]
    %v3047 = vld [vmem:[%s10 + $0x2e8] sm:$0xff]
    %v3048 = vld [vmem:[%s10 + $0x2f0] sm:$0xff]
    %v3049 = vld [vmem:[%s10 + $0x2f8] sm:$0xff]
    %v3050 = vld [vmem:[%s10 + $0x300] sm:$0xff]
    %v3051 = vld [vmem:[%s10 + $0x308] sm:$0xff]
    %v3052 = vld [vmem:[%s10 + $0x310] sm:$0xff]
    %v3053 = vld [vmem:[%s10 + $0x318] sm:$0xff]
    %v3054 = vld [vmem:[%s10 + $0x320] sm:$0xff]
    %v3055 = vld [vmem:[%s10 + $0x328] sm:$0xff]
    %v3056 = vld [vmem:[%s10 + $0x330] sm:$0xff]
    %v3057 = vld [vmem:[%s10 + $0x338] sm:$0xff]
    %v3058 = vld [vmem:[%s10 + $0x340] sm:$0xff]
    %v3059 = vld [vmem:[%s10 + $0x348] sm:$0xff]
    %v3060 = vld [vmem:[%s10 + $0x350] sm:$0xff]
    %v3061 = vld [vmem:[%s10 + $0x358] sm:$0xff]
    %v3062 = vld [vmem:[%s10 + $0x360] sm:$0xff]
    %v3063 = vld [vmem:[%s10 + $0x368] sm:$0xff]
    %v3064 = vld [vmem:[%s10 + $0x370] sm:$0xff]
    %v3065 = vld [vmem:[%s10 + $0x378] sm:$0xff]
    %v3066 = vld [vmem:[%s10 + $0x380] sm:$0xff]
    %v3067 = vld [vmem:[%s10 + $0x388] sm:$0xff]
    %v3068 = vld [vmem:[%s10 + $0x390] sm:$0xff]
    %v3069 = vld [vmem:[%s10 + $0x398] sm:$0xff]
    %v3070 = vld [vmem:[%s10 + $0x3a0] sm:$0xff]
    %v3071 = vld [vmem:[%s10 + $0x3a8] sm:$0xff]
    %v3072 = vld [vmem:[%s10 + $0x3b0] sm:$0xff]
    %v3073 = vld [vmem:[%s10 + $0x3b8] sm:$0xff]
    %v3074 = vld [vmem:[%s10 + $0x3c0] sm:$0xff]
    %v3075 = vld [vmem:[%s10 + $0x3c8] sm:$0xff]
    %v3076 = vld [vmem:[%s10 + $0x3d0] sm:$0xff]
    %v3077 = vld [vmem:[%s10 + $0x3d8] sm:$0xff]
    %v3078 = vld [vmem:[%s10 + $0x3e0] sm:$0xff]
    %v3079 = vld [vmem:[%s10 + $0x3e8] sm:$0xff]
    %v3080 = vld [vmem:[%s10 + $0x3f0] sm:$0xff]
    %v3081 = vld [vmem:[%s10 + $0x3f8] sm:$0xff]
    %v3082 = vld [vmem:[%s11] sm:$0xf]
    %v3084 = vlaneseq
    %v3085 = vshrl.u32 %v3084, 7
    %v3086 = vsub.s32 0, %v3085
    %v3087 = vrot.slane %v3082, %v3086
    %v3088 = vlaneseq
    %v3089 = vshrl.u32 %v3088, 7
    %v3090 = vsub.s32 1, %v3089
    %v3091 = vrot.slane %v3082, %v3090
    %v3092 = vlaneseq
    %v3093 = vshrl.u32 %v3092, 7
    %v3094 = vsub.s32 2, %v3093
    %v3095 = vrot.slane %v3082, %v3094
    %v3096 = vlaneseq
    %v3097 = vshrl.u32 %v3096, 7
    %v3098 = vsub.s32 3, %v3097
    %v3099 = vrot.slane %v3082, %v3098
    %v3232 = vunpack.c.l.b16 %v2954
    %v3233 = vunpack.c.h.b16 %v2954
    %v3234 = vunpack.c.l.b16 %v2955
    %v3235 = vunpack.c.h.b16 %v2955
    %v3236 = vunpack.c.l.b16 %v2956
    %v3237 = vunpack.c.h.b16 %v2956
    %v3238 = vunpack.c.l.b16 %v2957
    %v3239 = vunpack.c.h.b16 %v2957
    %v3240 = vunpack.c.l.b16 %v2958
    %v3241 = vunpack.c.h.b16 %v2958
    %v3242 = vunpack.c.l.b16 %v2959
    %v3243 = vunpack.c.h.b16 %v2959
    %v3244 = vunpack.c.l.b16 %v2960
    %v3245 = vunpack.c.h.b16 %v2960
    %v3246 = vunpack.c.l.b16 %v2961
    %v3247 = vunpack.c.h.b16 %v2961
    %v3248 = vunpack.c.l.b16 %v2962
    %v3249 = vunpack.c.h.b16 %v2962
    %v3250 = vunpack.c.l.b16 %v2963
    %v3251 = vunpack.c.h.b16 %v2963
    %v3252 = vunpack.c.l.b16 %v2964
    %v3253 = vunpack.c.h.b16 %v2964
    %v3254 = vunpack.c.l.b16 %v2965
    %v3255 = vunpack.c.h.b16 %v2965
    %v3256 = vunpack.c.l.b16 %v2966
    %v3257 = vunpack.c.h.b16 %v2966
    %v3258 = vunpack.c.l.b16 %v2967
    %v3259 = vunpack.c.h.b16 %v2967
    %v3260 = vunpack.c.l.b16 %v2968
    %v3261 = vunpack.c.h.b16 %v2968
    %v3262 = vunpack.c.l.b16 %v2969
    %v3263 = vunpack.c.h.b16 %v2969
    %v3264 = vunpack.c.l.b16 %v2970
    %v3265 = vunpack.c.h.b16 %v2970
    %v3266 = vunpack.c.l.b16 %v2971
    %v3267 = vunpack.c.h.b16 %v2971
    %v3268 = vunpack.c.l.b16 %v2972
    %v3269 = vunpack.c.h.b16 %v2972
    %v3270 = vunpack.c.l.b16 %v2973
    %v3271 = vunpack.c.h.b16 %v2973
    %v3272 = vunpack.c.l.b16 %v2974
    %v3273 = vunpack.c.h.b16 %v2974
    %v3274 = vunpack.c.l.b16 %v2975
    %v3275 = vunpack.c.h.b16 %v2975
    %v3276 = vunpack.c.l.b16 %v2976
    %v3277 = vunpack.c.h.b16 %v2976
    %v3278 = vunpack.c.l.b16 %v2977
    %v3279 = vunpack.c.h.b16 %v2977
    %v3280 = vunpack.c.l.b16 %v2978
    %v3281 = vunpack.c.h.b16 %v2978
    %v3282 = vunpack.c.l.b16 %v2979
    %v3283 = vunpack.c.h.b16 %v2979
    %v3284 = vunpack.c.l.b16 %v2980
    %v3285 = vunpack.c.h.b16 %v2980
    %v3286 = vunpack.c.l.b16 %v2981
    %v3287 = vunpack.c.h.b16 %v2981
    %v3288 = vunpack.c.l.b16 %v2982
    %v3289 = vunpack.c.h.b16 %v2982
    %v3290 = vunpack.c.l.b16 %v2983
    %v3291 = vunpack.c.h.b16 %v2983
    %v3292 = vunpack.c.l.b16 %v2984
    %v3293 = vunpack.c.h.b16 %v2984
    %v3294 = vunpack.c.l.b16 %v2985
    %v3295 = vunpack.c.h.b16 %v2985
    %v3296 = vunpack.c.l.b16 %v2986
    %v3297 = vunpack.c.h.b16 %v2986
    %v3298 = vunpack.c.l.b16 %v2987
    %v3299 = vunpack.c.h.b16 %v2987
    %v3300 = vunpack.c.l.b16 %v2988
    %v3301 = vunpack.c.h.b16 %v2988
    %v3302 = vunpack.c.l.b16 %v2989
    %v3303 = vunpack.c.h.b16 %v2989
    %v3304 = vunpack.c.l.b16 %v2990
    %v3305 = vunpack.c.h.b16 %v2990
    %v3306 = vunpack.c.l.b16 %v2991
    %v3307 = vunpack.c.h.b16 %v2991
    %v3308 = vunpack.c.l.b16 %v2992
    %v3309 = vunpack.c.h.b16 %v2992
    %v3310 = vunpack.c.l.b16 %v2993
    %v3311 = vunpack.c.h.b16 %v2993
    %v3312 = vunpack.c.l.b16 %v2994
    %v3313 = vunpack.c.h.b16 %v2994
    %v3314 = vunpack.c.l.b16 %v2995
    %v3315 = vunpack.c.h.b16 %v2995
    %v3316 = vunpack.c.l.b16 %v2996
    %v3317 = vunpack.c.h.b16 %v2996
    %v3318 = vunpack.c.l.b16 %v2997
    %v3319 = vunpack.c.h.b16 %v2997
    %v3320 = vunpack.c.l.b16 %v2998
    %v3321 = vunpack.c.h.b16 %v2998
    %v3322 = vunpack.c.l.b16 %v2999
    %v3323 = vunpack.c.h.b16 %v2999
    %v3324 = vunpack.c.l.b16 %v3000
    %v3325 = vunpack.c.h.b16 %v3000
    %v3326 = vunpack.c.l.b16 %v3001
    %v3327 = vunpack.c.h.b16 %v3001
    %v3328 = vunpack.c.l.b16 %v3002
    %v3329 = vunpack.c.h.b16 %v3002
    %v3330 = vunpack.c.l.b16 %v3003
    %v3331 = vunpack.c.h.b16 %v3003
    %v3332 = vunpack.c.l.b16 %v3004
    %v3333 = vunpack.c.h.b16 %v3004
    %v3334 = vunpack.c.l.b16 %v3005
    %v3335 = vunpack.c.h.b16 %v3005
    %v3336 = vunpack.c.l.b16 %v3006
    %v3337 = vunpack.c.h.b16 %v3006
    %v3338 = vunpack.c.l.b16 %v3007
    %v3339 = vunpack.c.h.b16 %v3007
    %v3340 = vunpack.c.l.b16 %v3008
    %v3341 = vunpack.c.h.b16 %v3008
    %v3342 = vunpack.c.l.b16 %v3009
    %v3343 = vunpack.c.h.b16 %v3009
    %v3344 = vunpack.c.l.b16 %v3010
    %v3345 = vunpack.c.h.b16 %v3010
    %v3346 = vunpack.c.l.b16 %v3011
    %v3347 = vunpack.c.h.b16 %v3011
    %v3348 = vunpack.c.l.b16 %v3012
    %v3349 = vunpack.c.h.b16 %v3012
    %v3350 = vunpack.c.l.b16 %v3013
    %v3351 = vunpack.c.h.b16 %v3013
    %v3352 = vunpack.c.l.b16 %v3014
    %v3353 = vunpack.c.h.b16 %v3014
    %v3354 = vunpack.c.l.b16 %v3015
    %v3355 = vunpack.c.h.b16 %v3015
    %v3356 = vunpack.c.l.b16 %v3016
    %v3357 = vunpack.c.h.b16 %v3016
    %v3358 = vunpack.c.l.b16 %v3017
    %v3359 = vunpack.c.h.b16 %v3017
    %v3360 = vunpack.c.l.b16 %v3018
    %v3361 = vunpack.c.h.b16 %v3018
    %v3362 = vunpack.c.l.b16 %v3019
    %v3363 = vunpack.c.h.b16 %v3019
    %v3364 = vunpack.c.l.b16 %v3020
    %v3365 = vunpack.c.h.b16 %v3020
    %v3366 = vunpack.c.l.b16 %v3021
    %v3367 = vunpack.c.h.b16 %v3021
    %v3368 = vunpack.c.l.b16 %v3022
    %v3369 = vunpack.c.h.b16 %v3022
    %v3370 = vunpack.c.l.b16 %v3023
    %v3371 = vunpack.c.h.b16 %v3023
    %v3372 = vunpack.c.l.b16 %v3024
    %v3373 = vunpack.c.h.b16 %v3024
    %v3374 = vunpack.c.l.b16 %v3025
    %v3375 = vunpack.c.h.b16 %v3025
    %v3376 = vunpack.c.l.b16 %v3026
    %v3377 = vunpack.c.h.b16 %v3026
    %v3378 = vunpack.c.l.b16 %v3027
    %v3379 = vunpack.c.h.b16 %v3027
    %v3380 = vunpack.c.l.b16 %v3028
    %v3381 = vunpack.c.h.b16 %v3028
    %v3382 = vunpack.c.l.b16 %v3029
    %v3383 = vunpack.c.h.b16 %v3029
    %v3384 = vunpack.c.l.b16 %v3030
    %v3385 = vunpack.c.h.b16 %v3030
    %v3386 = vunpack.c.l.b16 %v3031
    %v3387 = vunpack.c.h.b16 %v3031
    %v3388 = vunpack.c.l.b16 %v3032
    %v3389 = vunpack.c.h.b16 %v3032
    %v3390 = vunpack.c.l.b16 %v3033
    %v3391 = vunpack.c.h.b16 %v3033
    %v3392 = vunpack.c.l.b16 %v3034
    %v3393 = vunpack.c.h.b16 %v3034
    %v3394 = vunpack.c.l.b16 %v3035
    %v3395 = vunpack.c.h.b16 %v3035
    %v3396 = vunpack.c.l.b16 %v3036
    %v3397 = vunpack.c.h.b16 %v3036
    %v3398 = vunpack.c.l.b16 %v3037
    %v3399 = vunpack.c.h.b16 %v3037
    %v3400 = vunpack.c.l.b16 %v3038
    %v3401 = vunpack.c.h.b16 %v3038
    %v3402 = vunpack.c.l.b16 %v3039
    %v3403 = vunpack.c.h.b16 %v3039
    %v3404 = vunpack.c.l.b16 %v3040
    %v3405 = vunpack.c.h.b16 %v3040
    %v3406 = vunpack.c.l.b16 %v3041
    %v3407 = vunpack.c.h.b16 %v3041
    %v3408 = vunpack.c.l.b16 %v3042
    %v3409 = vunpack.c.h.b16 %v3042
    %v3410 = vunpack.c.l.b16 %v3043
    %v3411 = vunpack.c.h.b16 %v3043
    %v3412 = vunpack.c.l.b16 %v3044
    %v3413 = vunpack.c.h.b16 %v3044
    %v3414 = vunpack.c.l.b16 %v3045
    %v3415 = vunpack.c.h.b16 %v3045
    %v3416 = vunpack.c.l.b16 %v3046
    %v3417 = vunpack.c.h.b16 %v3046
    %v3418 = vunpack.c.l.b16 %v3047
    %v3419 = vunpack.c.h.b16 %v3047
    %v3420 = vunpack.c.l.b16 %v3048
    %v3421 = vunpack.c.h.b16 %v3048
    %v3422 = vunpack.c.l.b16 %v3049
    %v3423 = vunpack.c.h.b16 %v3049
    %v3424 = vunpack.c.l.b16 %v3050
    %v3425 = vunpack.c.h.b16 %v3050
    %v3426 = vunpack.c.l.b16 %v3051
    %v3427 = vunpack.c.h.b16 %v3051
    %v3428 = vunpack.c.l.b16 %v3052
    %v3429 = vunpack.c.h.b16 %v3052
    %v3430 = vunpack.c.l.b16 %v3053
    %v3431 = vunpack.c.h.b16 %v3053
    %v3432 = vunpack.c.l.b16 %v3054
    %v3433 = vunpack.c.h.b16 %v3054
    %v3434 = vunpack.c.l.b16 %v3055
    %v3435 = vunpack.c.h.b16 %v3055
    %v3436 = vunpack.c.l.b16 %v3056
    %v3437 = vunpack.c.h.b16 %v3056
    %v3438 = vunpack.c.l.b16 %v3057
    %v3439 = vunpack.c.h.b16 %v3057
    %v3440 = vunpack.c.l.b16 %v3058
    %v3441 = vunpack.c.h.b16 %v3058
    %v3442 = vunpack.c.l.b16 %v3059
    %v3443 = vunpack.c.h.b16 %v3059
    %v3444 = vunpack.c.l.b16 %v3060
    %v3445 = vunpack.c.h.b16 %v3060
    %v3446 = vunpack.c.l.b16 %v3061
    %v3447 = vunpack.c.h.b16 %v3061
    %v3448 = vunpack.c.l.b16 %v3062
    %v3449 = vunpack.c.h.b16 %v3062
    %v3450 = vunpack.c.l.b16 %v3063
    %v3451 = vunpack.c.h.b16 %v3063
    %v3452 = vunpack.c.l.b16 %v3064
    %v3453 = vunpack.c.h.b16 %v3064
    %v3454 = vunpack.c.l.b16 %v3065
    %v3455 = vunpack.c.h.b16 %v3065
    %v3456 = vunpack.c.l.b16 %v3066
    %v3457 = vunpack.c.h.b16 %v3066
    %v3458 = vunpack.c.l.b16 %v3067
    %v3459 = vunpack.c.h.b16 %v3067
    %v3460 = vunpack.c.l.b16 %v3068
    %v3461 = vunpack.c.h.b16 %v3068
    %v3462 = vunpack.c.l.b16 %v3069
    %v3463 = vunpack.c.h.b16 %v3069
    %v3464 = vunpack.c.l.b16 %v3070
    %v3465 = vunpack.c.h.b16 %v3070
    %v3466 = vunpack.c.l.b16 %v3071
    %v3467 = vunpack.c.h.b16 %v3071
    %v3468 = vunpack.c.l.b16 %v3072
    %v3469 = vunpack.c.h.b16 %v3072
    %v3470 = vunpack.c.l.b16 %v3073
    %v3471 = vunpack.c.h.b16 %v3073
    %v3472 = vunpack.c.l.b16 %v3074
    %v3473 = vunpack.c.h.b16 %v3074
    %v3474 = vunpack.c.l.b16 %v3075
    %v3475 = vunpack.c.h.b16 %v3075
    %v3476 = vunpack.c.l.b16 %v3076
    %v3477 = vunpack.c.h.b16 %v3076
    %v3478 = vunpack.c.l.b16 %v3077
    %v3479 = vunpack.c.h.b16 %v3077
    %v3480 = vunpack.c.l.b16 %v3078
    %v3481 = vunpack.c.h.b16 %v3078
    %v3482 = vunpack.c.l.b16 %v3079
    %v3483 = vunpack.c.h.b16 %v3079
    %v3484 = vunpack.c.l.b16 %v3080
    %v3485 = vunpack.c.h.b16 %v3080
    %v3486 = vunpack.c.l.b16 %v3081
    %v3487 = vunpack.c.h.b16 %v3081
    %v3488 = vpack.c.b16 %v3236, %v3232
    %v3489 = vpack.c.b16 %v3237, %v3233
    %v3490 = vpack.c.b16 %v3238, %v3234
    %v3491 = vpack.c.b16 %v3239, %v3235
    %v3492 = vpack.c.b16 %v3244, %v3240
    %v3493 = vpack.c.b16 %v3245, %v3241
    %v3494 = vpack.c.b16 %v3246, %v3242
    %v3495 = vpack.c.b16 %v3247, %v3243
    %v3496 = vpack.c.b16 %v3252, %v3248
    %v3497 = vpack.c.b16 %v3253, %v3249
    %v3498 = vpack.c.b16 %v3254, %v3250
    %v3499 = vpack.c.b16 %v3255, %v3251
    %v3500 = vpack.c.b16 %v3260, %v3256
    %v3501 = vpack.c.b16 %v3261, %v3257
    %v3502 = vpack.c.b16 %v3262, %v3258
    %v3503 = vpack.c.b16 %v3263, %v3259
    %v3504 = vpack.c.b16 %v3268, %v3264
    %v3505 = vpack.c.b16 %v3269, %v3265
    %v3506 = vpack.c.b16 %v3270, %v3266
    %v3507 = vpack.c.b16 %v3271, %v3267
    %v3508 = vpack.c.b16 %v3276, %v3272
    %v3509 = vpack.c.b16 %v3277, %v3273
    %v3510 = vpack.c.b16 %v3278, %v3274
    %v3511 = vpack.c.b16 %v3279, %v3275
    %v3512 = vpack.c.b16 %v3284, %v3280
    %v3513 = vpack.c.b16 %v3285, %v3281
    %v3514 = vpack.c.b16 %v3286, %v3282
    %v3515 = vpack.c.b16 %v3287, %v3283
    %v3516 = vpack.c.b16 %v3292, %v3288
    %v3517 = vpack.c.b16 %v3293, %v3289
    %v3518 = vpack.c.b16 %v3294, %v3290
    %v3519 = vpack.c.b16 %v3295, %v3291
    %v3520 = vpack.c.b16 %v3300, %v3296
    %v3521 = vpack.c.b16 %v3301, %v3297
    %v3522 = vpack.c.b16 %v3302, %v3298
    %v3523 = vpack.c.b16 %v3303, %v3299
    %v3524 = vpack.c.b16 %v3308, %v3304
    %v3525 = vpack.c.b16 %v3309, %v3305
    %v3526 = vpack.c.b16 %v3310, %v3306
    %v3527 = vpack.c.b16 %v3311, %v3307
    %v3528 = vpack.c.b16 %v3316, %v3312
    %v3529 = vpack.c.b16 %v3317, %v3313
    %v3530 = vpack.c.b16 %v3318, %v3314
    %v3531 = vpack.c.b16 %v3319, %v3315
    %v3532 = vpack.c.b16 %v3324, %v3320
    %v3533 = vpack.c.b16 %v3325, %v3321
    %v3534 = vpack.c.b16 %v3326, %v3322
    %v3535 = vpack.c.b16 %v3327, %v3323
    %v3536 = vpack.c.b16 %v3332, %v3328
    %v3537 = vpack.c.b16 %v3333, %v3329
    %v3538 = vpack.c.b16 %v3334, %v3330
    %v3539 = vpack.c.b16 %v3335, %v3331
    %v3540 = vpack.c.b16 %v3340, %v3336
    %v3541 = vpack.c.b16 %v3341, %v3337
    %v3542 = vpack.c.b16 %v3342, %v3338
    %v3543 = vpack.c.b16 %v3343, %v3339
    %v3544 = vpack.c.b16 %v3348, %v3344
    %v3545 = vpack.c.b16 %v3349, %v3345
    %v3546 = vpack.c.b16 %v3350, %v3346
    %v3547 = vpack.c.b16 %v3351, %v3347
    %v3548 = vpack.c.b16 %v3356, %v3352
    %v3549 = vpack.c.b16 %v3357, %v3353
    %v3550 = vpack.c.b16 %v3358, %v3354
    %v3551 = vpack.c.b16 %v3359, %v3355
    %v3552 = vpack.c.b16 %v3364, %v3360
    %v3553 = vpack.c.b16 %v3365, %v3361
    %v3554 = vpack.c.b16 %v3366, %v3362
    %v3555 = vpack.c.b16 %v3367, %v3363
    %v3556 = vpack.c.b16 %v3372, %v3368
    %v3557 = vpack.c.b16 %v3373, %v3369
    %v3558 = vpack.c.b16 %v3374, %v3370
    %v3559 = vpack.c.b16 %v3375, %v3371
    %v3560 = vpack.c.b16 %v3380, %v3376
    %v3561 = vpack.c.b16 %v3381, %v3377
    %v3562 = vpack.c.b16 %v3382, %v3378
    %v3563 = vpack.c.b16 %v3383, %v3379
    %v3564 = vpack.c.b16 %v3388, %v3384
    %v3565 = vpack.c.b16 %v3389, %v3385
    %v3566 = vpack.c.b16 %v3390, %v3386
    %v3567 = vpack.c.b16 %v3391, %v3387
    %v3568 = vpack.c.b16 %v3396, %v3392
    %v3569 = vpack.c.b16 %v3397, %v3393
    %v3570 = vpack.c.b16 %v3398, %v3394
    %v3571 = vpack.c.b16 %v3399, %v3395
    %v3572 = vpack.c.b16 %v3404, %v3400
    %v3573 = vpack.c.b16 %v3405, %v3401
    %v3574 = vpack.c.b16 %v3406, %v3402
    %v3575 = vpack.c.b16 %v3407, %v3403
    %v3576 = vpack.c.b16 %v3412, %v3408
    %v3577 = vpack.c.b16 %v3413, %v3409
    %v3578 = vpack.c.b16 %v3414, %v3410
    %v3579 = vpack.c.b16 %v3415, %v3411
    %v3580 = vpack.c.b16 %v3420, %v3416
    %v3581 = vpack.c.b16 %v3421, %v3417
    %v3582 = vpack.c.b16 %v3422, %v3418
    %v3583 = vpack.c.b16 %v3423, %v3419
    %v3584 = vpack.c.b16 %v3428, %v3424
    %v3585 = vpack.c.b16 %v3429, %v3425
    %v3586 = vpack.c.b16 %v3430, %v3426
    %v3587 = vpack.c.b16 %v3431, %v3427
    %v3588 = vpack.c.b16 %v3436, %v3432
    %v3589 = vpack.c.b16 %v3437, %v3433
    %v3590 = vpack.c.b16 %v3438, %v3434
    %v3591 = vpack.c.b16 %v3439, %v3435
    %v3592 = vpack.c.b16 %v3444, %v3440
    %v3593 = vpack.c.b16 %v3445, %v3441
    %v3594 = vpack.c.b16 %v3446, %v3442
    %v3595 = vpack.c.b16 %v3447, %v3443
    %v3596 = vpack.c.b16 %v3452, %v3448
    %v3597 = vpack.c.b16 %v3453, %v3449
    %v3598 = vpack.c.b16 %v3454, %v3450
    %v3599 = vpack.c.b16 %v3455, %v3451
    %v3600 = vpack.c.b16 %v3460, %v3456
    %v3601 = vpack.c.b16 %v3461, %v3457
    %v3602 = vpack.c.b16 %v3462, %v3458
    %v3603 = vpack.c.b16 %v3463, %v3459
    %v3604 = vpack.c.b16 %v3468, %v3464
    %v3605 = vpack.c.b16 %v3469, %v3465
    %v3606 = vpack.c.b16 %v3470, %v3466
    %v3607 = vpack.c.b16 %v3471, %v3467
    %v3608 = vpack.c.b16 %v3476, %v3472
    %v3609 = vpack.c.b16 %v3477, %v3473
    %v3610 = vpack.c.b16 %v3478, %v3474
    %v3611 = vpack.c.b16 %v3479, %v3475
    %v3612 = vpack.c.b16 %v3484, %v3480
    %v3613 = vpack.c.b16 %v3485, %v3481
    %v3614 = vpack.c.b16 %v3486, %v3482
    %v3615 = vpack.c.b16 %v3487, %v3483
    %3744 = vmatprep.subr.bf16.mxu0 %v3489
    %3745 = vmatpush1.bf16.msra.mxu0 %v3488
    %3746 = vmatprep.subr.bf16.mxu0 %v3493
    %3747 = vmatpush1.bf16.msra.mxu0 %v3492
    %3748 = vmatprep.subr.bf16.mxu0 %v3497
    %3749 = vmatpush1.bf16.msra.mxu0 %v3496
    %3750 = vmatprep.subr.bf16.mxu0 %v3501
    %3751 = vmatpush1.bf16.msra.mxu0 %v3500
    %3752 = vmatprep.subr.bf16.mxu0 %v3505
    %3753 = vmatpush1.bf16.msra.mxu0 %v3504
    %3754 = vmatprep.subr.bf16.mxu0 %v3509
    %3755 = vmatpush1.bf16.msra.mxu0 %v3508
    %3756 = vmatprep.subr.bf16.mxu0 %v3513
    %3757 = vmatpush1.bf16.msra.mxu0 %v3512
    %3758 = vmatprep.subr.bf16.mxu0 %v3517
    %3759 = vmatpush1.bf16.msra.mxu0 %v3516
    %3760 = vmatprep.subr.bf16.mxu0 %v3521
    %3761 = vmatpush1.bf16.msra.mxu0 %v3520
    %3762 = vmatprep.subr.bf16.mxu0 %v3525
    %3763 = vmatpush1.bf16.msra.mxu0 %v3524
    %3764 = vmatprep.subr.bf16.mxu0 %v3529
    %3765 = vmatpush1.bf16.msra.mxu0 %v3528
    %3766 = vmatprep.subr.bf16.mxu0 %v3533
    %3767 = vmatpush1.bf16.msra.mxu0 %v3532
    %3768 = vmatprep.subr.bf16.mxu0 %v3537
    %3769 = vmatpush1.bf16.msra.mxu0 %v3536
    %3770 = vmatprep.subr.bf16.mxu0 %v3541
    %3771 = vmatpush1.bf16.msra.mxu0 %v3540
    %3772 = vmatprep.subr.bf16.mxu0 %v3545
    %3773 = vmatpush1.bf16.msra.mxu0 %v3544
    %3774 = vmatprep.subr.bf16.mxu0 %v3549
    %3775 = vmatpush1.bf16.msra.mxu0 %v3548
    %3776 = vmatprep.mubr.bf16.mxu0 %v2951
    %3777 = vmatmul.mubr.bf16.gmra.mrb[0].mxu0 %v2950
    %v3778 = vpop.f32.mrb[0].mxu0
    %v3779 = vadd.f32 %v3087, %v3778
    %v3780 = vpop.f32.mrb[0].mxu0
    %v3781 = vadd.f32 %v3091, %v3780
    %v3782 = vpop.f32.mrb[0].mxu0
    %v3783 = vpop.f32.mrb[0].mxu0
    %3784 = vdwg.mxu0
    %3785 = vmatprep.subr.bf16.mxu0 %v3553
    %3786 = vmatpush1.bf16.msra.mxu0 %v3552
    %3787 = vmatprep.subr.bf16.mxu0 %v3557
    %3788 = vmatpush1.bf16.msra.mxu0 %v3556
    %3789 = vmatprep.subr.bf16.mxu0 %v3561
    %3790 = vmatpush1.bf16.msra.mxu0 %v3560
    %3791 = vmatprep.subr.bf16.mxu0 %v3565
    %3792 = vmatpush1.bf16.msra.mxu0 %v3564
    %3793 = vmatprep.subr.bf16.mxu0 %v3569
    %3794 = vmatpush1.bf16.msra.mxu0 %v3568
    %3795 = vmatprep.subr.bf16.mxu0 %v3573
    %3796 = vmatpush1.bf16.msra.mxu0 %v3572
    %3797 = vmatprep.subr.bf16.mxu0 %v3577
    %3798 = vmatpush1.bf16.msra.mxu0 %v3576
    %3799 = vmatprep.subr.bf16.mxu0 %v3581
    %3800 = vmatpush1.bf16.msra.mxu0 %v3580
    %3801 = vmatprep.subr.bf16.mxu0 %v3585
    %3802 = vmatpush1.bf16.msra.mxu0 %v3584
    %3803 = vmatprep.subr.bf16.mxu0 %v3589
    %3804 = vmatpush1.bf16.msra.mxu0 %v3588
    %3805 = vmatprep.subr.bf16.mxu0 %v3593
    %3806 = vmatpush1.bf16.msra.mxu0 %v3592
    %3807 = vmatprep.subr.bf16.mxu0 %v3597
    %3808 = vmatpush1.bf16.msra.mxu0 %v3596
    %3809 = vmatprep.subr.bf16.mxu0 %v3601
    %3810 = vmatpush1.bf16.msra.mxu0 %v3600
    %3811 = vmatprep.subr.bf16.mxu0 %v3605
    %3812 = vmatpush1.bf16.msra.mxu0 %v3604
    %3813 = vmatprep.subr.bf16.mxu0 %v3609
    %3814 = vmatpush1.bf16.msra.mxu0 %v3608
    %3815 = vmatprep.subr.bf16.mxu0 %v3613
    %3816 = vmatpush1.bf16.msra.mxu0 %v3612
    %3817 = vmatprep.mubr.bf16.mxu0 %v2953
    %3818 = vmatmul.mubr.bf16.gmra.mrb[0].mxu0 %v2952
    %v3819 = vpop.f32.mrb[0].mxu0
    %v3820 = vadd.f32 %v3779, %v3819
    %v3821 = vpop.f32.mrb[0].mxu0
    %v3822 = vadd.f32 %v3781, %v3821
    %v3823 = vpop.f32.mrb[0].mxu0
    %v3824 = vpop.f32.mrb[0].mxu0
    %3825 = vdwg.mxu0
    %3826 = vmatprep.subr.bf16.mxu0 %v3491
    %3827 = vmatpush1.bf16.msra.mxu0 %v3490
    %3828 = vmatprep.subr.bf16.mxu0 %v3495
    %3829 = vmatpush1.bf16.msra.mxu0 %v3494
    %3830 = vmatprep.subr.bf16.mxu0 %v3499
    %3831 = vmatpush1.bf16.msra.mxu0 %v3498
    %3832 = vmatprep.subr.bf16.mxu0 %v3503
    %3833 = vmatpush1.bf16.msra.mxu0 %v3502
    %3834 = vmatprep.subr.bf16.mxu0 %v3507
    %3835 = vmatpush1.bf16.msra.mxu0 %v3506
    %3836 = vmatprep.subr.bf16.mxu0 %v3511
    %3837 = vmatpush1.bf16.msra.mxu0 %v3510
    %3838 = vmatprep.subr.bf16.mxu0 %v3515
    %3839 = vmatpush1.bf16.msra.mxu0 %v3514
    %3840 = vmatprep.subr.bf16.mxu0 %v3519
    %3841 = vmatpush1.bf16.msra.mxu0 %v3518
    %3842 = vmatprep.subr.bf16.mxu0 %v3523
    %3843 = vmatpush1.bf16.msra.mxu0 %v3522
    %3844 = vmatprep.subr.bf16.mxu0 %v3527
    %3845 = vmatpush1.bf16.msra.mxu0 %v3526
    %3846 = vmatprep.subr.bf16.mxu0 %v3531
    %3847 = vmatpush1.bf16.msra.mxu0 %v3530
    %3848 = vmatprep.subr.bf16.mxu0 %v3535
    %3849 = vmatpush1.bf16.msra.mxu0 %v3534
    %3850 = vmatprep.subr.bf16.mxu0 %v3539
    %3851 = vmatpush1.bf16.msra.mxu0 %v3538
    %3852 = vmatprep.subr.bf16.mxu0 %v3543
    %3853 = vmatpush1.bf16.msra.mxu0 %v3542
    %3854 = vmatprep.subr.bf16.mxu0 %v3547
    %3855 = vmatpush1.bf16.msra.mxu0 %v3546
    %3856 = vmatprep.subr.bf16.mxu0 %v3551
    %3857 = vmatpush1.bf16.msra.mxu0 %v3550
    %3858 = vmatprep.mubr.bf16.mxu0 %v2951
    %3859 = vmatmul.mubr.bf16.gmra.mrb[0].mxu0 %v2950
    %v3860 = vpop.f32.mrb[0].mxu0
    %v3861 = vadd.f32 %v3095, %v3860
    %v3862 = vpop.f32.mrb[0].mxu0
    %v3863 = vadd.f32 %v3099, %v3862
    %v3864 = vpop.f32.mrb[0].mxu0
    %v3865 = vpop.f32.mrb[0].mxu0
    %3866 = vdwg.mxu0
    %3867 = vmatprep.subr.bf16.mxu0 %v3555
    %3868 = vmatpush1.bf16.msra.mxu0 %v3554
    %3869 = vmatprep.subr.bf16.mxu0 %v3559
    %3870 = vmatpush1.bf16.msra.mxu0 %v3558
    %3871 = vmatprep.subr.bf16.mxu0 %v3563
    %3872 = vmatpush1.bf16.msra.mxu0 %v3562
    %3873 = vmatprep.subr.bf16.mxu0 %v3567
    %3874 = vmatpush1.bf16.msra.mxu0 %v3566
    %3875 = vmatprep.subr.bf16.mxu0 %v3571
    %3876 = vmatpush1.bf16.msra.mxu0 %v3570
    %3877 = vmatprep.subr.bf16.mxu0 %v3575
    %3878 = vmatpush1.bf16.msra.mxu0 %v3574
    %3879 = vmatprep.subr.bf16.mxu0 %v3579
    %3880 = vmatpush1.bf16.msra.mxu0 %v3578
    %3881 = vmatprep.subr.bf16.mxu0 %v3583
    %3882 = vmatpush1.bf16.msra.mxu0 %v3582
    %3883 = vmatprep.subr.bf16.mxu0 %v3587
    %3884 = vmatpush1.bf16.msra.mxu0 %v3586
    %3885 = vmatprep.subr.bf16.mxu0 %v3591
    %3886 = vmatpush1.bf16.msra.mxu0 %v3590
    %3887 = vmatprep.subr.bf16.mxu0 %v3595
    %3888 = vmatpush1.bf16.msra.mxu0 %v3594
    %3889 = vmatprep.subr.bf16.mxu0 %v3599
    %3890 = vmatpush1.bf16.msra.mxu0 %v3598
    %3891 = vmatprep.subr.bf16.mxu0 %v3603
    %3892 = vmatpush1.bf16.msra.mxu0 %v3602
    %3893 = vmatprep.subr.bf16.mxu0 %v3607
    %3894 = vmatpush1.bf16.msra.mxu0 %v3606
    %3895 = vmatprep.subr.bf16.mxu0 %v3611
    %3896 = vmatpush1.bf16.msra.mxu0 %v3610
    %3897 = vmatprep.subr.bf16.mxu0 %v3615
    %3898 = vmatpush1.bf16.msra.mxu0 %v3614
    %3899 = vmatprep.mubr.bf16.mxu0 %v2953
    %3900 = vmatmul.mubr.bf16.gmra.mrb[0].mxu0 %v2952
    %v3901 = vpop.f32.mrb[0].mxu0
    %v3902 = vadd.f32 %v3861, %v3901
    %v3903 = vpop.f32.mrb[0].mxu0
    %v3904 = vadd.f32 %v3863, %v3903
    %v3905 = vpop.f32.mrb[0].mxu0
    %v3906 = vpop.f32.mrb[0].mxu0
    %3907 = vdwg.mxu0
    %v3908 = vmax.f32 %v3820, 0.0
    %v3909 = vmax.f32 %v3822, 0.0
    %v3910 = vmax.f32 %v3902, 0.0
    %v3911 = vmax.f32 %v3904, 0.0
    %v3912 = vpack.c.bf16 %v3908, %v3908
    %v3913 = vpack.c.bf16 %v3909, %v3909
    %v3914 = vpack.c.bf16 %v3910, %v3910
    %v3915 = vpack.c.bf16 %v3911, %v3911
    %v3916 = vld [vmem:[%s12] sm:$0xff]
    %v3917 = vld [vmem:[%s12 + $0x8] sm:$0xff]
    %v3918 = vld [vmem:[%s12 + $0x10] sm:$0xff]
    %v3919 = vld [vmem:[%s12 + $0x18] sm:$0xf]
    %v3920 = vld [vmem:[%s12 + $0x1c] sm:$0xff]
    %v3921 = vld [vmem:[%s12 + $0x24] sm:$0xff]
    %v3922 = vld [vmem:[%s12 + $0x2c] sm:$0xff]
    %v3923 = vld [vmem:[%s12 + $0x34] sm:$0xf]
    %v3924 = vld [vmem:[%s12 + $0x38] sm:$0xff]
    %v3925 = vld [vmem:[%s12 + $0x40] sm:$0xff]
    %v3926 = vld [vmem:[%s12 + $0x48] sm:$0xff]
    %v3927 = vld [vmem:[%s12 + $0x50] sm:$0xf]
    %v3928 = vld [vmem:[%s12 + $0x54] sm:$0xff]
    %v3929 = vld [vmem:[%s12 + $0x5c] sm:$0xff]
    %v3930 = vld [vmem:[%s12 + $0x64] sm:$0xff]
    %v3931 = vld [vmem:[%s12 + $0x6c] sm:$0xf]
    %v3932 = vld [vmem:[%s12 + $0x70] sm:$0xff]
    %v3933 = vld [vmem:[%s12 + $0x78] sm:$0xff]
    %v3934 = vld [vmem:[%s12 + $0x80] sm:$0xff]
    %v3935 = vld [vmem:[%s12 + $0x88] sm:$0xf]
    %v3936 = vld [vmem:[%s12 + $0x8c] sm:$0xff]
    %v3937 = vld [vmem:[%s12 + $0x94] sm:$0xff]
    %v3938 = vld [vmem:[%s12 + $0x9c] sm:$0xff]
    %v3939 = vld [vmem:[%s12 + $0xa4] sm:$0xf]
    %v3940 = vld [vmem:[%s12 + $0xa8] sm:$0xff]
    %v3941 = vld [vmem:[%s12 + $0xb0] sm:$0xff]
    %v3942 = vld [vmem:[%s12 + $0xb8] sm:$0xff]
    %v3943 = vld [vmem:[%s12 + $0xc0] sm:$0xf]
    %v3944 = vld [vmem:[%s12 + $0xc4] sm:$0xff]
    %v3945 = vld [vmem:[%s12 + $0xcc] sm:$0xff]
    %v3946 = vld [vmem:[%s12 + $0xd4] sm:$0xff]
    %v3947 = vld [vmem:[%s12 + $0xdc] sm:$0xf]
    %v3948 = vld [vmem:[%s12 + $0xe0] sm:$0xff]
    %v3949 = vld [vmem:[%s12 + $0xe8] sm:$0xff]
    %v3950 = vld [vmem:[%s12 + $0xf0] sm:$0xff]
    %v3951 = vld [vmem:[%s12 + $0xf8] sm:$0xf]
    %v3952 = vld [vmem:[%s12 + $0xfc] sm:$0xff]
    %v3953 = vld [vmem:[%s12 + $0x104] sm:$0xff]
    %v3954 = vld [vmem:[%s12 + $0x10c] sm:$0xff]
    %v3955 = vld [vmem:[%s12 + $0x114] sm:$0xf]
    %v3956 = vld [vmem:[%s12 + $0x118] sm:$0xff]
    %v3957 = vld [vmem:[%s12 + $0x120] sm:$0xff]
    %v3958 = vld [vmem:[%s12 + $0x128] sm:$0xff]
    %v3959 = vld [vmem:[%s12 + $0x130] sm:$0xf]
    %v3960 = vld [vmem:[%s12 + $0x134] sm:$0xff]
    %v3961 = vld [vmem:[%s12 + $0x13c] sm:$0xff]
    %v3962 = vld [vmem:[%s12 + $0x144] sm:$0xff]
    %v3963 = vld [vmem:[%s12 + $0x14c] sm:$0xf]
    %v3964 = vld [vmem:[%s12 + $0x150] sm:$0xff]
    %v3965 = vld [vmem:[%s12 + $0x158] sm:$0xff]
    %v3966 = vld [vmem:[%s12 + $0x160] sm:$0xff]
    %v3967 = vld [vmem:[%s12 + $0x168] sm:$0xf]
    %v3968 = vld [vmem:[%s12 + $0x16c] sm:$0xff]
    %v3969 = vld [vmem:[%s12 + $0x174] sm:$0xff]
    %v3970 = vld [vmem:[%s12 + $0x17c] sm:$0xff]
    %v3971 = vld [vmem:[%s12 + $0x184] sm:$0xf]
    %v3972 = vld [vmem:[%s12 + $0x188] sm:$0xff]
    %v3973 = vld [vmem:[%s12 + $0x190] sm:$0xff]
    %v3974 = vld [vmem:[%s12 + $0x198] sm:$0xff]
    %v3975 = vld [vmem:[%s12 + $0x1a0] sm:$0xf]
    %v3976 = vld [vmem:[%s12 + $0x1a4] sm:$0xff]
    %v3977 = vld [vmem:[%s12 + $0x1ac] sm:$0xff]
    %v3978 = vld [vmem:[%s12 + $0x1b4] sm:$0xff]
    %v3979 = vld [vmem:[%s12 + $0x1bc] sm:$0xf]
    %v3980 = vld [vmem:[%s12 + $0x1c0] sm:$0xff]
    %v3981 = vld [vmem:[%s12 + $0x1c8] sm:$0xff]
    %v3982 = vld [vmem:[%s12 + $0x1d0] sm:$0xff]
    %v3983 = vld [vmem:[%s12 + $0x1d8] sm:$0xf]
    %v3984 = vld [vmem:[%s12 + $0x1dc] sm:$0xff]
    %v3985 = vld [vmem:[%s12 + $0x1e4] sm:$0xff]
    %v3986 = vld [vmem:[%s12 + $0x1ec] sm:$0xff]
    %v3987 = vld [vmem:[%s12 + $0x1f4] sm:$0xf]
    %v3988 = vld [vmem:[%s12 + $0x1f8] sm:$0xff]
    %v3989 = vld [vmem:[%s12 + $0x200] sm:$0xff]
    %v3990 = vld [vmem:[%s12 + $0x208] sm:$0xff]
    %v3991 = vld [vmem:[%s12 + $0x210] sm:$0xf]
    %v3992 = vld [vmem:[%s12 + $0x214] sm:$0xff]
    %v3993 = vld [vmem:[%s12 + $0x21c] sm:$0xff]
    %v3994 = vld [vmem:[%s12 + $0x224] sm:$0xff]
    %v3995 = vld [vmem:[%s12 + $0x22c] sm:$0xf]
    %v3996 = vld [vmem:[%s12 + $0x230] sm:$0xff]
    %v3997 = vld [vmem:[%s12 + $0x238] sm:$0xff]
    %v3998 = vld [vmem:[%s12 + $0x240] sm:$0xff]
    %v3999 = vld [vmem:[%s12 + $0x248] sm:$0xf]
    %v4000 = vld [vmem:[%s12 + $0x24c] sm:$0xff]
    %v4001 = vld [vmem:[%s12 + $0x254] sm:$0xff]
    %v4002 = vld [vmem:[%s12 + $0x25c] sm:$0xff]
    %v4003 = vld [vmem:[%s12 + $0x264] sm:$0xf]
    %v4004 = vld [vmem:[%s12 + $0x268] sm:$0xff]
    %v4005 = vld [vmem:[%s12 + $0x270] sm:$0xff]
    %v4006 = vld [vmem:[%s12 + $0x278] sm:$0xff]
    %v4007 = vld [vmem:[%s12 + $0x280] sm:$0xf]
    %v4008 = vld [vmem:[%s12 + $0x284] sm:$0xff]
    %v4009 = vld [vmem:[%s12 + $0x28c] sm:$0xff]
    %v4010 = vld [vmem:[%s12 + $0x294] sm:$0xff]
    %v4011 = vld [vmem:[%s12 + $0x29c] sm:$0xf]
    %v4012 = vld [vmem:[%s12 + $0x2a0] sm:$0xff]
    %v4013 = vld [vmem:[%s12 + $0x2a8] sm:$0xff]
    %v4014 = vld [vmem:[%s12 + $0x2b0] sm:$0xff]
    %v4015 = vld [vmem:[%s12 + $0x2b8] sm:$0xf]
    %v4016 = vld [vmem:[%s12 + $0x2bc] sm:$0xff]
    %v4017 = vld [vmem:[%s12 + $0x2c4] sm:$0xff]
    %v4018 = vld [vmem:[%s12 + $0x2cc] sm:$0xff]
    %v4019 = vld [vmem:[%s12 + $0x2d4] sm:$0xf]
    %v4020 = vld [vmem:[%s12 + $0x2d8] sm:$0xff]
    %v4021 = vld [vmem:[%s12 + $0x2e0] sm:$0xff]
    %v4022 = vld [vmem:[%s12 + $0x2e8] sm:$0xff]
    %v4023 = vld [vmem:[%s12 + $0x2f0] sm:$0xf]
    %v4024 = vld [vmem:[%s12 + $0x2f4] sm:$0xff]
    %v4025 = vld [vmem:[%s12 + $0x2fc] sm:$0xff]
    %v4026 = vld [vmem:[%s12 + $0x304] sm:$0xff]
    %v4027 = vld [vmem:[%s12 + $0x30c] sm:$0xf]
    %v4028 = vld [vmem:[%s12 + $0x310] sm:$0xff]
    %v4029 = vld [vmem:[%s12 + $0x318] sm:$0xff]
    %v4030 = vld [vmem:[%s12 + $0x320] sm:$0xff]
    %v4031 = vld [vmem:[%s12 + $0x328] sm:$0xf]
    %v4032 = vld [vmem:[%s12 + $0x32c] sm:$0xff]
    %v4033 = vld [vmem:[%s12 + $0x334] sm:$0xff]
    %v4034 = vld [vmem:[%s12 + $0x33c] sm:$0xff]
    %v4035 = vld [vmem:[%s12 + $0x344] sm:$0xf]
    %v4036 = vld [vmem:[%s12 + $0x348] sm:$0xff]
    %v4037 = vld [vmem:[%s12 + $0x350] sm:$0xff]
    %v4038 = vld [vmem:[%s12 + $0x358] sm:$0xff]
    %v4039 = vld [vmem:[%s12 + $0x360] sm:$0xf]
    %v4040 = vld [vmem:[%s12 + $0x364] sm:$0xff]
    %v4041 = vld [vmem:[%s12 + $0x36c] sm:$0xff]
    %v4042 = vld [vmem:[%s12 + $0x374] sm:$0xff]
    %v4043 = vld [vmem:[%s12 + $0x37c] sm:$0xf]
    %v4044 = vld [vmem:[%s12 + $0x380] sm:$0xff]
    %v4045 = vld [vmem:[%s12 + $0x388] sm:$0xff]
    %v4046 = vld [vmem:[%s12 + $0x390] sm:$0xff]
    %v4047 = vld [vmem:[%s12 + $0x398] sm:$0xf]
    %v4048 = vld [vmem:[%s12 + $0x39c] sm:$0xff]
    %v4049 = vld [vmem:[%s12 + $0x3a4] sm:$0xff]
    %v4050 = vld [vmem:[%s12 + $0x3ac] sm:$0xff]
    %v4051 = vld [vmem:[%s12 + $0x3b4] sm:$0xf]
    %v4052 = vld [vmem:[%s12 + $0x3b8] sm:$0xff]
    %v4053 = vld [vmem:[%s12 + $0x3c0] sm:$0xff]
    %v4054 = vld [vmem:[%s12 + $0x3c8] sm:$0xff]
    %v4055 = vld [vmem:[%s12 + $0x3d0] sm:$0xf]
    %v4056 = vld [vmem:[%s12 + $0x3d4] sm:$0xff]
    %v4057 = vld [vmem:[%s12 + $0x3dc] sm:$0xff]
    %v4058 = vld [vmem:[%s12 + $0x3e4] sm:$0xff]
    %v4059 = vld [vmem:[%s12 + $0x3ec] sm:$0xf]
    %v4060 = vld [vmem:[%s12 + $0x3f0] sm:$0xff]
    %v4061 = vld [vmem:[%s12 + $0x3f8] sm:$0xff]
    %v4062 = vld [vmem:[%s12 + $0x400] sm:$0xff]
    %v4063 = vld [vmem:[%s12 + $0x408] sm:$0xf]
    %v4064 = vld [vmem:[%s12 + $0x40c] sm:$0xff]
    %v4065 = vld [vmem:[%s12 + $0x414] sm:$0xff]
    %v4066 = vld [vmem:[%s12 + $0x41c] sm:$0xff]
    %v4067 = vld [vmem:[%s12 + $0x424] sm:$0xf]
    %v4068 = vld [vmem:[%s12 + $0x428] sm:$0xff]
    %v4069 = vld [vmem:[%s12 + $0x430] sm:$0xff]
    %v4070 = vld [vmem:[%s12 + $0x438] sm:$0xff]
    %v4071 = vld [vmem:[%s12 + $0x440] sm:$0xf]
    %v4072 = vld [vmem:[%s12 + $0x444] sm:$0xff]
    %v4073 = vld [vmem:[%s12 + $0x44c] sm:$0xff]
    %v4074 = vld [vmem:[%s12 + $0x454] sm:$0xff]
    %v4075 = vld [vmem:[%s12 + $0x45c] sm:$0xf]
    %v4076 = vld [vmem:[%s12 + $0x460] sm:$0xff]
    %v4077 = vld [vmem:[%s12 + $0x468] sm:$0xff]
    %v4078 = vld [vmem:[%s12 + $0x470] sm:$0xff]
    %v4079 = vld [vmem:[%s12 + $0x478] sm:$0xf]
    %v4080 = vld [vmem:[%s12 + $0x47c] sm:$0xff]
    %v4081 = vld [vmem:[%s12 + $0x484] sm:$0xff]
    %v4082 = vld [vmem:[%s12 + $0x48c] sm:$0xff]
    %v4083 = vld [vmem:[%s12 + $0x494] sm:$0xf]
    %v4084 = vld [vmem:[%s12 + $0x498] sm:$0xff]
    %v4085 = vld [vmem:[%s12 + $0x4a0] sm:$0xff]
    %v4086 = vld [vmem:[%s12 + $0x4a8] sm:$0xff]
    %v4087 = vld [vmem:[%s12 + $0x4b0] sm:$0xf]
    %v4088 = vld [vmem:[%s12 + $0x4b4] sm:$0xff]
    %v4089 = vld [vmem:[%s12 + $0x4bc] sm:$0xff]
    %v4090 = vld [vmem:[%s12 + $0x4c4] sm:$0xff]
    %v4091 = vld [vmem:[%s12 + $0x4cc] sm:$0xf]
    %v4092 = vld [vmem:[%s12 + $0x4d0] sm:$0xff]
    %v4093 = vld [vmem:[%s12 + $0x4d8] sm:$0xff]
    %v4094 = vld [vmem:[%s12 + $0x4e0] sm:$0xff]
    %v4095 = vld [vmem:[%s12 + $0x4e8] sm:$0xf]
    %v4096 = vld [vmem:[%s12 + $0x4ec] sm:$0xff]
    %v4097 = vld [vmem:[%s12 + $0x4f4] sm:$0xff]
    %v4098 = vld [vmem:[%s12 + $0x4fc] sm:$0xff]
    %v4099 = vld [vmem:[%s12 + $0x504] sm:$0xf]
    %v4100 = vld [vmem:[%s12 + $0x508] sm:$0xff]
    %v4101 = vld [vmem:[%s12 + $0x510] sm:$0xff]
    %v4102 = vld [vmem:[%s12 + $0x518] sm:$0xff]
    %v4103 = vld [vmem:[%s12 + $0x520] sm:$0xf]
    %v4104 = vld [vmem:[%s12 + $0x524] sm:$0xff]
    %v4105 = vld [vmem:[%s12 + $0x52c] sm:$0xff]
    %v4106 = vld [vmem:[%s12 + $0x534] sm:$0xff]
    %v4107 = vld [vmem:[%s12 + $0x53c] sm:$0xf]
    %v4108 = vld [vmem:[%s12 + $0x540] sm:$0xff]
    %v4109 = vld [vmem:[%s12 + $0x548] sm:$0xff]
    %v4110 = vld [vmem:[%s12 + $0x550] sm:$0xff]
    %v4111 = vld [vmem:[%s12 + $0x558] sm:$0xf]
    %v4112 = vld [vmem:[%s12 + $0x55c] sm:$0xff]
    %v4113 = vld [vmem:[%s12 + $0x564] sm:$0xff]
    %v4114 = vld [vmem:[%s12 + $0x56c] sm:$0xff]
    %v4115 = vld [vmem:[%s12 + $0x574] sm:$0xf]
    %v4116 = vld [vmem:[%s12 + $0x578] sm:$0xff]
    %v4117 = vld [vmem:[%s12 + $0x580] sm:$0xff]
    %v4118 = vld [vmem:[%s12 + $0x588] sm:$0xff]
    %v4119 = vld [vmem:[%s12 + $0x590] sm:$0xf]
    %v4120 = vld [vmem:[%s12 + $0x594] sm:$0xff]
    %v4121 = vld [vmem:[%s12 + $0x59c] sm:$0xff]
    %v4122 = vld [vmem:[%s12 + $0x5a4] sm:$0xff]
    %v4123 = vld [vmem:[%s12 + $0x5ac] sm:$0xf]
    %v4124 = vld [vmem:[%s12 + $0x5b0] sm:$0xff]
    %v4125 = vld [vmem:[%s12 + $0x5b8] sm:$0xff]
    %v4126 = vld [vmem:[%s12 + $0x5c0] sm:$0xff]
    %v4127 = vld [vmem:[%s12 + $0x5c8] sm:$0xf]
    %v4128 = vld [vmem:[%s12 + $0x5cc] sm:$0xff]
    %v4129 = vld [vmem:[%s12 + $0x5d4] sm:$0xff]
    %v4130 = vld [vmem:[%s12 + $0x5dc] sm:$0xff]
    %v4131 = vld [vmem:[%s12 + $0x5e4] sm:$0xf]
    %v4132 = vld [vmem:[%s12 + $0x5e8] sm:$0xff]
    %v4133 = vld [vmem:[%s12 + $0x5f0] sm:$0xff]
    %v4134 = vld [vmem:[%s12 + $0x5f8] sm:$0xff]
    %v4135 = vld [vmem:[%s12 + $0x600] sm:$0xf]
    %v4136 = vld [vmem:[%s12 + $0x604] sm:$0xff]
    %v4137 = vld [vmem:[%s12 + $0x60c] sm:$0xff]
    %v4138 = vld [vmem:[%s12 + $0x614] sm:$0xff]
    %v4139 = vld [vmem:[%s12 + $0x61c] sm:$0xf]
    %v4140 = vld [vmem:[%s12 + $0x620] sm:$0xff]
    %v4141 = vld [vmem:[%s12 + $0x628] sm:$0xff]
    %v4142 = vld [vmem:[%s12 + $0x630] sm:$0xff]
    %v4143 = vld [vmem:[%s12 + $0x638] sm:$0xf]
    %v4144 = vld [vmem:[%s12 + $0x63c] sm:$0xff]
    %v4145 = vld [vmem:[%s12 + $0x644] sm:$0xff]
    %v4146 = vld [vmem:[%s12 + $0x64c] sm:$0xff]
    %v4147 = vld [vmem:[%s12 + $0x654] sm:$0xf]
    %v4148 = vld [vmem:[%s12 + $0x658] sm:$0xff]
    %v4149 = vld [vmem:[%s12 + $0x660] sm:$0xff]
    %v4150 = vld [vmem:[%s12 + $0x668] sm:$0xff]
    %v4151 = vld [vmem:[%s12 + $0x670] sm:$0xf]
    %v4152 = vld [vmem:[%s12 + $0x674] sm:$0xff]
    %v4153 = vld [vmem:[%s12 + $0x67c] sm:$0xff]
    %v4154 = vld [vmem:[%s12 + $0x684] sm:$0xff]
    %v4155 = vld [vmem:[%s12 + $0x68c] sm:$0xf]
    %v4156 = vld [vmem:[%s12 + $0x690] sm:$0xff]
    %v4157 = vld [vmem:[%s12 + $0x698] sm:$0xff]
    %v4158 = vld [vmem:[%s12 + $0x6a0] sm:$0xff]
    %v4159 = vld [vmem:[%s12 + $0x6a8] sm:$0xf]
    %v4160 = vld [vmem:[%s12 + $0x6ac] sm:$0xff]
    %v4161 = vld [vmem:[%s12 + $0x6b4] sm:$0xff]
    %v4162 = vld [vmem:[%s12 + $0x6bc] sm:$0xff]
    %v4163 = vld [vmem:[%s12 + $0x6c4] sm:$0xf]
    %v4164 = vld [vmem:[%s12 + $0x6c8] sm:$0xff]
    %v4165 = vld [vmem:[%s12 + $0x6d0] sm:$0xff]
    %v4166 = vld [vmem:[%s12 + $0x6d8] sm:$0xff]
    %v4167 = vld [vmem:[%s12 + $0x6e0] sm:$0xf]
    %v4168 = vld [vmem:[%s12 + $0x6e4] sm:$0xff]
    %v4169 = vld [vmem:[%s12 + $0x6ec] sm:$0xff]
    %v4170 = vld [vmem:[%s12 + $0x6f4] sm:$0xff]
    %v4171 = vld [vmem:[%s12 + $0x6fc] sm:$0xf]
    %v4172 = vld [vmem:[%s13] sm:$0x7f]
    %v4174 = vlaneseq
    %v4175 = vshrl.u32 %v4174, 7
    %v4176 = vsub.s32 0, %v4175
    %v4177 = vrot.slane %v4172, %v4176
    %v4178 = vlaneseq
    %v4179 = vshrl.u32 %v4178, 7
    %v4180 = vsub.s32 1, %v4179
    %v4181 = vrot.slane %v4172, %v4180
    %v4182 = vlaneseq
    %v4183 = vshrl.u32 %v4182, 7
    %v4184 = vsub.s32 2, %v4183
    %v4185 = vrot.slane %v4172, %v4184
    %v4186 = vlaneseq
    %v4187 = vshrl.u32 %v4186, 7
    %v4188 = vsub.s32 3, %v4187
    %v4189 = vrot.slane %v4172, %v4188
    %v4190 = vlaneseq
    %v4191 = vshrl.u32 %v4190, 7
    %v4192 = vsub.s32 4, %v4191
    %v4193 = vrot.slane %v4172, %v4192
    %v4194 = vlaneseq
    %v4195 = vshrl.u32 %v4194, 7
    %v4196 = vsub.s32 5, %v4195
    %v4197 = vrot.slane %v4172, %v4196
    %v4198 = vlaneseq
    %v4199 = vshrl.u32 %v4198, 7
    %v4200 = vsub.s32 6, %v4199
    %v4201 = vrot.slane %v4172, %v4200
    %v4465 = vunpack.c.l.b16 %v3916
    %v4466 = vunpack.c.h.b16 %v3916
    %v4467 = vunpack.c.l.b16 %v3917
    %v4468 = vunpack.c.h.b16 %v3917
    %v4469 = vunpack.c.l.b16 %v3918
    %v4470 = vunpack.c.h.b16 %v3918
    %v4471 = vunpack.c.l.b16 %v3919
    %v4472 = vunpack.c.l.b16 %v3920
    %v4473 = vunpack.c.h.b16 %v3920
    %v4474 = vunpack.c.l.b16 %v3921
    %v4475 = vunpack.c.h.b16 %v3921
    %v4476 = vunpack.c.l.b16 %v3922
    %v4477 = vunpack.c.h.b16 %v3922
    %v4478 = vunpack.c.l.b16 %v3923
    %v4479 = vunpack.c.l.b16 %v3924
    %v4480 = vunpack.c.h.b16 %v3924
    %v4481 = vunpack.c.l.b16 %v3925
    %v4482 = vunpack.c.h.b16 %v3925
    %v4483 = vunpack.c.l.b16 %v3926
    %v4484 = vunpack.c.h.b16 %v3926
    %v4485 = vunpack.c.l.b16 %v3927
    %v4486 = vunpack.c.l.b16 %v3928
    %v4487 = vunpack.c.h.b16 %v3928
    %v4488 = vunpack.c.l.b16 %v3929
    %v4489 = vunpack.c.h.b16 %v3929
    %v4490 = vunpack.c.l.b16 %v3930
    %v4491 = vunpack.c.h.b16 %v3930
    %v4492 = vunpack.c.l.b16 %v3931
    %v4493 = vunpack.c.l.b16 %v3932
    %v4494 = vunpack.c.h.b16 %v3932
    %v4495 = vunpack.c.l.b16 %v3933
    %v4496 = vunpack.c.h.b16 %v3933
    %v4497 = vunpack.c.l.b16 %v3934
    %v4498 = vunpack.c.h.b16 %v3934
    %v4499 = vunpack.c.l.b16 %v3935
    %v4500 = vunpack.c.l.b16 %v3936
    %v4501 = vunpack.c.h.b16 %v3936
    %v4502 = vunpack.c.l.b16 %v3937
    %v4503 = vunpack.c.h.b16 %v3937
    %v4504 = vunpack.c.l.b16 %v3938
    %v4505 = vunpack.c.h.b16 %v3938
    %v4506 = vunpack.c.l.b16 %v3939
    %v4507 = vunpack.c.l.b16 %v3940
    %v4508 = vunpack.c.h.b16 %v3940
    %v4509 = vunpack.c.l.b16 %v3941
    %v4510 = vunpack.c.h.b16 %v3941
    %v4511 = vunpack.c.l.b16 %v3942
    %v4512 = vunpack.c.h.b16 %v3942
    %v4513 = vunpack.c.l.b16 %v3943
    %v4514 = vunpack.c.l.b16 %v3944
    %v4515 = vunpack.c.h.b16 %v3944
    %v4516 = vunpack.c.l.b16 %v3945
    %v4517 = vunpack.c.h.b16 %v3945
    %v4518 = vunpack.c.l.b16 %v3946
    %v4519 = vunpack.c.h.b16 %v3946
    %v4520 = vunpack.c.l.b16 %v3947
    %v4521 = vunpack.c.l.b16 %v3948
    %v4522 = vunpack.c.h.b16 %v3948
    %v4523 = vunpack.c.l.b16 %v3949
    %v4524 = vunpack.c.h.b16 %v3949
    %v4525 = vunpack.c.l.b16 %v3950
    %v4526 = vunpack.c.h.b16 %v3950
    %v4527 = vunpack.c.l.b16 %v3951
    %v4528 = vunpack.c.l.b16 %v3952
    %v4529 = vunpack.c.h.b16 %v3952
    %v4530 = vunpack.c.l.b16 %v3953
    %v4531 = vunpack.c.h.b16 %v3953
    %v4532 = vunpack.c.l.b16 %v3954
    %v4533 = vunpack.c.h.b16 %v3954
    %v4534 = vunpack.c.l.b16 %v3955
    %v4535 = vunpack.c.l.b16 %v3956
    %v4536 = vunpack.c.h.b16 %v3956
    %v4537 = vunpack.c.l.b16 %v3957
    %v4538 = vunpack.c.h.b16 %v3957
    %v4539 = vunpack.c.l.b16 %v3958
    %v4540 = vunpack.c.h.b16 %v3958
    %v4541 = vunpack.c.l.b16 %v3959
    %v4542 = vunpack.c.l.b16 %v3960
    %v4543 = vunpack.c.h.b16 %v3960
    %v4544 = vunpack.c.l.b16 %v3961
    %v4545 = vunpack.c.h.b16 %v3961
    %v4546 = vunpack.c.l.b16 %v3962
    %v4547 = vunpack.c.h.b16 %v3962
    %v4548 = vunpack.c.l.b16 %v3963
    %v4549 = vunpack.c.l.b16 %v3964
    %v4550 = vunpack.c.h.b16 %v3964
    %v4551 = vunpack.c.l.b16 %v3965
    %v4552 = vunpack.c.h.b16 %v3965
    %v4553 = vunpack.c.l.b16 %v3966
    %v4554 = vunpack.c.h.b16 %v3966
    %v4555 = vunpack.c.l.b16 %v3967
    %v4556 = vunpack.c.l.b16 %v3968
    %v4557 = vunpack.c.h.b16 %v3968
    %v4558 = vunpack.c.l.b16 %v3969
    %v4559 = vunpack.c.h.b16 %v3969
    %v4560 = vunpack.c.l.b16 %v3970
    %v4561 = vunpack.c.h.b16 %v3970
    %v4562 = vunpack.c.l.b16 %v3971
    %v4563 = vunpack.c.l.b16 %v3972
    %v4564 = vunpack.c.h.b16 %v3972
    %v4565 = vunpack.c.l.b16 %v3973
    %v4566 = vunpack.c.h.b16 %v3973
    %v4567 = vunpack.c.l.b16 %v3974
    %v4568 = vunpack.c.h.b16 %v3974
    %v4569 = vunpack.c.l.b16 %v3975
    %v4570 = vunpack.c.l.b16 %v3976
    %v4571 = vunpack.c.h.b16 %v3976
    %v4572 = vunpack.c.l.b16 %v3977
    %v4573 = vunpack.c.h.b16 %v3977
    %v4574 = vunpack.c.l.b16 %v3978
    %v4575 = vunpack.c.h.b16 %v3978
    %v4576 = vunpack.c.l.b16 %v3979
    %v4577 = vunpack.c.l.b16 %v3980
    %v4578 = vunpack.c.h.b16 %v3980
    %v4579 = vunpack.c.l.b16 %v3981
    %v4580 = vunpack.c.h.b16 %v3981
    %v4581 = vunpack.c.l.b16 %v3982
    %v4582 = vunpack.c.h.b16 %v3982
    %v4583 = vunpack.c.l.b16 %v3983
    %v4584 = vunpack.c.l.b16 %v3984
    %v4585 = vunpack.c.h.b16 %v3984
    %v4586 = vunpack.c.l.b16 %v3985
    %v4587 = vunpack.c.h.b16 %v3985
    %v4588 = vunpack.c.l.b16 %v3986
    %v4589 = vunpack.c.h.b16 %v3986
    %v4590 = vunpack.c.l.b16 %v3987
    %v4591 = vunpack.c.l.b16 %v3988
    %v4592 = vunpack.c.h.b16 %v3988
    %v4593 = vunpack.c.l.b16 %v3989
    %v4594 = vunpack.c.h.b16 %v3989
    %v4595 = vunpack.c.l.b16 %v3990
    %v4596 = vunpack.c.h.b16 %v3990
    %v4597 = vunpack.c.l.b16 %v3991
    %v4598 = vunpack.c.l.b16 %v3992
    %v4599 = vunpack.c.h.b16 %v3992
    %v4600 = vunpack.c.l.b16 %v3993
    %v4601 = vunpack.c.h.b16 %v3993
    %v4602 = vunpack.c.l.b16 %v3994
    %v4603 = vunpack.c.h.b16 %v3994
    %v4604 = vunpack.c.l.b16 %v3995
    %v4605 = vunpack.c.l.b16 %v3996
    %v4606 = vunpack.c.h.b16 %v3996
    %v4607 = vunpack.c.l.b16 %v3997
    %v4608 = vunpack.c.h.b16 %v3997
    %v4609 = vunpack.c.l.b16 %v3998
    %v4610 = vunpack.c.h.b16 %v3998
    %v4611 = vunpack.c.l.b16 %v3999
    %v4612 = vunpack.c.l.b16 %v4000
    %v4613 = vunpack.c.h.b16 %v4000
    %v4614 = vunpack.c.l.b16 %v4001
    %v4615 = vunpack.c.h.b16 %v4001
    %v4616 = vunpack.c.l.b16 %v4002
    %v4617 = vunpack.c.h.b16 %v4002
    %v4618 = vunpack.c.l.b16 %v4003
    %v4619 = vunpack.c.l.b16 %v4004
    %v4620 = vunpack.c.h.b16 %v4004
    %v4621 = vunpack.c.l.b16 %v4005
    %v4622 = vunpack.c.h.b16 %v4005
    %v4623 = vunpack.c.l.b16 %v4006
    %v4624 = vunpack.c.h.b16 %v4006
    %v4625 = vunpack.c.l.b16 %v4007
    %v4626 = vunpack.c.l.b16 %v4008
    %v4627 = vunpack.c.h.b16 %v4008
    %v4628 = vunpack.c.l.b16 %v4009
    %v4629 = vunpack.c.h.b16 %v4009
    %v4630 = vunpack.c.l.b16 %v4010
    %v4631 = vunpack.c.h.b16 %v4010
    %v4632 = vunpack.c.l.b16 %v4011
    %v4633 = vunpack.c.l.b16 %v4012
    %v4634 = vunpack.c.h.b16 %v4012
    %v4635 = vunpack.c.l.b16 %v4013
    %v4636 = vunpack.c.h.b16 %v4013
    %v4637 = vunpack.c.l.b16 %v4014
    %v4638 = vunpack.c.h.b16 %v4014
    %v4639 = vunpack.c.l.b16 %v4015
    %v4640 = vunpack.c.l.b16 %v4016
    %v4641 = vunpack.c.h.b16 %v4016
    %v4642 = vunpack.c.l.b16 %v4017
    %v4643 = vunpack.c.h.b16 %v4017
    %v4644 = vunpack.c.l.b16 %v4018
    %v4645 = vunpack.c.h.b16 %v4018
    %v4646 = vunpack.c.l.b16 %v4019
    %v4647 = vunpack.c.l.b16 %v4020
    %v4648 = vunpack.c.h.b16 %v4020
    %v4649 = vunpack.c.l.b16 %v4021
    %v4650 = vunpack.c.h.b16 %v4021
    %v4651 = vunpack.c.l.b16 %v4022
    %v4652 = vunpack.c.h.b16 %v4022
    %v4653 = vunpack.c.l.b16 %v4023
    %v4654 = vunpack.c.l.b16 %v4024
    %v4655 = vunpack.c.h.b16 %v4024
    %v4656 = vunpack.c.l.b16 %v4025
    %v4657 = vunpack.c.h.b16 %v4025
    %v4658 = vunpack.c.l.b16 %v4026
    %v4659 = vunpack.c.h.b16 %v4026
    %v4660 = vunpack.c.l.b16 %v4027
    %v4661 = vunpack.c.l.b16 %v4028
    %v4662 = vunpack.c.h.b16 %v4028
    %v4663 = vunpack.c.l.b16 %v4029
    %v4664 = vunpack.c.h.b16 %v4029
    %v4665 = vunpack.c.l.b16 %v4030
    %v4666 = vunpack.c.h.b16 %v4030
    %v4667 = vunpack.c.l.b16 %v4031
    %v4668 = vunpack.c.l.b16 %v4032
    %v4669 = vunpack.c.h.b16 %v4032
    %v4670 = vunpack.c.l.b16 %v4033
    %v4671 = vunpack.c.h.b16 %v4033
    %v4672 = vunpack.c.l.b16 %v4034
    %v4673 = vunpack.c.h.b16 %v4034
    %v4674 = vunpack.c.l.b16 %v4035
    %v4675 = vunpack.c.l.b16 %v4036
    %v4676 = vunpack.c.h.b16 %v4036
    %v4677 = vunpack.c.l.b16 %v4037
    %v4678 = vunpack.c.h.b16 %v4037
    %v4679 = vunpack.c.l.b16 %v4038
    %v4680 = vunpack.c.h.b16 %v4038
    %v4681 = vunpack.c.l.b16 %v4039
    %v4682 = vunpack.c.l.b16 %v4040
    %v4683 = vunpack.c.h.b16 %v4040
    %v4684 = vunpack.c.l.b16 %v4041
    %v4685 = vunpack.c.h.b16 %v4041
    %v4686 = vunpack.c.l.b16 %v4042
    %v4687 = vunpack.c.h.b16 %v4042
    %v4688 = vunpack.c.l.b16 %v4043
    %v4689 = vunpack.c.l.b16 %v4044
    %v4690 = vunpack.c.h.b16 %v4044
    %v4691 = vunpack.c.l.b16 %v4045
    %v4692 = vunpack.c.h.b16 %v4045
    %v4693 = vunpack.c.l.b16 %v4046
    %v4694 = vunpack.c.h.b16 %v4046
    %v4695 = vunpack.c.l.b16 %v4047
    %v4696 = vunpack.c.l.b16 %v4048
    %v4697 = vunpack.c.h.b16 %v4048
    %v4698 = vunpack.c.l.b16 %v4049
    %v4699 = vunpack.c.h.b16 %v4049
    %v4700 = vunpack.c.l.b16 %v4050
    %v4701 = vunpack.c.h.b16 %v4050
    %v4702 = vunpack.c.l.b16 %v4051
    %v4703 = vunpack.c.l.b16 %v4052
    %v4704 = vunpack.c.h.b16 %v4052
    %v4705 = vunpack.c.l.b16 %v4053
    %v4706 = vunpack.c.h.b16 %v4053
    %v4707 = vunpack.c.l.b16 %v4054
    %v4708 = vunpack.c.h.b16 %v4054
    %v4709 = vunpack.c.l.b16 %v4055
    %v4710 = vunpack.c.l.b16 %v4056
    %v4711 = vunpack.c.h.b16 %v4056
    %v4712 = vunpack.c.l.b16 %v4057
    %v4713 = vunpack.c.h.b16 %v4057
    %v4714 = vunpack.c.l.b16 %v4058
    %v4715 = vunpack.c.h.b16 %v4058
    %v4716 = vunpack.c.l.b16 %v4059
    %v4717 = vunpack.c.l.b16 %v4060
    %v4718 = vunpack.c.h.b16 %v4060
    %v4719 = vunpack.c.l.b16 %v4061
    %v4720 = vunpack.c.h.b16 %v4061
    %v4721 = vunpack.c.l.b16 %v4062
    %v4722 = vunpack.c.h.b16 %v4062
    %v4723 = vunpack.c.l.b16 %v4063
    %v4724 = vunpack.c.l.b16 %v4064
    %v4725 = vunpack.c.h.b16 %v4064
    %v4726 = vunpack.c.l.b16 %v4065
    %v4727 = vunpack.c.h.b16 %v4065
    %v4728 = vunpack.c.l.b16 %v4066
    %v4729 = vunpack.c.h.b16 %v4066
    %v4730 = vunpack.c.l.b16 %v4067
    %v4731 = vunpack.c.l.b16 %v4068
    %v4732 = vunpack.c.h.b16 %v4068
    %v4733 = vunpack.c.l.b16 %v4069
    %v4734 = vunpack.c.h.b16 %v4069
    %v4735 = vunpack.c.l.b16 %v4070
    %v4736 = vunpack.c.h.b16 %v4070
    %v4737 = vunpack.c.l.b16 %v4071
    %v4738 = vunpack.c.l.b16 %v4072
    %v4739 = vunpack.c.h.b16 %v4072
    %v4740 = vunpack.c.l.b16 %v4073
    %v4741 = vunpack.c.h.b16 %v4073
    %v4742 = vunpack.c.l.b16 %v4074
    %v4743 = vunpack.c.h.b16 %v4074
    %v4744 = vunpack.c.l.b16 %v4075
    %v4745 = vunpack.c.l.b16 %v4076
    %v4746 = vunpack.c.h.b16 %v4076
    %v4747 = vunpack.c.l.b16 %v4077
    %v4748 = vunpack.c.h.b16 %v4077
    %v4749 = vunpack.c.l.b16 %v4078
    %v4750 = vunpack.c.h.b16 %v4078
    %v4751 = vunpack.c.l.b16 %v4079
    %v4752 = vunpack.c.l.b16 %v4080
    %v4753 = vunpack.c.h.b16 %v4080
    %v4754 = vunpack.c.l.b16 %v4081
    %v4755 = vunpack.c.h.b16 %v4081
    %v4756 = vunpack.c.l.b16 %v4082
    %v4757 = vunpack.c.h.b16 %v4082
    %v4758 = vunpack.c.l.b16 %v4083
    %v4759 = vunpack.c.l.b16 %v4084
    %v4760 = vunpack.c.h.b16 %v4084
    %v4761 = vunpack.c.l.b16 %v4085
    %v4762 = vunpack.c.h.b16 %v4085
    %v4763 = vunpack.c.l.b16 %v4086
    %v4764 = vunpack.c.h.b16 %v4086
    %v4765 = vunpack.c.l.b16 %v4087
    %v4766 = vunpack.c.l.b16 %v4088
    %v4767 = vunpack.c.h.b16 %v4088
    %v4768 = vunpack.c.l.b16 %v4089
    %v4769 = vunpack.c.h.b16 %v4089
    %v4770 = vunpack.c.l.b16 %v4090
    %v4771 = vunpack.c.h.b16 %v4090
    %v4772 = vunpack.c.l.b16 %v4091
    %v4773 = vunpack.c.l.b16 %v4092
    %v4774 = vunpack.c.h.b16 %v4092
    %v4775 = vunpack.c.l.b16 %v4093
    %v4776 = vunpack.c.h.b16 %v4093
    %v4777 = vunpack.c.l.b16 %v4094
    %v4778 = vunpack.c.h.b16 %v4094
    %v4779 = vunpack.c.l.b16 %v4095
    %v4780 = vunpack.c.l.b16 %v4096
    %v4781 = vunpack.c.h.b16 %v4096
    %v4782 = vunpack.c.l.b16 %v4097
    %v4783 = vunpack.c.h.b16 %v4097
    %v4784 = vunpack.c.l.b16 %v4098
    %v4785 = vunpack.c.h.b16 %v4098
    %v4786 = vunpack.c.l.b16 %v4099
    %v4787 = vunpack.c.l.b16 %v4100
    %v4788 = vunpack.c.h.b16 %v4100
    %v4789 = vunpack.c.l.b16 %v4101
    %v4790 = vunpack.c.h.b16 %v4101
    %v4791 = vunpack.c.l.b16 %v4102
    %v4792 = vunpack.c.h.b16 %v4102
    %v4793 = vunpack.c.l.b16 %v4103
    %v4794 = vunpack.c.l.b16 %v4104
    %v4795 = vunpack.c.h.b16 %v4104
    %v4796 = vunpack.c.l.b16 %v4105
    %v4797 = vunpack.c.h.b16 %v4105
    %v4798 = vunpack.c.l.b16 %v4106
    %v4799 = vunpack.c.h.b16 %v4106
    %v4800 = vunpack.c.l.b16 %v4107
    %v4801 = vunpack.c.l.b16 %v4108
    %v4802 = vunpack.c.h.b16 %v4108
    %v4803 = vunpack.c.l.b16 %v4109
    %v4804 = vunpack.c.h.b16 %v4109
    %v4805 = vunpack.c.l.b16 %v4110
    %v4806 = vunpack.c.h.b16 %v4110
    %v4807 = vunpack.c.l.b16 %v4111
    %v4808 = vunpack.c.l.b16 %v4112
    %v4809 = vunpack.c.h.b16 %v4112
    %v4810 = vunpack.c.l.b16 %v4113
    %v4811 = vunpack.c.h.b16 %v4113
    %v4812 = vunpack.c.l.b16 %v4114
    %v4813 = vunpack.c.h.b16 %v4114
    %v4814 = vunpack.c.l.b16 %v4115
    %v4815 = vunpack.c.l.b16 %v4116
    %v4816 = vunpack.c.h.b16 %v4116
    %v4817 = vunpack.c.l.b16 %v4117
    %v4818 = vunpack.c.h.b16 %v4117
    %v4819 = vunpack.c.l.b16 %v4118
    %v4820 = vunpack.c.h.b16 %v4118
    %v4821 = vunpack.c.l.b16 %v4119
    %v4822 = vunpack.c.l.b16 %v4120
    %v4823 = vunpack.c.h.b16 %v4120
    %v4824 = vunpack.c.l.b16 %v4121
    %v4825 = vunpack.c.h.b16 %v4121
    %v4826 = vunpack.c.l.b16 %v4122
    %v4827 = vunpack.c.h.b16 %v4122
    %v4828 = vunpack.c.l.b16 %v4123
    %v4829 = vunpack.c.l.b16 %v4124
    %v4830 = vunpack.c.h.b16 %v4124
    %v4831 = vunpack.c.l.b16 %v4125
    %v4832 = vunpack.c.h.b16 %v4125
    %v4833 = vunpack.c.l.b16 %v4126
    %v4834 = vunpack.c.h.b16 %v4126
    %v4835 = vunpack.c.l.b16 %v4127
    %v4836 = vunpack.c.l.b16 %v4128
    %v4837 = vunpack.c.h.b16 %v4128
    %v4838 = vunpack.c.l.b16 %v4129
    %v4839 = vunpack.c.h.b16 %v4129
    %v4840 = vunpack.c.l.b16 %v4130
    %v4841 = vunpack.c.h.b16 %v4130
    %v4842 = vunpack.c.l.b16 %v4131
    %v4843 = vunpack.c.l.b16 %v4132
    %v4844 = vunpack.c.h.b16 %v4132
    %v4845 = vunpack.c.l.b16 %v4133
    %v4846 = vunpack.c.h.b16 %v4133
    %v4847 = vunpack.c.l.b16 %v4134
    %v4848 = vunpack.c.h.b16 %v4134
    %v4849 = vunpack.c.l.b16 %v4135
    %v4850 = vunpack.c.l.b16 %v4136
    %v4851 = vunpack.c.h.b16 %v4136
    %v4852 = vunpack.c.l.b16 %v4137
    %v4853 = vunpack.c.h.b16 %v4137
    %v4854 = vunpack.c.l.b16 %v4138
    %v4855 = vunpack.c.h.b16 %v4138
    %v4856 = vunpack.c.l.b16 %v4139
    %v4857 = vunpack.c.l.b16 %v4140
    %v4858 = vunpack.c.h.b16 %v4140
    %v4859 = vunpack.c.l.b16 %v4141
    %v4860 = vunpack.c.h.b16 %v4141
    %v4861 = vunpack.c.l.b16 %v4142
    %v4862 = vunpack.c.h.b16 %v4142
    %v4863 = vunpack.c.l.b16 %v4143
    %v4864 = vunpack.c.l.b16 %v4144
    %v4865 = vunpack.c.h.b16 %v4144
    %v4866 = vunpack.c.l.b16 %v4145
    %v4867 = vunpack.c.h.b16 %v4145
    %v4868 = vunpack.c.l.b16 %v4146
    %v4869 = vunpack.c.h.b16 %v4146
    %v4870 = vunpack.c.l.b16 %v4147
    %v4871 = vunpack.c.l.b16 %v4148
    %v4872 = vunpack.c.h.b16 %v4148
    %v4873 = vunpack.c.l.b16 %v4149
    %v4874 = vunpack.c.h.b16 %v4149
    %v4875 = vunpack.c.l.b16 %v4150
    %v4876 = vunpack.c.h.b16 %v4150
    %v4877 = vunpack.c.l.b16 %v4151
    %v4878 = vunpack.c.l.b16 %v4152
    %v4879 = vunpack.c.h.b16 %v4152
    %v4880 = vunpack.c.l.b16 %v4153
    %v4881 = vunpack.c.h.b16 %v4153
    %v4882 = vunpack.c.l.b16 %v4154
    %v4883 = vunpack.c.h.b16 %v4154
    %v4884 = vunpack.c.l.b16 %v4155
    %v4885 = vunpack.c.l.b16 %v4156
    %v4886 = vunpack.c.h.b16 %v4156
    %v4887 = vunpack.c.l.b16 %v4157
    %v4888 = vunpack.c.h.b16 %v4157
    %v4889 = vunpack.c.l.b16 %v4158
    %v4890 = vunpack.c.h.b16 %v4158
    %v4891 = vunpack.c.l.b16 %v4159
    %v4892 = vunpack.c.l.b16 %v4160
    %v4893 = vunpack.c.h.b16 %v4160
    %v4894 = vunpack.c.l.b16 %v4161
    %v4895 = vunpack.c.h.b16 %v4161
    %v4896 = vunpack.c.l.b16 %v4162
    %v4897 = vunpack.c.h.b16 %v4162
    %v4898 = vunpack.c.l.b16 %v4163
    %v4899 = vunpack.c.l.b16 %v4164
    %v4900 = vunpack.c.h.b16 %v4164
    %v4901 = vunpack.c.l.b16 %v4165
    %v4902 = vunpack.c.h.b16 %v4165
    %v4903 = vunpack.c.l.b16 %v4166
    %v4904 = vunpack.c.h.b16 %v4166
    %v4905 = vunpack.c.l.b16 %v4167
    %v4906 = vunpack.c.l.b16 %v4168
    %v4907 = vunpack.c.h.b16 %v4168
    %v4908 = vunpack.c.l.b16 %v4169
    %v4909 = vunpack.c.h.b16 %v4169
    %v4910 = vunpack.c.l.b16 %v4170
    %v4911 = vunpack.c.h.b16 %v4170
    %v4912 = vunpack.c.l.b16 %v4171
    %v4913 = vpack.c.b16 %v4472, %v4465
    %v4914 = vpack.c.b16 %v4473, %v4466
    %v4915 = vpack.c.b16 %v4474, %v4467
    %v4916 = vpack.c.b16 %v4475, %v4468
    %v4917 = vpack.c.b16 %v4476, %v4469
    %v4918 = vpack.c.b16 %v4477, %v4470
    %v4919 = vpack.c.b16 %v4478, %v4471
    %v4920 = vpack.c.b16 %v4486, %v4479
    %v4921 = vpack.c.b16 %v4487, %v4480
    %v4922 = vpack.c.b16 %v4488, %v4481
    %v4923 = vpack.c.b16 %v4489, %v4482
    %v4924 = vpack.c.b16 %v4490, %v4483
    %v4925 = vpack.c.b16 %v4491, %v4484
    %v4926 = vpack.c.b16 %v4492, %v4485
    %v4927 = vpack.c.b16 %v4500, %v4493
    %v4928 = vpack.c.b16 %v4501, %v4494
    %v4929 = vpack.c.b16 %v4502, %v4495
    %v4930 = vpack.c.b16 %v4503, %v4496
    %v4931 = vpack.c.b16 %v4504, %v4497
    %v4932 = vpack.c.b16 %v4505, %v4498
    %v4933 = vpack.c.b16 %v4506, %v4499
    %v4934 = vpack.c.b16 %v4514, %v4507
    %v4935 = vpack.c.b16 %v4515, %v4508
    %v4936 = vpack.c.b16 %v4516, %v4509
    %v4937 = vpack.c.b16 %v4517, %v4510
    %v4938 = vpack.c.b16 %v4518, %v4511
    %v4939 = vpack.c.b16 %v4519, %v4512
    %v4940 = vpack.c.b16 %v4520, %v4513
    %v4941 = vpack.c.b16 %v4528, %v4521
    %v4942 = vpack.c.b16 %v4529, %v4522
    %v4943 = vpack.c.b16 %v4530, %v4523
    %v4944 = vpack.c.b16 %v4531, %v4524
    %v4945 = vpack.c.b16 %v4532, %v4525
    %v4946 = vpack.c.b16 %v4533, %v4526
    %v4947 = vpack.c.b16 %v4534, %v4527
    %v4948 = vpack.c.b16 %v4542, %v4535
    %v4949 = vpack.c.b16 %v4543, %v4536
    %v4950 = vpack.c.b16 %v4544, %v4537
    %v4951 = vpack.c.b16 %v4545, %v4538
    %v4952 = vpack.c.b16 %v4546, %v4539
    %v4953 = vpack.c.b16 %v4547, %v4540
    %v4954 = vpack.c.b16 %v4548, %v4541
    %v4955 = vpack.c.b16 %v4556, %v4549
    %v4956 = vpack.c.b16 %v4557, %v4550
    %v4957 = vpack.c.b16 %v4558, %v4551
    %v4958 = vpack.c.b16 %v4559, %v4552
    %v4959 = vpack.c.b16 %v4560, %v4553
    %v4960 = vpack.c.b16 %v4561, %v4554
    %v4961 = vpack.c.b16 %v4562, %v4555
    %v4962 = vpack.c.b16 %v4570, %v4563
    %v4963 = vpack.c.b16 %v4571, %v4564
    %v4964 = vpack.c.b16 %v4572, %v4565
    %v4965 = vpack.c.b16 %v4573, %v4566
    %v4966 = vpack.c.b16 %v4574, %v4567
    %v4967 = vpack.c.b16 %v4575, %v4568
    %v4968 = vpack.c.b16 %v4576, %v4569
    %v4969 = vpack.c.b16 %v4584, %v4577
    %v4970 = vpack.c.b16 %v4585, %v4578
    %v4971 = vpack.c.b16 %v4586, %v4579
    %v4972 = vpack.c.b16 %v4587, %v4580
    %v4973 = vpack.c.b16 %v4588, %v4581
    %v4974 = vpack.c.b16 %v4589, %v4582
    %v4975 = vpack.c.b16 %v4590, %v4583
    %v4976 = vpack.c.b16 %v4598, %v4591
    %v4977 = vpack.c.b16 %v4599, %v4592
    %v4978 = vpack.c.b16 %v4600, %v4593
    %v4979 = vpack.c.b16 %v4601, %v4594
    %v4980 = vpack.c.b16 %v4602, %v4595
    %v4981 = vpack.c.b16 %v4603, %v4596
    %v4982 = vpack.c.b16 %v4604, %v4597
    %v4983 = vpack.c.b16 %v4612, %v4605
    %v4984 = vpack.c.b16 %v4613, %v4606
    %v4985 = vpack.c.b16 %v4614, %v4607
    %v4986 = vpack.c.b16 %v4615, %v4608
    %v4987 = vpack.c.b16 %v4616, %v4609
    %v4988 = vpack.c.b16 %v4617, %v4610
    %v4989 = vpack.c.b16 %v4618, %v4611
    %v4990 = vpack.c.b16 %v4626, %v4619
    %v4991 = vpack.c.b16 %v4627, %v4620
    %v4992 = vpack.c.b16 %v4628, %v4621
    %v4993 = vpack.c.b16 %v4629, %v4622
    %v4994 = vpack.c.b16 %v4630, %v4623
    %v4995 = vpack.c.b16 %v4631, %v4624
    %v4996 = vpack.c.b16 %v4632, %v4625
    %v4997 = vpack.c.b16 %v4640, %v4633
    %v4998 = vpack.c.b16 %v4641, %v4634
    %v4999 = vpack.c.b16 %v4642, %v4635
    %v5000 = vpack.c.b16 %v4643, %v4636
    %v5001 = vpack.c.b16 %v4644, %v4637
    %v5002 = vpack.c.b16 %v4645, %v4638
    %v5003 = vpack.c.b16 %v4646, %v4639
    %v5004 = vpack.c.b16 %v4654, %v4647
    %v5005 = vpack.c.b16 %v4655, %v4648
    %v5006 = vpack.c.b16 %v4656, %v4649
    %v5007 = vpack.c.b16 %v4657, %v4650
    %v5008 = vpack.c.b16 %v4658, %v4651
    %v5009 = vpack.c.b16 %v4659, %v4652
    %v5010 = vpack.c.b16 %v4660, %v4653
    %v5011 = vpack.c.b16 %v4668, %v4661
    %v5012 = vpack.c.b16 %v4669, %v4662
    %v5013 = vpack.c.b16 %v4670, %v4663
    %v5014 = vpack.c.b16 %v4671, %v4664
    %v5015 = vpack.c.b16 %v4672, %v4665
    %v5016 = vpack.c.b16 %v4673, %v4666
    %v5017 = vpack.c.b16 %v4674, %v4667
    %v5018 = vpack.c.b16 %v4682, %v4675
    %v5019 = vpack.c.b16 %v4683, %v4676
    %v5020 = vpack.c.b16 %v4684, %v4677
    %v5021 = vpack.c.b16 %v4685, %v4678
    %v5022 = vpack.c.b16 %v4686, %v4679
    %v5023 = vpack.c.b16 %v4687, %v4680
    %v5024 = vpack.c.b16 %v4688, %v4681
    %v5025 = vpack.c.b16 %v4696, %v4689
    %v5026 = vpack.c.b16 %v4697, %v4690
    %v5027 = vpack.c.b16 %v4698, %v4691
    %v5028 = vpack.c.b16 %v4699, %v4692
    %v5029 = vpack.c.b16 %v4700, %v4693
    %v5030 = vpack.c.b16 %v4701, %v4694
    %v5031 = vpack.c.b16 %v4702, %v4695
    %v5032 = vpack.c.b16 %v4710, %v4703
    %v5033 = vpack.c.b16 %v4711, %v4704
    %v5034 = vpack.c.b16 %v4712, %v4705
    %v5035 = vpack.c.b16 %v4713, %v4706
    %v5036 = vpack.c.b16 %v4714, %v4707
    %v5037 = vpack.c.b16 %v4715, %v4708
    %v5038 = vpack.c.b16 %v4716, %v4709
    %v5039 = vpack.c.b16 %v4724, %v4717
    %v5040 = vpack.c.b16 %v4725, %v4718
    %v5041 = vpack.c.b16 %v4726, %v4719
    %v5042 = vpack.c.b16 %v4727, %v4720
    %v5043 = vpack.c.b16 %v4728, %v4721
    %v5044 = vpack.c.b16 %v4729, %v4722
    %v5045 = vpack.c.b16 %v4730, %v4723
    %v5046 = vpack.c.b16 %v4738, %v4731
    %v5047 = vpack.c.b16 %v4739, %v4732
    %v5048 = vpack.c.b16 %v4740, %v4733
    %v5049 = vpack.c.b16 %v4741, %v4734
    %v5050 = vpack.c.b16 %v4742, %v4735
    %v5051 = vpack.c.b16 %v4743, %v4736
    %v5052 = vpack.c.b16 %v4744, %v4737
    %v5053 = vpack.c.b16 %v4752, %v4745
    %v5054 = vpack.c.b16 %v4753, %v4746
    %v5055 = vpack.c.b16 %v4754, %v4747
    %v5056 = vpack.c.b16 %v4755, %v4748
    %v5057 = vpack.c.b16 %v4756, %v4749
    %v5058 = vpack.c.b16 %v4757, %v4750
    %v5059 = vpack.c.b16 %v4758, %v4751
    %v5060 = vpack.c.b16 %v4766, %v4759
    %v5061 = vpack.c.b16 %v4767, %v4760
    %v5062 = vpack.c.b16 %v4768, %v4761
    %v5063 = vpack.c.b16 %v4769, %v4762
    %v5064 = vpack.c.b16 %v4770, %v4763
    %v5065 = vpack.c.b16 %v4771, %v4764
    %v5066 = vpack.c.b16 %v4772, %v4765
    %v5067 = vpack.c.b16 %v4780, %v4773
    %v5068 = vpack.c.b16 %v4781, %v4774
    %v5069 = vpack.c.b16 %v4782, %v4775
    %v5070 = vpack.c.b16 %v4783, %v4776
    %v5071 = vpack.c.b16 %v4784, %v4777
    %v5072 = vpack.c.b16 %v4785, %v4778
    %v5073 = vpack.c.b16 %v4786, %v4779
    %v5074 = vpack.c.b16 %v4794, %v4787
    %v5075 = vpack.c.b16 %v4795, %v4788
    %v5076 = vpack.c.b16 %v4796, %v4789
    %v5077 = vpack.c.b16 %v4797, %v4790
    %v5078 = vpack.c.b16 %v4798, %v4791
    %v5079 = vpack.c.b16 %v4799, %v4792
    %v5080 = vpack.c.b16 %v4800, %v4793
    %v5081 = vpack.c.b16 %v4808, %v4801
    %v5082 = vpack.c.b16 %v4809, %v4802
    %v5083 = vpack.c.b16 %v4810, %v4803
    %v5084 = vpack.c.b16 %v4811, %v4804
    %v5085 = vpack.c.b16 %v4812, %v4805
    %v5086 = vpack.c.b16 %v4813, %v4806
    %v5087 = vpack.c.b16 %v4814, %v4807
    %v5088 = vpack.c.b16 %v4822, %v4815
    %v5089 = vpack.c.b16 %v4823, %v4816
    %v5090 = vpack.c.b16 %v4824, %v4817
    %v5091 = vpack.c.b16 %v4825, %v4818
    %v5092 = vpack.c.b16 %v4826, %v4819
    %v5093 = vpack.c.b16 %v4827, %v4820
    %v5094 = vpack.c.b16 %v4828, %v4821
    %v5095 = vpack.c.b16 %v4836, %v4829
    %v5096 = vpack.c.b16 %v4837, %v4830
    %v5097 = vpack.c.b16 %v4838, %v4831
    %v5098 = vpack.c.b16 %v4839, %v4832
    %v5099 = vpack.c.b16 %v4840, %v4833
    %v5100 = vpack.c.b16 %v4841, %v4834
    %v5101 = vpack.c.b16 %v4842, %v4835
    %v5102 = vpack.c.b16 %v4850, %v4843
    %v5103 = vpack.c.b16 %v4851, %v4844
    %v5104 = vpack.c.b16 %v4852, %v4845
    %v5105 = vpack.c.b16 %v4853, %v4846
    %v5106 = vpack.c.b16 %v4854, %v4847
    %v5107 = vpack.c.b16 %v4855, %v4848
    %v5108 = vpack.c.b16 %v4856, %v4849
    %v5109 = vpack.c.b16 %v4864, %v4857
    %v5110 = vpack.c.b16 %v4865, %v4858
    %v5111 = vpack.c.b16 %v4866, %v4859
    %v5112 = vpack.c.b16 %v4867, %v4860
    %v5113 = vpack.c.b16 %v4868, %v4861
    %v5114 = vpack.c.b16 %v4869, %v4862
    %v5115 = vpack.c.b16 %v4870, %v4863
    %v5116 = vpack.c.b16 %v4878, %v4871
    %v5117 = vpack.c.b16 %v4879, %v4872
    %v5118 = vpack.c.b16 %v4880, %v4873
    %v5119 = vpack.c.b16 %v4881, %v4874
    %v5120 = vpack.c.b16 %v4882, %v4875
    %v5121 = vpack.c.b16 %v4883, %v4876
    %v5122 = vpack.c.b16 %v4884, %v4877
    %v5123 = vpack.c.b16 %v4892, %v4885
    %v5124 = vpack.c.b16 %v4893, %v4886
    %v5125 = vpack.c.b16 %v4894, %v4887
    %v5126 = vpack.c.b16 %v4895, %v4888
    %v5127 = vpack.c.b16 %v4896, %v4889
    %v5128 = vpack.c.b16 %v4897, %v4890
    %v5129 = vpack.c.b16 %v4898, %v4891
    %v5130 = vpack.c.b16 %v4906, %v4899
    %v5131 = vpack.c.b16 %v4907, %v4900
    %v5132 = vpack.c.b16 %v4908, %v4901
    %v5133 = vpack.c.b16 %v4909, %v4902
    %v5134 = vpack.c.b16 %v4910, %v4903
    %v5135 = vpack.c.b16 %v4911, %v4904
    %v5136 = vpack.c.b16 %v4912, %v4905
    %5361 = vmatprep.subr.bf16.mxu0 %v4914
    %5362 = vmatpush1.bf16.msra.mxu0 %v4913
    %5363 = vmatprep.subr.bf16.mxu0 %v4921
    %5364 = vmatpush1.bf16.msra.mxu0 %v4920
    %5365 = vmatprep.subr.bf16.mxu0 %v4928
    %5366 = vmatpush1.bf16.msra.mxu0 %v4927
    %5367 = vmatprep.subr.bf16.mxu0 %v4935
    %5368 = vmatpush1.bf16.msra.mxu0 %v4934
    %5369 = vmatprep.subr.bf16.mxu0 %v4942
    %5370 = vmatpush1.bf16.msra.mxu0 %v4941
    %5371 = vmatprep.subr.bf16.mxu0 %v4949
    %5372 = vmatpush1.bf16.msra.mxu0 %v4948
    %5373 = vmatprep.subr.bf16.mxu0 %v4956
    %5374 = vmatpush1.bf16.msra.mxu0 %v4955
    %5375 = vmatprep.subr.bf16.mxu0 %v4963
    %5376 = vmatpush1.bf16.msra.mxu0 %v4962
    %5377 = vmatprep.subr.bf16.mxu0 %v4970
    %5378 = vmatpush1.bf16.msra.mxu0 %v4969
    %5379 = vmatprep.subr.bf16.mxu0 %v4977
    %5380 = vmatpush1.bf16.msra.mxu0 %v4976
    %5381 = vmatprep.subr.bf16.mxu0 %v4984
    %5382 = vmatpush1.bf16.msra.mxu0 %v4983
    %5383 = vmatprep.subr.bf16.mxu0 %v4991
    %5384 = vmatpush1.bf16.msra.mxu0 %v4990
    %5385 = vmatprep.subr.bf16.mxu0 %v4998
    %5386 = vmatpush1.bf16.msra.mxu0 %v4997
    %5387 = vmatprep.subr.bf16.mxu0 %v5005
    %5388 = vmatpush1.bf16.msra.mxu0 %v5004
    %5389 = vmatprep.subr.bf16.mxu0 %v5012
    %5390 = vmatpush1.bf16.msra.mxu0 %v5011
    %5391 = vmatprep.subr.bf16.mxu0 %v5019
    %5392 = vmatpush1.bf16.msra.mxu0 %v5018
    %5393 = vmatprep.mubr.bf16.mxu0 %v3913
    %5394 = vmatmul.mubr.bf16.gmra.mrb[0].mxu0 %v3912
    %v5395 = vpop.f32.mrb[0].mxu0
    %v5396 = vadd.f32 %v4177, %v5395
    %v5397 = vpop.f32.mrb[0].mxu0
    %v5398 = vadd.f32 %v4181, %v5397
    %v5399 = vpop.f32.mrb[0].mxu0
    %v5400 = vpop.f32.mrb[0].mxu0
    %5401 = vdwg.mxu0
    %5402 = vmatprep.subr.bf16.mxu0 %v5026
    %5403 = vmatpush1.bf16.msra.mxu0 %v5025
    %5404 = vmatprep.subr.bf16.mxu0 %v5033
    %5405 = vmatpush1.bf16.msra.mxu0 %v5032
    %5406 = vmatprep.subr.bf16.mxu0 %v5040
    %5407 = vmatpush1.bf16.msra.mxu0 %v5039
    %5408 = vmatprep.subr.bf16.mxu0 %v5047
    %5409 = vmatpush1.bf16.msra.mxu0 %v5046
    %5410 = vmatprep.subr.bf16.mxu0 %v5054
    %5411 = vmatpush1.bf16.msra.mxu0 %v5053
    %5412 = vmatprep.subr.bf16.mxu0 %v5061
    %5413 = vmatpush1.bf16.msra.mxu0 %v5060
    %5414 = vmatprep.subr.bf16.mxu0 %v5068
    %5415 = vmatpush1.bf16.msra.mxu0 %v5067
    %5416 = vmatprep.subr.bf16.mxu0 %v5075
    %5417 = vmatpush1.bf16.msra.mxu0 %v5074
    %5418 = vmatprep.subr.bf16.mxu0 %v5082
    %5419 = vmatpush1.bf16.msra.mxu0 %v5081
    %5420 = vmatprep.subr.bf16.mxu0 %v5089
    %5421 = vmatpush1.bf16.msra.mxu0 %v5088
    %5422 = vmatprep.subr.bf16.mxu0 %v5096
    %5423 = vmatpush1.bf16.msra.mxu0 %v5095
    %5424 = vmatprep.subr.bf16.mxu0 %v5103
    %5425 = vmatpush1.bf16.msra.mxu0 %v5102
    %5426 = vmatprep.subr.bf16.mxu0 %v5110
    %5427 = vmatpush1.bf16.msra.mxu0 %v5109
    %5428 = vmatprep.subr.bf16.mxu0 %v5117
    %5429 = vmatpush1.bf16.msra.mxu0 %v5116
    %5430 = vmatprep.subr.bf16.mxu0 %v5124
    %5431 = vmatpush1.bf16.msra.mxu0 %v5123
    %5432 = vmatprep.subr.bf16.mxu0 %v5131
    %5433 = vmatpush1.bf16.msra.mxu0 %v5130
    %5434 = vmatprep.mubr.bf16.mxu0 %v3915
    %5435 = vmatmul.mubr.bf16.gmra.mrb[0].mxu0 %v3914
    %v5436 = vpop.f32.mrb[0].mxu0
    %v5437 = vadd.f32 %v5396, %v5436
    %v5438 = vpop.f32.mrb[0].mxu0
    %v5439 = vadd.f32 %v5398, %v5438
    %v5440 = vpop.f32.mrb[0].mxu0
    %v5441 = vpop.f32.mrb[0].mxu0
    %5442 = vdwg.mxu0
    %5443 = vmatprep.subr.bf16.mxu0 %v4916
    %5444 = vmatpush1.bf16.msra.mxu0 %v4915
    %5445 = vmatprep.subr.bf16.mxu0 %v4923
    %5446 = vmatpush1.bf16.msra.mxu0 %v4922
    %5447 = vmatprep.subr.bf16.mxu0 %v4930
    %5448 = vmatpush1.bf16.msra.mxu0 %v4929
    %5449 = vmatprep.subr.bf16.mxu0 %v4937
    %5450 = vmatpush1.bf16.msra.mxu0 %v4936
    %5451 = vmatprep.subr.bf16.mxu0 %v4944
    %5452 = vmatpush1.bf16.msra.mxu0 %v4943
    %5453 = vmatprep.subr.bf16.mxu0 %v4951
    %5454 = vmatpush1.bf16.msra.mxu0 %v4950
    %5455 = vmatprep.subr.bf16.mxu0 %v4958
    %5456 = vmatpush1.bf16.msra.mxu0 %v4957
    %5457 = vmatprep.subr.bf16.mxu0 %v4965
    %5458 = vmatpush1.bf16.msra.mxu0 %v4964
    %5459 = vmatprep.subr.bf16.mxu0 %v4972
    %5460 = vmatpush1.bf16.msra.mxu0 %v4971
    %5461 = vmatprep.subr.bf16.mxu0 %v4979
    %5462 = vmatpush1.bf16.msra.mxu0 %v4978
    %5463 = vmatprep.subr.bf16.mxu0 %v4986
    %5464 = vmatpush1.bf16.msra.mxu0 %v4985
    %5465 = vmatprep.subr.bf16.mxu0 %v4993
    %5466 = vmatpush1.bf16.msra.mxu0 %v4992
    %5467 = vmatprep.subr.bf16.mxu0 %v5000
    %5468 = vmatpush1.bf16.msra.mxu0 %v4999
    %5469 = vmatprep.subr.bf16.mxu0 %v5007
    %5470 = vmatpush1.bf16.msra.mxu0 %v5006
    %5471 = vmatprep.subr.bf16.mxu0 %v5014
    %5472 = vmatpush1.bf16.msra.mxu0 %v5013
    %5473 = vmatprep.subr.bf16.mxu0 %v5021
    %5474 = vmatpush1.bf16.msra.mxu0 %v5020
    %5475 = vmatprep.mubr.bf16.mxu0 %v3913
    %5476 = vmatmul.mubr.bf16.gmra.mrb[0].mxu0 %v3912
    %v5477 = vpop.f32.mrb[0].mxu0
    %v5478 = vadd.f32 %v4185, %v5477
    %v5479 = vpop.f32.mrb[0].mxu0
    %v5480 = vadd.f32 %v4189, %v5479
    %v5481 = vpop.f32.mrb[0].mxu0
    %v5482 = vpop.f32.mrb[0].mxu0
    %5483 = vdwg.mxu0
    %5484 = vmatprep.subr.bf16.mxu0 %v5028
    %5485 = vmatpush1.bf16.msra.mxu0 %v5027
    %5486 = vmatprep.subr.bf16.mxu0 %v5035
    %5487 = vmatpush1.bf16.msra.mxu0 %v5034
    %5488 = vmatprep.subr.bf16.mxu0 %v5042
    %5489 = vmatpush1.bf16.msra.mxu0 %v5041
    %5490 = vmatprep.subr.bf16.mxu0 %v5049
    %5491 = vmatpush1.bf16.msra.mxu0 %v5048
    %5492 = vmatprep.subr.bf16.mxu0 %v5056
    %5493 = vmatpush1.bf16.msra.mxu0 %v5055
    %5494 = vmatprep.subr.bf16.mxu0 %v5063
    %5495 = vmatpush1.bf16.msra.mxu0 %v5062
    %5496 = vmatprep.subr.bf16.mxu0 %v5070
    %5497 = vmatpush1.bf16.msra.mxu0 %v5069
    %5498 = vmatprep.subr.bf16.mxu0 %v5077
    %5499 = vmatpush1.bf16.msra.mxu0 %v5076
    %5500 = vmatprep.subr.bf16.mxu0 %v5084
    %5501 = vmatpush1.bf16.msra.mxu0 %v5083
    %5502 = vmatprep.subr.bf16.mxu0 %v5091
    %5503 = vmatpush1.bf16.msra.mxu0 %v5090
    %5504 = vmatprep.subr.bf16.mxu0 %v5098
    %5505 = vmatpush1.bf16.msra.mxu0 %v5097
    %5506 = vmatprep.subr.bf16.mxu0 %v5105
    %5507 = vmatpush1.bf16.msra.mxu0 %v5104
    %5508 = vmatprep.subr.bf16.mxu0 %v5112
    %5509 = vmatpush1.bf16.msra.mxu0 %v5111
    %5510 = vmatprep.subr.bf16.mxu0 %v5119
    %5511 = vmatpush1.bf16.msra.mxu0 %v5118
    %5512 = vmatprep.subr.bf16.mxu0 %v5126
    %5513 = vmatpush1.bf16.msra.mxu0 %v5125
    %5514 = vmatprep.subr.bf16.mxu0 %v5133
    %5515 = vmatpush1.bf16.msra.mxu0 %v5132
    %5516 = vmatprep.mubr.bf16.mxu0 %v3915
    %5517 = vmatmul.mubr.bf16.gmra.mrb[0].mxu0 %v3914
    %v5518 = vpop.f32.mrb[0].mxu0
    %v5519 = vadd.f32 %v5478, %v5518
    %v5520 = vpop.f32.mrb[0].mxu0
    %v5521 = vadd.f32 %v5480, %v5520
    %v5522 = vpop.f32.mrb[0].mxu0
    %v5523 = vpop.f32.mrb[0].mxu0
    %5524 = vdwg.mxu0
    %5525 = vmatprep.subr.bf16.mxu0 %v4918
    %5526 = vmatpush1.bf16.msra.mxu0 %v4917
    %5527 = vmatprep.subr.bf16.mxu0 %v4925
    %5528 = vmatpush1.bf16.msra.mxu0 %v4924
    %5529 = vmatprep.subr.bf16.mxu0 %v4932
    %5530 = vmatpush1.bf16.msra.mxu0 %v4931
    %5531 = vmatprep.subr.bf16.mxu0 %v4939
    %5532 = vmatpush1.bf16.msra.mxu0 %v4938
    %5533 = vmatprep.subr.bf16.mxu0 %v4946
    %5534 = vmatpush1.bf16.msra.mxu0 %v4945
    %5535 = vmatprep.subr.bf16.mxu0 %v4953
    %5536 = vmatpush1.bf16.msra.mxu0 %v4952
    %5537 = vmatprep.subr.bf16.mxu0 %v4960
    %5538 = vmatpush1.bf16.msra.mxu0 %v4959
    %5539 = vmatprep.subr.bf16.mxu0 %v4967
    %5540 = vmatpush1.bf16.msra.mxu0 %v4966
    %5541 = vmatprep.subr.bf16.mxu0 %v4974
    %5542 = vmatpush1.bf16.msra.mxu0 %v4973
    %5543 = vmatprep.subr.bf16.mxu0 %v4981
    %5544 = vmatpush1.bf16.msra.mxu0 %v4980
    %5545 = vmatprep.subr.bf16.mxu0 %v4988
    %5546 = vmatpush1.bf16.msra.mxu0 %v4987
    %5547 = vmatprep.subr.bf16.mxu0 %v4995
    %5548 = vmatpush1.bf16.msra.mxu0 %v4994
    %5549 = vmatprep.subr.bf16.mxu0 %v5002
    %5550 = vmatpush1.bf16.msra.mxu0 %v5001
    %5551 = vmatprep.subr.bf16.mxu0 %v5009
    %5552 = vmatpush1.bf16.msra.mxu0 %v5008
    %5553 = vmatprep.subr.bf16.mxu0 %v5016
    %5554 = vmatpush1.bf16.msra.mxu0 %v5015
    %5555 = vmatprep.subr.bf16.mxu0 %v5023
    %5556 = vmatpush1.bf16.msra.mxu0 %v5022
    %5557 = vmatprep.mubr.bf16.mxu0 %v3913
    %5558 = vmatmul.mubr.bf16.gmra.mrb[0].mxu0 %v3912
    %v5559 = vpop.f32.mrb[0].mxu0
    %v5560 = vadd.f32 %v4193, %v5559
    %v5561 = vpop.f32.mrb[0].mxu0
    %v5562 = vadd.f32 %v4197, %v5561
    %v5563 = vpop.f32.mrb[0].mxu0
    %v5564 = vpop.f32.mrb[0].mxu0
    %5565 = vdwg.mxu0
    %5566 = vmatprep.subr.bf16.mxu0 %v5030
    %5567 = vmatpush1.bf16.msra.mxu0 %v5029
    %5568 = vmatprep.subr.bf16.mxu0 %v5037
    %5569 = vmatpush1.bf16.msra.mxu0 %v5036
    %5570 = vmatprep.subr.bf16.mxu0 %v5044
    %5571 = vmatpush1.bf16.msra.mxu0 %v5043
    %5572 = vmatprep.subr.bf16.mxu0 %v5051
    %5573 = vmatpush1.bf16.msra.mxu0 %v5050
    %5574 = vmatprep.subr.bf16.mxu0 %v5058
    %5575 = vmatpush1.bf16.msra.mxu0 %v5057
    %5576 = vmatprep.subr.bf16.mxu0 %v5065
    %5577 = vmatpush1.bf16.msra.mxu0 %v5064
    %5578 = vmatprep.subr.bf16.mxu0 %v5072
    %5579 = vmatpush1.bf16.msra.mxu0 %v5071
    %5580 = vmatprep.subr.bf16.mxu0 %v5079
    %5581 = vmatpush1.bf16.msra.mxu0 %v5078
    %5582 = vmatprep.subr.bf16.mxu0 %v5086
    %5583 = vmatpush1.bf16.msra.mxu0 %v5085
    %5584 = vmatprep.subr.bf16.mxu0 %v5093
    %5585 = vmatpush1.bf16.msra.mxu0 %v5092
    %5586 = vmatprep.subr.bf16.mxu0 %v5100
    %5587 = vmatpush1.bf16.msra.mxu0 %v5099
    %5588 = vmatprep.subr.bf16.mxu0 %v5107
    %5589 = vmatpush1.bf16.msra.mxu0 %v5106
    %5590 = vmatprep.subr.bf16.mxu0 %v5114
    %5591 = vmatpush1.bf16.msra.mxu0 %v5113
    %5592 = vmatprep.subr.bf16.mxu0 %v5121
    %5593 = vmatpush1.bf16.msra.mxu0 %v5120
    %5594 = vmatprep.subr.bf16.mxu0 %v5128
    %5595 = vmatpush1.bf16.msra.mxu0 %v5127
    %5596 = vmatprep.subr.bf16.mxu0 %v5135
    %5597 = vmatpush1.bf16.msra.mxu0 %v5134
    %5598 = vmatprep.mubr.bf16.mxu0 %v3915
    %5599 = vmatmul.mubr.bf16.gmra.mrb[0].mxu0 %v3914
    %v5600 = vpop.f32.mrb[0].mxu0
    %v5601 = vadd.f32 %v5560, %v5600
    %v5602 = vpop.f32.mrb[0].mxu0
    %v5603 = vadd.f32 %v5562, %v5602
    %v5604 = vpop.f32.mrb[0].mxu0
    %v5605 = vpop.f32.mrb[0].mxu0
    %5606 = vdwg.mxu0
    %5607 = vmatprep.subr.bf16.mxu0 0
    %5608 = vmatpush1.bf16.msra.mxu0 %v4919
    %5609 = vmatprep.subr.bf16.mxu0 0
    %5610 = vmatpush1.bf16.msra.mxu0 %v4926
    %5611 = vmatprep.subr.bf16.mxu0 0
    %5612 = vmatpush1.bf16.msra.mxu0 %v4933
    %5613 = vmatprep.subr.bf16.mxu0 0
    %5614 = vmatpush1.bf16.msra.mxu0 %v4940
    %5615 = vmatprep.subr.bf16.mxu0 0
    %5616 = vmatpush1.bf16.msra.mxu0 %v4947
    %5617 = vmatprep.subr.bf16.mxu0 0
    %5618 = vmatpush1.bf16.msra.mxu0 %v4954
    %5619 = vmatprep.subr.bf16.mxu0 0
    %5620 = vmatpush1.bf16.msra.mxu0 %v4961
    %5621 = vmatprep.subr.bf16.mxu0 0
    %5622 = vmatpush1.bf16.msra.mxu0 %v4968
    %5623 = vmatprep.subr.bf16.mxu0 0
    %5624 = vmatpush1.bf16.msra.mxu0 %v4975
    %5625 = vmatprep.subr.bf16.mxu0 0
    %5626 = vmatpush1.bf16.msra.mxu0 %v4982
    %5627 = vmatprep.subr.bf16.mxu0 0
    %5628 = vmatpush1.bf16.msra.mxu0 %v4989
    %5629 = vmatprep.subr.bf16.mxu0 0
    %5630 = vmatpush1.bf16.msra.mxu0 %v4996
    %5631 = vmatprep.subr.bf16.mxu0 0
    %5632 = vmatpush1.bf16.msra.mxu0 %v5003
    %5633 = vmatprep.subr.bf16.mxu0 0
    %5634 = vmatpush1.bf16.msra.mxu0 %v5010
    %5635 = vmatprep.subr.bf16.mxu0 0
    %5636 = vmatpush1.bf16.msra.mxu0 %v5017
    %5637 = vmatprep.subr.bf16.mxu0 0
    %5638 = vmatpush1.bf16.msra.mxu0 %v5024
    %5639 = vmatprep.mubr.bf16.mxu0 %v3913
    %5640 = vmatmul.mubr.bf16.gmra.mrb[0].mxu0 %v3912
    %v5641 = vpop.f32.mrb[0].mxu0
    %v5642 = vadd.f32 %v4201, %v5641
    %v5643 = vpop.f32.mrb[0].mxu0
    %v5644 = vpop.f32.mrb[0].mxu0
    %v5645 = vpop.f32.mrb[0].mxu0
    %5646 = vdwg.mxu0
    %5647 = vmatprep.subr.bf16.mxu0 0
    %5648 = vmatpush1.bf16.msra.mxu0 %v5031
    %5649 = vmatprep.subr.bf16.mxu0 0
    %5650 = vmatpush1.bf16.msra.mxu0 %v5038
    %5651 = vmatprep.subr.bf16.mxu0 0
    %5652 = vmatpush1.bf16.msra.mxu0 %v5045
    %5653 = vmatprep.subr.bf16.mxu0 0
    %5654 = vmatpush1.bf16.msra.mxu0 %v5052
    %5655 = vmatprep.subr.bf16.mxu0 0
    %5656 = vmatpush1.bf16.msra.mxu0 %v5059
    %5657 = vmatprep.subr.bf16.mxu0 0
    %5658 = vmatpush1.bf16.msra.mxu0 %v5066
    %5659 = vmatprep.subr.bf16.mxu0 0
    %5660 = vmatpush1.bf16.msra.mxu0 %v5073
    %5661 = vmatprep.subr.bf16.mxu0 0
    %5662 = vmatpush1.bf16.msra.mxu0 %v5080
    %5663 = vmatprep.subr.bf16.mxu0 0
    %5664 = vmatpush1.bf16.msra.mxu0 %v5087
    %5665 = vmatprep.subr.bf16.mxu0 0
    %5666 = vmatpush1.bf16.msra.mxu0 %v5094
    %5667 = vmatprep.subr.bf16.mxu0 0
    %5668 = vmatpush1.bf16.msra.mxu0 %v5101
    %5669 = vmatprep.subr.bf16.mxu0 0
    %5670 = vmatpush1.bf16.msra.mxu0 %v5108
    %5671 = vmatprep.subr.bf16.mxu0 0
    %5672 = vmatpush1.bf16.msra.mxu0 %v5115
    %5673 = vmatprep.subr.bf16.mxu0 0
    %5674 = vmatpush1.bf16.msra.mxu0 %v5122
    %5675 = vmatprep.subr.bf16.mxu0 0
    %5676 = vmatpush1.bf16.msra.mxu0 %v5129
    %5677 = vmatprep.subr.bf16.mxu0 0
    %5678 = vmatpush1.bf16.msra.mxu0 %v5136
    %5679 = vmatprep.mubr.bf16.mxu0 %v3915
    %5680 = vmatmul.mubr.bf16.gmra.mrb[0].mxu0 %v3914
    %v5681 = vpop.f32.mrb[0].mxu0
    %v5682 = vadd.f32 %v5642, %v5681
    %v5683 = vpop.f32.mrb[0].mxu0
    %v5684 = vpop.f32.mrb[0].mxu0
    %v5685 = vpop.f32.mrb[0].mxu0
    %5686 = vdwg.mxu0
    %v5687 = vsub.f32 0.0, %v5437
    %v5688 = vsub.f32 0.0, %v5439
    %v5689 = vsub.f32 0.0, %v5519
    %v5690 = vsub.f32 0.0, %v5521
    %v5691 = vsub.f32 0.0, %v5601
    %v5692 = vsub.f32 0.0, %v5603
    %v5693 = vsub.f32 0.0, %v5682
    %v5694 = vmul.f32 %v5687, 1.442695
    %v5695 = vpow.pop %v5694
    %v5696 = vmul.f32 %v5688, 1.442695
    %v5697 = vpow.pop %v5696
    %v5698 = vmul.f32 %v5689, 1.442695
    %v5699 = vpow.pop %v5698
    %v5700 = vmul.f32 %v5690, 1.442695
    %v5701 = vpow.pop %v5700
    %v5702 = vmul.f32 %v5691, 1.442695
    %v5703 = vpow.pop %v5702
    %v5704 = vmul.f32 %v5692, 1.442695
    %v5705 = vpow.pop %v5704
    %v5706 = vmul.f32 %v5693, 1.442695
    %v5707 = vpow.pop %v5706
    %v5708 = vadd.f32 %v5695, 1.0
    %v5709 = vadd.f32 %v5697, 1.0
    %v5710 = vadd.f32 %v5699, 1.0
    %v5711 = vadd.f32 %v5701, 1.0
    %v5712 = vadd.f32 %v5703, 1.0
    %v5713 = vadd.f32 %v5705, 1.0
    %v5714 = vadd.f32 %v5707, 1.0
    %v5715 = vrcp.pop %v5708
    %v5716 = vrcp.pop %v5709
    %v5717 = vrcp.pop %v5710
    %v5718 = vrcp.pop %v5711
    %v5719 = vrcp.pop %v5712
    %v5720 = vrcp.pop %v5713
    %v5721 = vrcp.pop %v5714
    %v5722 = vpack.c.bf16 %v5715, %v5715
    %v5723 = vpack.c.bf16 %v5716, %v5716
    %v5724 = vpack.c.bf16 %v5717, %v5717
    %v5725 = vpack.c.bf16 %v5718, %v5718
    %v5726 = vpack.c.bf16 %v5719, %v5719
    %v5727 = vpack.c.bf16 %v5720, %v5720
    %v5728 = vpack.c.bf16 %v5721, %v5721
    %v5736 = vunpack.c.l.b16 %v5722
    %v5737 = vunpack.c.l.b16 %v5723
    %v5738 = vunpack.c.l.b16 %v5724
    %v5739 = vunpack.c.l.b16 %v5725
    %v5740 = vunpack.c.l.b16 %v5726
    %v5741 = vunpack.c.l.b16 %v5727
    %v5742 = vunpack.c.l.b16 %v5728
    %v5743 = vpack.c.b16 %v5737, %v5736
    %v5744 = vpack.c.b16 %v5739, %v5738
    %v5745 = vpack.c.b16 %v5741, %v5740
    %v5746 = vpack.c.b16 %v5742, %v5742
    %5751 = vst [vmem:[#allocation2] sm:$0xff] %v5743
    %5752 = vst [vmem:[#allocation2 + $0x8] sm:$0xff] %v5744
    %5753 = vst [vmem:[#allocation2 + $0x10] sm:$0xff] %v5745
    %vm5754 = vcmask 125952
    %5755 = vst.msk [vmem:[#allocation2 + $0x18] sm:$0xf] %vm5754, %v5746
    %vm5756 = vcmask 523264
    %5757 = vst.msk [vmem:[%s15] sm:$0xff] %vm5756, %v2769
    // Predicated region
    $region58: #{vae_forward.1} parent=1 // pred_check
      _
    $region59: #{vae_forward.1} parent=1 // pred_check_branch
      %5759 = sbr.rel (0) target = $region61
    $region60: #{vae_forward.1} parent=1 // pred_region
      %s5761 = ssub.s32 448, 448
      %5762 = vsyncadd [#allocation3], %s5761
      %s5764 = sshll.u32 [#allocation2], 4
      %s5765 = int_to_ptr.vmem [resolvable:$true] %s5764
      %5767 = dma.vmem_to_hbm [thread:$0]  %s5765, 448, %s14, [#allocation3]
    $region61: #{vae_forward.1} parent=1 // pred_fallthru
      _
    // Predicated region
    $region62: #{vae_forward.1} parent=1 // pred_check
      _
    $region63: #{vae_forward.1} parent=1 // pred_check_branch
      %5769 = sbr.rel (0) target = $region65
    $region64: #{vae_forward.1} parent=1 // pred_region
      _
    $region65: #{vae_forward.1} parent=1 // pred_fallthru
      _
    // Predicated region
    $region66: #{vae_forward.1} parent=1 // pred_check
      _
    $region67: #{vae_forward.1} parent=1 // pred_check_branch
      %5771 = sbr.rel (0) target = $region69
    $region68: #{vae_forward.1} parent=1 // pred_region
      %5772 = dma.done [#allocation3], 448
    $region69: #{vae_forward.1} parent=1 // pred_fallthru
      _
    // Predicated region
    $region70: #{vae_forward.1} parent=1 // pred_check
      _
    $region71: #{vae_forward.1} parent=1 // pred_check_branch
      %5774 = sbr.rel (0) target = $region73
    $region72: #{vae_forward.1} parent=1 // pred_region
      _
    $region73: #{vae_forward.1} parent=1 // pred_fallthru
      _
    %5775 = vsyncpa [#allocation3], 1

</llo_original>
